<compile_context>
chip_gen: v5e
topology: v5e:2x2
jax: 0.10.0
libtpu: 0.0.40
codegen_flags: <defaults>
</compile_context>

<pallas_src>
import functools

import jax
import jax.numpy as jnp
import numpy as np
from jax.experimental import pallas as pl
from jax.experimental.pallas import tpu as pltpu


def _round_up(x, m):
    return (x + m - 1) // m * m


# ----------------------------------------------------------------------------
# Pallas kernel: one batch element per grid step, whole spatial tile in VMEM.
# TODO(synk): add spatial row-tiling (block of output rows + 1-row halo) so
# 56x56/256-channel stages never need whole-image residency on v7x (64 MiB).
# TODO(synk): process multiple batch elements per step on v5e/v6e (128 MiB VMEM)
# to amortize the per-step pipeline overhead.
# ----------------------------------------------------------------------------
def _bottleneck_kernel(x_ref, w1_ref, b1_ref, w2_ref, b2_ref, w3_ref, b3_ref,
                       *rest, H, W, Cin, Pp, EP, stride, has_proj):
    idx = 0
    ws_ref = bs_ref = xsc_ref = None
    if has_proj:
        ws_ref, bs_ref = rest[idx], rest[idx + 1]
        idx += 2
        if stride != 1:
            xsc_ref = rest[idx]
            idx += 1
    out_ref = rest[idx]
    pad_ref = rest[idx + 1]
    patches_ref = rest[idx + 2]

    Ho = (H - 1) // stride + 1
    Wo = (W - 1) // stride + 1

    xb = x_ref[0].reshape(H * W, Cin)                # (H*W, Cin) bf16 (DMA'd bf16)

    # ---- conv1 (1x1, BN scale pre-folded into w1) + bias + relu ------------
    h1 = jnp.dot(xb, w1_ref[...], preferred_element_type=jnp.float32)
    h1 = jnp.maximum(h1 + b1_ref[...], 0.0)          # (H*W, Pp) f32

    # ---- conv2 (3x3, stride, pad=1) as a single im2col matmul --------------
    # bf16 halo scratch: zero only the 1-pixel border, then write the interior.
    # TODO(synk): hoist the border zeroing to a once-per-core path; a plain
    # pl.when(pl.program_id(0) == 0) is incorrect when the parallel batch axis
    # is sharded across TensorCores (core 1 never sees program_id 0).
    Wp = pad_ref.shape[1]
    zrow = jnp.zeros((1, Wp, Pp), jnp.bfloat16)
    pad_ref[0:1, :, :] = zrow
    pad_ref[H + 1:H + 2, :, :] = zrow
    zcol = jnp.zeros((H, 1, Pp), jnp.bfloat16)
    pad_ref[1:H + 1, 0:1, :] = zcol
    pad_ref[1:H + 1, W + 1:W + 2, :] = zcol
    # NOTE: sublane-padding columns > W+1 (up to Wp) are never read by the tap
    # extraction below (max column read is W+1 for stride==1, <=W for stride>1).
    pad_ref[1:H + 1, 1:W + 1, :] = h1.astype(jnp.bfloat16).reshape(H, W, Pp)

    # Store each tap directly into the im2col scratch at its lane offset
    # (Pp is a multiple of 128, so every tap store is lane-tile aligned).
    if stride == 1:
        for dh in range(3):
            for dw in range(3):
                k = dh * 3 + dw
                t = pad_ref[dh:dh + H, dw:dw + W, :].reshape(H * W, Pp)
                patches_ref[:, k * Pp:(k + 1) * Pp] = t
    else:
        # Extract each W stride-phase once (3 sublane-strided reads instead of 9),
        # then take cheap major-axis row slices per tap.
        colph = [pad_ref[:, pl.ds(dw, Wo, stride), :] for dw in range(3)]
        for dh in range(3):
            for dw in range(3):
                k = dh * 3 + dw
                t = (colph[dw][dh:dh + (Ho - 1) * stride + 1:stride, :, :]
                     .reshape(Ho * Wo, Pp))
                patches_ref[:, k * Pp:(k + 1) * Pp] = t

    h2 = jnp.dot(patches_ref[...], w2_ref[...], preferred_element_type=jnp.float32)
    h2 = jnp.maximum(h2 + b2_ref[...], 0.0)          # (Ho*Wo, Pp) f32

    # ---- conv3 (1x1, BN scale pre-folded) + bias ----------------------------
    h3 = jnp.dot(h2.astype(jnp.bfloat16), w3_ref[...],
                 preferred_element_type=jnp.float32)
    h3 = h3 + b3_ref[...]                            # (Ho*Wo, EP) f32

    # ---- shortcut ------------------------------------------------------------
    if has_proj:
        if stride == 1:
            xsb = xb
        else:
            # spatial subsampling done in the wrapper (plain JAX), DMA'd bf16
            xsb = xsc_ref[0].reshape(Ho * Wo, Cin)
        sc = jnp.dot(xsb, ws_ref[...], preferred_element_type=jnp.float32)
        sc = sc + bs_ref[...]
    else:
        sc = xb.astype(jnp.float32)                  # identity: Cin == EP, stride == 1

    out = jnp.maximum(h3 + sc, 0.0)
    out_ref[0] = out.reshape(Ho, Wo, EP).astype(out_ref.dtype)   # bf16 writeback


# ----------------------------------------------------------------------------
# Parameter init / BN folding helpers (plain JAX glue)
# ----------------------------------------------------------------------------
_EPS = 1e-5


def _bn_init(key, c):
    k1, k2, k3, k4 = jax.random.split(key, 4)
    return dict(
        gamma=jax.random.uniform(k1, (c,), jnp.float32, 0.5, 1.5),
        beta=0.1 * jax.random.normal(k2, (c,), jnp.float32),
        mean=0.1 * jax.random.normal(k3, (c,), jnp.float32),
        var=jax.random.uniform(k4, (c,), jnp.float32, 0.5, 1.5),
    )


def _bn_fold(bn):
    scale = bn["gamma"] / jnp.sqrt(bn["var"] + _EPS)
    bias = bn["beta"] - bn["mean"] * scale
    return scale, bias


def init_bottleneck_params(key, in_planes, planes, stride, expansion):
    ep = expansion * planes
    ks = jax.random.split(key, 8)
    params = dict(
        conv1_w=0.3 * jax.random.normal(ks[0], (planes, in_planes, 1, 1), jnp.float32),
        bn1=_bn_init(ks[1], planes),
        conv2_w=0.3 * jax.random.normal(ks[2], (planes, planes, 3, 3), jnp.float32),
        bn2=_bn_init(ks[3], planes),
        conv3_w=0.3 * jax.random.normal(ks[4], (ep, planes, 1, 1), jnp.float32),
        bn3=_bn_init(ks[5], ep),
    )
    if stride != 1 or in_planes != ep:
        params["sc_conv_w"] = 0.3 * jax.random.normal(ks[6], (ep, in_planes, 1, 1), jnp.float32)
        params["sc_bn"] = _bn_init(ks[7], ep)
    return params


# ----------------------------------------------------------------------------
# Wrapper calling pallas_call
# ----------------------------------------------------------------------------
def bottleneck_forward(x_nchw, params, *, in_planes, planes, stride=1, expansion=1):
    N, Cin, H, W = x_nchw.shape
    assert Cin == in_planes
    P = planes
    EP = expansion * planes
    Pp = _round_up(P, 128)          # lane-dense mid channels (unmasked stores)
    Ho = (H - 1) // stride + 1
    Wo = (W - 1) // stride + 1
    has_proj = "sc_conv_w" in params
    if not has_proj:
        assert stride == 1 and Cin == EP

    # bf16 activation DMA (halves HBM read + double-buffered input block VMEM)
    x_nhwc = jnp.transpose(x_nchw, (0, 2, 3, 1)).astype(jnp.bfloat16)

    s1, b1 = _bn_fold(params["bn1"])
    s2, b2 = _bn_fold(params["bn2"])
    s3, b3 = _bn_fold(params["bn3"])

    # Fold BN scales into conv weights; zero-pad the mid channel dim to Pp;
    # pre-cast weights to bf16 (MXU inputs). Zero padding keeps the math exact:
    # padded h1/h2 channels are relu(0)=0 and w3's padded rows contribute 0.
    w1f = params["conv1_w"].reshape(P, Cin).T * s1[None, :]                 # (Cin, P)
    w1 = jnp.zeros((Cin, Pp), jnp.float32).at[:, :P].set(w1f).astype(jnp.bfloat16)
    b1p = jnp.zeros((1, Pp), jnp.float32).at[0, :P].set(b1)

    w2_blocks = []
    for dh in range(3):
        for dw in range(3):
            blk = params["conv2_w"][:, :, dh, dw].T * s2[None, :]           # (P, P)
            w2_blocks.append(jnp.zeros((Pp, Pp), jnp.float32).at[:P, :P].set(blk))
    w2 = jnp.concatenate(w2_blocks, axis=0).astype(jnp.bfloat16)            # (9*Pp, Pp)
    b2p = jnp.zeros((1, Pp), jnp.float32).at[0, :P].set(b2)

    w3f = params["conv3_w"].reshape(EP, P).T * s3[None, :]                  # (P, EP)
    w3 = jnp.zeros((Pp, EP), jnp.float32).at[:P, :].set(w3f).astype(jnp.bfloat16)
    b3p = b3.reshape(1, EP).astype(jnp.float32)
    # TODO(synk): pad EP to a multiple of 128 too (lane-dense writeback) when the
    # consumer can take padded channels; real ResNet stages already satisfy it.

    inputs = [x_nhwc, w1, b1p, w2, b2p, w3, b3p]

    # TODO(synk): mark these constant-index weight/bias blocks with
    # pipeline_mode=pl.Buffered(1) (single-buffered) once verified on the target
    # jax version; saves several MB of VMEM for EP up to 2048.
    def full_spec(a):
        return pl.BlockSpec(a.shape, lambda n, nd=a.ndim: (0,) * nd)

    in_specs = [pl.BlockSpec((1, H, W, Cin), lambda n: (n, 0, 0, 0))]
    in_specs += [full_spec(a) for a in inputs[1:]]

    if has_proj:
        ss, bs = _bn_fold(params["sc_bn"])
        ws = (params["sc_conv_w"].reshape(EP, Cin).T * ss[None, :]).astype(jnp.bfloat16)
        bsr = bs.reshape(1, EP).astype(jnp.float32)
        inputs += [ws, bsr]
        in_specs += [full_spec(ws), full_spec(bsr)]
        if stride != 1:
            # Shortcut spatial subsampling in the wrapper (kernel never does
            # strided sublane reads for the shortcut path); bf16 DMA.
            x_sc = x_nhwc[:, ::stride, ::stride, :]
            inputs.append(x_sc)
            in_specs.append(pl.BlockSpec((1, Ho, Wo, Cin), lambda n: (n, 0, 0, 0)))

    # bf16 halo scratch: W+2 rounded to a multiple of 16 (bf16 sublane packing),
    # plus the im2col patches scratch that taps are stored into directly.
    Wp = _round_up(W + 2, 16)
    scratch = [pltpu.VMEM((H + 2, Wp, Pp), jnp.bfloat16),
               pltpu.VMEM((Ho * Wo, 9 * Pp), jnp.bfloat16)]

    # Explicit VMEM budget: double-buffered blocks + params + scratch +
    # in-kernel temporaries + margin, capped at 75% of physical VMEM.
    blk_bytes = H * W * Cin * 2 + Ho * Wo * EP * 2
    if has_proj and stride != 1:
        blk_bytes += Ho * Wo * Cin * 2
    param_bytes = sum(int(a.size) * a.dtype.itemsize for a in inputs[1:])
    scratch_bytes = (H + 2) * Wp * Pp * 2 + Ho * Wo * 9 * Pp * 2
    tmp_bytes = (H * W * Pp * 4 + H * W * Pp * 2          # h1 f32 + bf16 copy
                 + Ho * Wo * 9 * Pp * 2                   # tap values
                 + Ho * Wo * Pp * 4 + Ho * Wo * Pp * 2    # h2 f32 + bf16 copy
                 + Ho * Wo * EP * 4 * 3                   # h3, shortcut, out (f32)
                 + H * W * Cin * 4)                       # upcast identity residual
    needed = 2 * (blk_bytes + param_bytes) + scratch_bytes + tmp_bytes + (8 << 20)
    try:
        phys_vmem = int(pltpu.get_tpu_info().vmem_capacity_bytes)
    except Exception:
        phys_vmem = 64 << 20                              # conservative (v7x-sized)
    cap = max((phys_vmem * 3) // 4, 32 << 20)             # ~48 MiB v7x, ~96 MiB v5e/v6e
    vmem_limit = int(min(cap, max(32 << 20, needed)))

    kernel = functools.partial(_bottleneck_kernel, H=H, W=W, Cin=Cin, Pp=Pp,
                               EP=EP, stride=stride, has_proj=has_proj)

    out_nhwc = pl.pallas_call(
        kernel,
        out_shape=jax.ShapeDtypeStruct((N, Ho, Wo, EP), jnp.bfloat16),
        grid=(N,),
        in_specs=in_specs,
        out_specs=pl.BlockSpec((1, Ho, Wo, EP), lambda n: (n, 0, 0, 0)),
        scratch_shapes=scratch,
        compiler_params=pltpu.CompilerParams(
            # batch elements are independent -> shard across TensorCores
            dimension_semantics=("parallel",),
            vmem_limit_bytes=vmem_limit),
    )(*inputs)

    return jnp.transpose(out_nhwc, (0, 3, 1, 2)).astype(jnp.float32)  # back to NCHW


# ----------------------------------------------------------------------------
# Pure-JAX reference (NCHW, matches PyTorch semantics, eval-mode BN)
# ----------------------------------------------------------------------------
def _conv_ref(x, w, stride=1, padding=0):
    return jax.lax.conv_general_dilated(
        x, w, window_strides=(stride, stride),
        padding=((padding, padding), (padding, padding)),
        dimension_numbers=("NCHW", "OIHW", "NCHW"))


def _bn_ref(x, bn):
    inv = (bn["gamma"] / jnp.sqrt(bn["var"] + _EPS))[None, :, None, None]
    return (x - bn["mean"][None, :, None, None]) * inv + bn["beta"][None, :, None, None]


def bottleneck_ref(x, params, *, stride=1):
    out = jax.nn.relu(_bn_ref(_conv_ref(x, params["conv1_w"]), params["bn1"]))
    out = jax.nn.relu(_bn_ref(_conv_ref(out, params["conv2_w"], stride, 1), params["bn2"]))
    out = _bn_ref(_conv_ref(out, params["conv3_w"]), params["bn3"])
    if "sc_conv_w" in params:
        sc = _bn_ref(_conv_ref(x, params["sc_conv_w"], stride, 0), params["sc_bn"])
    else:
        sc = x
    return jax.nn.relu(out + sc)


# TODO(synk): training-mode BatchNorm (batch statistics) is not implemented;
# eval-mode (running stats) semantics are used, folded into the conv weights.
# TODO(synk): the full ResNet backbone is a chain of these fused block kernels
# (plus the stem conv and the final 1x1 conv_out); BasicBlock (2x 3x3) would
# reuse the same im2col machinery with two conv2-style stages.

if __name__ == "__main__":
    key = jax.random.PRNGKey(0)
    N, H, W = 2, 16, 16
    # bf16 I/O + bf16 MXU operands with f32 accumulation -> loosened tolerance
    RTOL, ATOL = 5e-2, 5e-2

    # Config 1: projection shortcut (channel change), stride 1.
    in_planes, planes, stride, expansion = 4, 8, 1, 1
    params = init_bottleneck_params(key, in_planes, planes, stride, expansion)
    x = jax.random.normal(jax.random.fold_in(key, 999), (N, in_planes, H, W), jnp.float32)
    out = jax.block_until_ready(
        bottleneck_forward(x, params, in_planes=in_planes, planes=planes,
                           stride=stride, expansion=expansion))
    ref = bottleneck_ref(x, params, stride=stride)
    np.testing.assert_allclose(np.asarray(out), np.asarray(ref), rtol=RTOL, atol=ATOL)

    # Config 2: identity shortcut (in_planes == expansion * planes, stride 1).
    key2 = jax.random.fold_in(key, 1)
    in_planes2, planes2 = 8, 8
    params2 = init_bottleneck_params(key2, in_planes2, planes2, 1, 1)
    x2 = jax.random.normal(jax.random.fold_in(key2, 999), (N, in_planes2, H, W), jnp.float32)
    out2 = jax.block_until_ready(
        bottleneck_forward(x2, params2, in_planes=in_planes2, planes=planes2,
                           stride=1, expansion=1))
    ref2 = bottleneck_ref(x2, params2, stride=1)
    np.testing.assert_allclose(np.asarray(out2), np.asarray(ref2), rtol=RTOL, atol=ATOL)

    print("KERNEL_OK")
</pallas_src>

<mosaic_0001>
module attributes {stable_mosaic.version = 11 : i64} {
  func.func @_bottleneck_kernel(%arg0: i32, %arg1: memref<1x16x16x4xbf16, #tpu.memory_space<vmem>>, %arg2: memref<4x128xbf16, #tpu.memory_space<vmem>>, %arg3: memref<1x128xf32, #tpu.memory_space<vmem>>, %arg4: memref<1152x128xbf16, #tpu.memory_space<vmem>>, %arg5: memref<1x128xf32, #tpu.memory_space<vmem>>, %arg6: memref<128x8xbf16, #tpu.memory_space<vmem>>, %arg7: memref<1x8xf32, #tpu.memory_space<vmem>>, %arg8: memref<4x8xbf16, #tpu.memory_space<vmem>>, %arg9: memref<1x8xf32, #tpu.memory_space<vmem>>, %arg10: memref<1x16x16x8xbf16, #tpu.memory_space<vmem>>, %arg11: memref<18x32x128xbf16, #tpu.memory_space<vmem>>, %arg12: memref<256x1152xbf16, #tpu.memory_space<vmem>>) attributes {dimension_semantics = [#tpu.dimension_semantics<parallel>], iteration_bounds = array<i64: 2>, scalar_prefetch = 0 : i64, scratch_operands = 2 : i64, tpu.core_type = #tpu.core_type<tc>, window_params = [{transform_indices = @transform_0, window_bounds = array<i64: 1, 16, 16, 4>}, {pipeline_mode = #tpu.pipeline_mode<synchronous>, transform_indices = @transform_1, window_bounds = array<i64: 4, 128>}, {pipeline_mode = #tpu.pipeline_mode<synchronous>, transform_indices = @transform_2, window_bounds = array<i64: 1, 128>}, {pipeline_mode = #tpu.pipeline_mode<synchronous>, transform_indices = @transform_3, window_bounds = array<i64: 1152, 128>}, {pipeline_mode = #tpu.pipeline_mode<synchronous>, transform_indices = @transform_4, window_bounds = array<i64: 1, 128>}, {pipeline_mode = #tpu.pipeline_mode<synchronous>, transform_indices = @transform_5, window_bounds = array<i64: 128, 8>}, {pipeline_mode = #tpu.pipeline_mode<synchronous>, transform_indices = @transform_6, window_bounds = array<i64: 1, 8>}, {pipeline_mode = #tpu.pipeline_mode<synchronous>, transform_indices = @transform_7, window_bounds = array<i64: 4, 8>}, {pipeline_mode = #tpu.pipeline_mode<synchronous>, transform_indices = @transform_8, window_bounds = array<i64: 1, 8>}, {transform_indices = @transform_9, window_bounds = array<i64: 1, 16, 16, 8>}]} {
    %c0 = arith.constant 0 : index
    %c0_0 = arith.constant 0 : index
    %c0_1 = arith.constant 0 : index
    %c0_2 = arith.constant 0 : index
    %0 = vector.load %arg1[%c0, %c0_0, %c0_1, %c0_2] : memref<1x16x16x4xbf16, #tpu.memory_space<vmem>>, vector<1x16x16x4xbf16>
    %1 = vector.shape_cast %0 : vector<1x16x16x4xbf16> to vector<16x16x4xbf16>
    %2 = vector.shape_cast %1 : vector<16x16x4xbf16> to vector<256x4xbf16>
    %c0_3 = arith.constant 0 : index
    %c0_4 = arith.constant 0 : index
    %3 = vector.load %arg2[%c0_3, %c0_4] : memref<4x128xbf16, #tpu.memory_space<vmem>>, vector<4x128xbf16>
    %cst = arith.constant dense<0.000000e+00> : vector<256x128xf32>
    %4 = tpu.matmul %2, %3, %cst {dimension_numbers = #tpu.dot_dimension_numbers<[1], [0], [0], [1], [0, 0, 1, 1], [], []>} : vector<256x4xbf16>, vector<4x128xbf16>, vector<256x128xf32> -> vector<256x128xf32>
    %c0_5 = arith.constant 0 : index
    %c0_6 = arith.constant 0 : index
    %5 = vector.load %arg3[%c0_5, %c0_6] : memref<1x128xf32, #tpu.memory_space<vmem>>, vector<1x128xf32>
    %6 = vector.broadcast %5 : vector<1x128xf32> to vector<256x128xf32>
    %7 = arith.addf %4, %6 : vector<256x128xf32>
    %cst_7 = arith.constant 0.000000e+00 : f32
    %8 = vector.broadcast %cst_7 : f32 to vector<256x128xf32>
    %9 = arith.maximumf %7, %8 : vector<256x128xf32>
    %cst_8 = arith.constant 0.000000e+00 : bf16
    %10 = vector.broadcast %cst_8 : bf16 to vector<1x32x128xbf16>
    %c0_9 = arith.constant 0 : index
    %c0_10 = arith.constant 0 : index
    %c0_11 = arith.constant 0 : index
    %11 = vector.load %arg11[%c0_9, %c0_10, %c0_11] : memref<18x32x128xbf16, #tpu.memory_space<vmem>>, vector<1x32x128xbf16>
    tpu.vector_store %arg11[%c0_9, %c0_10, %c0_11], %10 {strides = array<i32>} : memref<18x32x128xbf16, #tpu.memory_space<vmem>>, vector<1x32x128xbf16>,
    %c17 = arith.constant 17 : index
    %c0_12 = arith.constant 0 : index
    %c0_13 = arith.constant 0 : index
    %12 = vector.load %arg11[%c17, %c0_12, %c0_13] : memref<18x32x128xbf16, #tpu.memory_space<vmem>>, vector<1x32x128xbf16>
    tpu.vector_store %arg11[%c17, %c0_12, %c0_13], %10 {strides = array<i32>} : memref<18x32x128xbf16, #tpu.memory_space<vmem>>, vector<1x32x128xbf16>,
    %cst_14 = arith.constant 0.000000e+00 : bf16
    %13 = vector.broadcast %cst_14 : bf16 to vector<16x1x128xbf16>
    %c1 = arith.constant 1 : index
    %c0_15 = arith.constant 0 : index
    %c0_16 = arith.constant 0 : index
    %14 = vector.load %arg11[%c1, %c0_15, %c0_16] : memref<18x32x128xbf16, #tpu.memory_space<vmem>>, vector<16x1x128xbf16>
    tpu.vector_store %arg11[%c1, %c0_15, %c0_16], %13 {strides = array<i32>} : memref<18x32x128xbf16, #tpu.memory_space<vmem>>, vector<16x1x128xbf16>,
    %c1_17 = arith.constant 1 : index
    %c17_18 = arith.constant 17 : index
    %c0_19 = arith.constant 0 : index
    %15 = vector.load %arg11[%c1_17, %c17_18, %c0_19] : memref<18x32x128xbf16, #tpu.memory_space<vmem>>, vector<16x1x128xbf16>
    tpu.vector_store %arg11[%c1_17, %c17_18, %c0_19], %13 {strides = array<i32>} : memref<18x32x128xbf16, #tpu.memory_space<vmem>>, vector<16x1x128xbf16>,
    %16 = arith.truncf %9 : vector<256x128xf32> to vector<256x128xbf16>
    %17 = vector.shape_cast %16 : vector<256x128xbf16> to vector<16x16x128xbf16>
    %c1_20 = arith.constant 1 : index
    %c1_21 = arith.constant 1 : index
    %c0_22 = arith.constant 0 : index
    %18 = vector.load %arg11[%c1_20, %c1_21, %c0_22] : memref<18x32x128xbf16, #tpu.memory_space<vmem>>, vector<16x16x128xbf16>
    tpu.vector_store %arg11[%c1_20, %c1_21, %c0_22], %17 {strides = array<i32>} : memref<18x32x128xbf16, #tpu.memory_space<vmem>>, vector<16x16x128xbf16>,
    %c0_23 = arith.constant 0 : index
    %c0_24 = arith.constant 0 : index
    %c0_25 = arith.constant 0 : index
    %19 = vector.load %arg11[%c0_23, %c0_24, %c0_25] : memref<18x32x128xbf16, #tpu.memory_space<vmem>>, vector<16x16x128xbf16>
    %20 = vector.shape_cast %19 : vector<16x16x128xbf16> to vector<256x128xbf16>
    %c0_26 = arith.constant 0 : index
    %c0_27 = arith.constant 0 : index
    %21 = vector.load %arg12[%c0_26, %c0_27] : memref<256x1152xbf16, #tpu.memory_space<vmem>>, vector<256x128xbf16>
    tpu.vector_store %arg12[%c0_26, %c0_27], %20 {strides = array<i32>} : memref<256x1152xbf16, #tpu.memory_space<vmem>>, vector<256x128xbf16>,
    %c0_28 = arith.constant 0 : index
    %c1_29 = arith.constant 1 : index
    %c0_30 = arith.constant 0 : index
    %22 = vector.load %arg11[%c0_28, %c1_29, %c0_30] : memref<18x32x128xbf16, #tpu.memory_space<vmem>>, vector<16x16x128xbf16>
    %23 = vector.shape_cast %22 : vector<16x16x128xbf16> to vector<256x128xbf16>
    %c0_31 = arith.constant 0 : index
    %c128 = arith.constant 128 : index
    %24 = vector.load %arg12[%c0_31, %c128] : memref<256x1152xbf16, #tpu.memory_space<vmem>>, vector<256x128xbf16>
    tpu.vector_store %arg12[%c0_31, %c128], %23 {strides = array<i32>} : memref<256x1152xbf16, #tpu.memory_space<vmem>>, vector<256x128xbf16>,
    %c0_32 = arith.constant 0 : index
    %c2 = arith.constant 2 : index
    %c0_33 = arith.constant 0 : index
    %25 = vector.load %arg11[%c0_32, %c2, %c0_33] : memref<18x32x128xbf16, #tpu.memory_space<vmem>>, vector<16x16x128xbf16>
    %26 = vector.shape_cast %25 : vector<16x16x128xbf16> to vector<256x128xbf16>
    %c0_34 = arith.constant 0 : index
    %c256 = arith.constant 256 : index
    %27 = vector.load %arg12[%c0_34, %c256] : memref<256x1152xbf16, #tpu.memory_space<vmem>>, vector<256x128xbf16>
    tpu.vector_store %arg12[%c0_34, %c256], %26 {strides = array<i32>} : memref<256x1152xbf16, #tpu.memory_space<vmem>>, vector<256x128xbf16>,
    %c1_35 = arith.constant 1 : index
    %c0_36 = arith.constant 0 : index
    %c0_37 = arith.constant 0 : index
    %28 = vector.load %arg11[%c1_35, %c0_36, %c0_37] : memref<18x32x128xbf16, #tpu.memory_space<vmem>>, vector<16x16x128xbf16>
    %29 = vector.shape_cast %28 : vector<16x16x128xbf16> to vector<256x128xbf16>
    %c0_38 = arith.constant 0 : index
    %c384 = arith.constant 384 : index
    %30 = vector.load %arg12[%c0_38, %c384] : memref<256x1152xbf16, #tpu.memory_space<vmem>>, vector<256x128xbf16>
    tpu.vector_store %arg12[%c0_38, %c384], %29 {strides = array<i32>} : memref<256x1152xbf16, #tpu.memory_space<vmem>>, vector<256x128xbf16>,
    %c1_39 = arith.constant 1 : index
    %c1_40 = arith.constant 1 : index
    %c0_41 = arith.constant 0 : index
    %31 = vector.load %arg11[%c1_39, %c1_40, %c0_41] : memref<18x32x128xbf16, #tpu.memory_space<vmem>>, vector<16x16x128xbf16>
    %32 = vector.shape_cast %31 : vector<16x16x128xbf16> to vector<256x128xbf16>
    %c0_42 = arith.constant 0 : index
    %c512 = arith.constant 512 : index
    %33 = vector.load %arg12[%c0_42, %c512] : memref<256x1152xbf16, #tpu.memory_space<vmem>>, vector<256x128xbf16>
    tpu.vector_store %arg12[%c0_42, %c512], %32 {strides = array<i32>} : memref<256x1152xbf16, #tpu.memory_space<vmem>>, vector<256x128xbf16>,
    %c1_43 = arith.constant 1 : index
    %c2_44 = arith.constant 2 : index
    %c0_45 = arith.constant 0 : index
    %34 = vector.load %arg11[%c1_43, %c2_44, %c0_45] : memref<18x32x128xbf16, #tpu.memory_space<vmem>>, vector<16x16x128xbf16>
    %35 = vector.shape_cast %34 : vector<16x16x128xbf16> to vector<256x128xbf16>
    %c0_46 = arith.constant 0 : index
    %c640 = arith.constant 640 : index
    %36 = vector.load %arg12[%c0_46, %c640] : memref<256x1152xbf16, #tpu.memory_space<vmem>>, vector<256x128xbf16>
    tpu.vector_store %arg12[%c0_46, %c640], %35 {strides = array<i32>} : memref<256x1152xbf16, #tpu.memory_space<vmem>>, vector<256x128xbf16>,
    %c2_47 = arith.constant 2 : index
    %c0_48 = arith.constant 0 : index
    %c0_49 = arith.constant 0 : index
    %37 = vector.load %arg11[%c2_47, %c0_48, %c0_49] : memref<18x32x128xbf16, #tpu.memory_space<vmem>>, vector<16x16x128xbf16>
    %38 = vector.shape_cast %37 : vector<16x16x128xbf16> to vector<256x128xbf16>
    %c0_50 = arith.constant 0 : index
    %c768 = arith.constant 768 : index
    %39 = vector.load %arg12[%c0_50, %c768] : memref<256x1152xbf16, #tpu.memory_space<vmem>>, vector<256x128xbf16>
    tpu.vector_store %arg12[%c0_50, %c768], %38 {strides = array<i32>} : memref<256x1152xbf16, #tpu.memory_space<vmem>>, vector<256x128xbf16>,
    %c2_51 = arith.constant 2 : index
    %c1_52 = arith.constant 1 : index
    %c0_53 = arith.constant 0 : index
    %40 = vector.load %arg11[%c2_51, %c1_52, %c0_53] : memref<18x32x128xbf16, #tpu.memory_space<vmem>>, vector<16x16x128xbf16>
    %41 = vector.shape_cast %40 : vector<16x16x128xbf16> to vector<256x128xbf16>
    %c0_54 = arith.constant 0 : index
    %c896 = arith.constant 896 : index
    %42 = vector.load %arg12[%c0_54, %c896] : memref<256x1152xbf16, #tpu.memory_space<vmem>>, vector<256x128xbf16>
    tpu.vector_store %arg12[%c0_54, %c896], %41 {strides = array<i32>} : memref<256x1152xbf16, #tpu.memory_space<vmem>>, vector<256x128xbf16>,
    %c2_55 = arith.constant 2 : index
    %c2_56 = arith.constant 2 : index
    %c0_57 = arith.constant 0 : index
    %43 = vector.load %arg11[%c2_55, %c2_56, %c0_57] : memref<18x32x128xbf16, #tpu.memory_space<vmem>>, vector<16x16x128xbf16>
    %44 = vector.shape_cast %43 : vector<16x16x128xbf16> to vector<256x128xbf16>
    %c0_58 = arith.constant 0 : index
    %c1024 = arith.constant 1024 : index
    %45 = vector.load %arg12[%c0_58, %c1024] : memref<256x1152xbf16, #tpu.memory_space<vmem>>, vector<256x128xbf16>
    tpu.vector_store %arg12[%c0_58, %c1024], %44 {strides = array<i32>} : memref<256x1152xbf16, #tpu.memory_space<vmem>>, vector<256x128xbf16>,
    %c0_59 = arith.constant 0 : index
    %c0_60 = arith.constant 0 : index
    %46 = vector.load %arg12[%c0_59, %c0_60] : memref<256x1152xbf16, #tpu.memory_space<vmem>>, vector<256x1152xbf16>
    %c0_61 = arith.constant 0 : index
    %c0_62 = arith.constant 0 : index
    %47 = vector.load %arg4[%c0_61, %c0_62] : memref<1152x128xbf16, #tpu.memory_space<vmem>>, vector<1152x128xbf16>
    %cst_63 = arith.constant dense<0.000000e+00> : vector<256x128xf32>
    %48 = tpu.matmul %46, %47, %cst_63 {dimension_numbers = #tpu.dot_dimension_numbers<[1], [0], [0], [1], [0, 0, 1, 1], [], []>} : vector<256x1152xbf16>, vector<1152x128xbf16>, vector<256x128xf32> -> vector<256x128xf32>
    %c0_64 = arith.constant 0 : index
    %c0_65 = arith.constant 0 : index
    %49 = vector.load %arg5[%c0_64, %c0_65] : memref<1x128xf32, #tpu.memory_space<vmem>>, vector<1x128xf32>
    %50 = vector.broadcast %49 : vector<1x128xf32> to vector<256x128xf32>
    %51 = arith.addf %48, %50 : vector<256x128xf32>
    %cst_66 = arith.constant 0.000000e+00 : f32
    %52 = vector.broadcast %cst_66 : f32 to vector<256x128xf32>
    %53 = arith.maximumf %51, %52 : vector<256x128xf32>
    %54 = arith.truncf %53 : vector<256x128xf32> to vector<256x128xbf16>
    %c0_67 = arith.constant 0 : index
    %c0_68 = arith.constant 0 : index
    %55 = vector.load %arg6[%c0_67, %c0_68] : memref<128x8xbf16, #tpu.memory_space<vmem>>, vector<128x8xbf16>
    %cst_69 = arith.constant dense<0.000000e+00> : vector<256x8xf32>
    %56 = tpu.matmul %54, %55, %cst_69 {dimension_numbers = #tpu.dot_dimension_numbers<[1], [0], [0], [1], [0, 0, 1, 1], [], []>} : vector<256x128xbf16>, vector<128x8xbf16>, vector<256x8xf32> -> vector<256x8xf32>
    %c0_70 = arith.constant 0 : index
    %c0_71 = arith.constant 0 : index
    %57 = vector.load %arg7[%c0_70, %c0_71] : memref<1x8xf32, #tpu.memory_space<vmem>>, vector<1x8xf32>
    %58 = vector.broadcast %57 : vector<1x8xf32> to vector<256x8xf32>
    %59 = arith.addf %56, %58 : vector<256x8xf32>
    %c0_72 = arith.constant 0 : index
    %c0_73 = arith.constant 0 : index
    %60 = vector.load %arg8[%c0_72, %c0_73] : memref<4x8xbf16, #tpu.memory_space<vmem>>, vector<4x8xbf16>
    %cst_74 = arith.constant dense<0.000000e+00> : vector<256x8xf32>
    %61 = tpu.matmul %2, %60, %cst_74 {dimension_numbers = #tpu.dot_dimension_numbers<[1], [0], [0], [1], [0, 0, 1, 1], [], []>} : vector<256x4xbf16>, vector<4x8xbf16>, vector<256x8xf32> -> vector<256x8xf32>
    %c0_75 = arith.constant 0 : index
    %c0_76 = arith.constant 0 : index
    %62 = vector.load %arg9[%c0_75, %c0_76] : memref<1x8xf32, #tpu.memory_space<vmem>>, vector<1x8xf32>
    %63 = vector.broadcast %62 : vector<1x8xf32> to vector<256x8xf32>
    %64 = arith.addf %61, %63 : vector<256x8xf32>
    %65 = arith.addf %59, %64 : vector<256x8xf32>
    %cst_77 = arith.constant 0.000000e+00 : f32
    %66 = vector.broadcast %cst_77 : f32 to vector<256x8xf32>
    %67 = arith.maximumf %65, %66 : vector<256x8xf32>
    %68 = vector.shape_cast %67 : vector<256x8xf32> to vector<16x16x8xf32>
    %69 = arith.truncf %68 : vector<16x16x8xf32> to vector<16x16x8xbf16>
    %c0_78 = arith.constant 0 : index
    %c0_79 = arith.constant 0 : index
    %c0_80 = arith.constant 0 : index
    %c0_81 = arith.constant 0 : index
    %70 = vector.load %arg10[%c0_78, %c0_79, %c0_80, %c0_81] : memref<1x16x16x8xbf16, #tpu.memory_space<vmem>>, vector<1x16x16x8xbf16>
    %71 = vector.shape_cast %70 : vector<1x16x16x8xbf16> to vector<16x16x8xbf16>
    %72 = vector.shape_cast %69 : vector<16x16x8xbf16> to vector<1x16x16x8xbf16>
    tpu.vector_store %arg10[%c0_78, %c0_79, %c0_80, %c0_81], %72 {strides = array<i32>} : memref<1x16x16x8xbf16, #tpu.memory_space<vmem>>, vector<1x16x16x8xbf16>,
    return
  }
  func.func @transform_0(%arg0: i32) -> (i32, i32, i32, i32) {
    %c0_i32 = arith.constant 0 : i32
    %c0_i32_0 = arith.constant 0 : i32
    %c0_i32_1 = arith.constant 0 : i32
    %c0_i32_2 = arith.constant 0 : i32
    return %arg0, %c0_i32, %c0_i32_0, %c0_i32_1 : i32, i32, i32, i32
  }
  func.func @transform_1(%arg0: i32) -> (i32, i32) {
    %c0_i32 = arith.constant 0 : i32
    %c0_i32_0 = arith.constant 0 : i32
    %c0_i32_1 = arith.constant 0 : i32
    return %c0_i32, %c0_i32_0 : i32, i32
  }
  func.func @transform_2(%arg0: i32) -> (i32, i32) {
    %c0_i32 = arith.constant 0 : i32
    %c0_i32_0 = arith.constant 0 : i32
    %c0_i32_1 = arith.constant 0 : i32
    return %c0_i32, %c0_i32_0 : i32, i32
  }
  func.func @transform_3(%arg0: i32) -> (i32, i32) {
    %c0_i32 = arith.constant 0 : i32
    %c0_i32_0 = arith.constant 0 : i32
    %c0_i32_1 = arith.constant 0 : i32
    return %c0_i32, %c0_i32_0 : i32, i32
  }
  func.func @transform_4(%arg0: i32) -> (i32, i32) {
    %c0_i32 = arith.constant 0 : i32
    %c0_i32_0 = arith.constant 0 : i32
    %c0_i32_1 = arith.constant 0 : i32
    return %c0_i32, %c0_i32_0 : i32, i32
  }
  func.func @transform_5(%arg0: i32) -> (i32, i32) {
    %c0_i32 = arith.constant 0 : i32
    %c0_i32_0 = arith.constant 0 : i32
    %c0_i32_1 = arith.constant 0 : i32
    return %c0_i32, %c0_i32_0 : i32, i32
  }
  func.func @transform_6(%arg0: i32) -> (i32, i32) {
    %c0_i32 = arith.constant 0 : i32
    %c0_i32_0 = arith.constant 0 : i32
    %c0_i32_1 = arith.constant 0 : i32
    return %c0_i32, %c0_i32_0 : i32, i32
  }
  func.func @transform_7(%arg0: i32) -> (i32, i32) {
    %c0_i32 = arith.constant 0 : i32
    %c0_i32_0 = arith.constant 0 : i32
    %c0_i32_1 = arith.constant 0 : i32
    return %c0_i32, %c0_i32_0 : i32, i32
  }
  func.func @transform_8(%arg0: i32) -> (i32, i32) {
    %c0_i32 = arith.constant 0 : i32
    %c0_i32_0 = arith.constant 0 : i32
    %c0_i32_1 = arith.constant 0 : i32
    return %c0_i32, %c0_i32_0 : i32, i32
  }
  func.func @transform_9(%arg0: i32) -> (i32, i32, i32, i32) {
    %c0_i32 = arith.constant 0 : i32
    %c0_i32_0 = arith.constant 0 : i32
    %c0_i32_1 = arith.constant 0 : i32
    %c0_i32_2 = arith.constant 0 : i32
    return %arg0, %c0_i32, %c0_i32_0, %c0_i32_1 : i32, i32, i32, i32
  }
}

</mosaic_0001>

<llo_original>
// kernel: tpu_custom_call.1
$region0: #{tpu_custom_call.1}
  #allocation0 [shape = 'u32[]', space=smem, size = 0x4, offset = 0x4, fixed_abs, tag = 'smem constant byte address 0x4 - core index']
  #allocation1 [shape = 'u32[72,128]{1,0:T(1,128)}', space=vmem, size = 0x9000, scoped, tag = 'internal scratch']
  #allocation2 [shape = 'bf16[18,32,128]{2,1,0:T(8,128)(2,1)}', space=vmem, size = 0x24000, scoped, tag = 'scratch operand']
  #allocation3 [shape = 'bf16[256,1152]{1,0:T(8,128)(2,1)}', space=vmem, size = 0x90000, scoped, tag = 'scratch operand']
  %s0 = inlined_call_operand.vmem [shape: bf16[2,16,16,4], index: 0, kind: input, shape index: {}]
  %s1 = inlined_call_operand.vmem [shape: bf16[4,128], index: 1, kind: input, shape index: {}]
  %s2 = inlined_call_operand.vmem [shape: f32[1,128], index: 2, kind: input, shape index: {}]
  %s3 = inlined_call_operand.hbm [shape: bf16[1152,128], index: 3, kind: input, shape index: {}]
  %s4 = inlined_call_operand.vmem [shape: f32[1,128], index: 4, kind: input, shape index: {}]
  %s5 = inlined_call_operand.vmem [shape: bf16[128,8], index: 5, kind: input, shape index: {}]
  %s6 = inlined_call_operand.vmem [shape: f32[1,8], index: 6, kind: input, shape index: {}]
  %s7 = inlined_call_operand.vmem [shape: bf16[4,8], index: 7, kind: input, shape index: {}]
  %s8 = inlined_call_operand.vmem [shape: f32[1,8], index: 8, kind: input, shape index: {}]
  %s9 = inlined_call_operand.vmem [shape: bf16[2,16,16,8], index: 9, kind: output, shape index: {}]
  %s10 = sld [smem:[#allocation0]]
  $region73: #{tpu_custom_call.1} parent=0
    _
  %s12 = ssub.s32 1, %s10
  %s13 = scalar_select 0, %s12, %s10
  $region1: #{tpu_custom_call.1} parent=0
    #allocation4 [shape = 'u8[294912]{0}', space=vmem, size = 0x48000, scoped, tag = 'input window, operand 3, single buffered']
    #allocation5 [shape = 's32[2]{0}', space=sflag, size = 0x8, scoped, tag = 'scoped memory for tpu_custom_call.1']
    %14 = vsyncpa [#allocation5], 0
    loop: start=0, step=1, limit=4
    $region2: #{tpu_custom_call.1} parent=1 // loop_pre_header
      _
    $region3: #{tpu_custom_call.1} parent=1 // loop_header
      %s16 = sphi 0, %s20
      %p17 = scmp.ge.s32.totalorder %s16, 4
      %s26 = sphi 0, %s28
      %s29 = sphi 0, %s26
      %s30 = sphi 0, %s29
      %s46 = sphi 0, %s30
      %s50 = sphi 0, %s50
      %s52 = sphi 0, %s50
      %s53 = sphi 0, %s52
      %s67 = sphi 0, %s53
      %s71 = sphi 0, %s71
      %s73 = sphi 0, %s71
      %s74 = sphi 0, %s73
      %s88 = sphi 0, %s74
      %s92 = sphi 0, %s92
      %s94 = sphi 0, %s92
      %s95 = sphi 0, %s94
      %s109 = sphi 0, %s95
      %s113 = sphi 0, %s113
      %s115 = sphi 0, %s113
      %s116 = sphi 0, %s115
      %s130 = sphi 0, %s116
      %s134 = sphi 0, %s134
      %s136 = sphi 0, %s134
      %s137 = sphi 0, %s136
      %s151 = sphi 0, %s137
      %s155 = sphi 0, %s155
      %s157 = sphi 0, %s155
      %s158 = sphi 0, %s157
      %s172 = sphi 0, %s158
      %s176 = sphi 0, %s176
      %s178 = sphi 0, %s176
      %s179 = sphi 0, %s178
      %s193 = sphi 0, %s179
      %s197 = sphi 0, %s197
      %s199 = sphi 0, %s197
      %s200 = sphi 0, %s199
      %s214 = sphi 0, %s200
      %s220 = sphi 0, %s222
      %s223 = sphi 0, %s220
      %s224 = sphi 0, %s223
      %s240 = sphi 0, %s224
    $region4: #{tpu_custom_call.1} parent=1 // loop_header_branch
      %19 = sbr.rel (%p17) target = $region8
    $region5: #{tpu_custom_call.1} parent=1 // loop_body
      %s21 = ssub.s32 %s16, 1
      %s22 = ssub.s32 %s16, 2
      %s23 = sadd.s32 %s16, 1
      %s24 = ssub.s32 %s16, %s23
      %p25 = scmp.eq.s32.totalorder %s24, 0
      %s27 = sadd.s32 %s26, 1
      %s28 = scalar_select %p25, %s26, %s27
      %p31 = pneg %p25
      %p32 = scmp.eq.s32.totalorder %s16, 1
      %p33 = por %p31, %p32
      %p34 = scmp.ne.s32.totalorder %s26, %s29
      %p35 = scmp.eq.s32.totalorder %s16, 0
      %p36 = por %p34, %p35
      %p37 = scmp.ne.s32.totalorder %s26, %s29
      %p38 = scmp.eq.s32.totalorder %s21, 1
      %p39 = por %p37, %p38
      %p40 = scmp.ne.s32.totalorder %s29, %s30
      %p41 = scmp.eq.s32.totalorder %s21, 0
      %p42 = por %p40, %p41
      %p43 = scmp.ne.s32.totalorder %s29, %s30
      %p44 = scmp.eq.s32.totalorder %s22, 1
      %p45 = por %p43, %p44
      %p47 = scmp.ne.s32.totalorder %s30, %s46
      %p48 = scmp.eq.s32.totalorder %s22, 0
      %p49 = por %p47, %p48
      %s51 = sadd.s32 %s50, 1
      %p54 = scmp.eq.s32.totalorder %s16, 1
      %p55 = scmp.ne.s32.totalorder %s50, %s52
      %p56 = scmp.eq.s32.totalorder %s16, 0
      %p57 = por %p55, %p56
      %p58 = scmp.ne.s32.totalorder %s50, %s52
      %p59 = scmp.eq.s32.totalorder %s21, 1
      %p60 = por %p58, %p59
      %p61 = scmp.ne.s32.totalorder %s52, %s53
      %p62 = scmp.eq.s32.totalorder %s21, 0
      %p63 = por %p61, %p62
      %p64 = scmp.ne.s32.totalorder %s52, %s53
      %p65 = scmp.eq.s32.totalorder %s22, 1
      %p66 = por %p64, %p65
      %p68 = scmp.ne.s32.totalorder %s53, %s67
      %p69 = scmp.eq.s32.totalorder %s22, 0
      %p70 = por %p68, %p69
      %s72 = sadd.s32 %s71, 1
      %p75 = scmp.eq.s32.totalorder %s16, 1
      %p76 = scmp.ne.s32.totalorder %s71, %s73
      %p77 = scmp.eq.s32.totalorder %s16, 0
      %p78 = por %p76, %p77
      %p79 = scmp.ne.s32.totalorder %s71, %s73
      %p80 = scmp.eq.s32.totalorder %s21, 1
      %p81 = por %p79, %p80
      %p82 = scmp.ne.s32.totalorder %s73, %s74
      %p83 = scmp.eq.s32.totalorder %s21, 0
      %p84 = por %p82, %p83
      %p85 = scmp.ne.s32.totalorder %s73, %s74
      %p86 = scmp.eq.s32.totalorder %s22, 1
      %p87 = por %p85, %p86
      %p89 = scmp.ne.s32.totalorder %s74, %s88
      %p90 = scmp.eq.s32.totalorder %s22, 0
      %p91 = por %p89, %p90
      %s93 = sadd.s32 %s92, 1
      %p96 = scmp.eq.s32.totalorder %s16, 1
      %p97 = scmp.ne.s32.totalorder %s92, %s94
      %p98 = scmp.eq.s32.totalorder %s16, 0
      %p99 = por %p97, %p98
      %p100 = scmp.ne.s32.totalorder %s92, %s94
      %p101 = scmp.eq.s32.totalorder %s21, 1
      %p102 = por %p100, %p101
      %p103 = scmp.ne.s32.totalorder %s94, %s95
      %p104 = scmp.eq.s32.totalorder %s21, 0
      %p105 = por %p103, %p104
      %p106 = scmp.ne.s32.totalorder %s94, %s95
      %p107 = scmp.eq.s32.totalorder %s22, 1
      %p108 = por %p106, %p107
      %p110 = scmp.ne.s32.totalorder %s95, %s109
      %p111 = scmp.eq.s32.totalorder %s22, 0
      %p112 = por %p110, %p111
      %s114 = sadd.s32 %s113, 1
      %p117 = scmp.eq.s32.totalorder %s16, 1
      %p118 = scmp.ne.s32.totalorder %s113, %s115
      %p119 = scmp.eq.s32.totalorder %s16, 0
      %p120 = por %p118, %p119
      %p121 = scmp.ne.s32.totalorder %s113, %s115
      %p122 = scmp.eq.s32.totalorder %s21, 1
      %p123 = por %p121, %p122
      %p124 = scmp.ne.s32.totalorder %s115, %s116
      %p125 = scmp.eq.s32.totalorder %s21, 0
      %p126 = por %p124, %p125
      %p127 = scmp.ne.s32.totalorder %s115, %s116
      %p128 = scmp.eq.s32.totalorder %s22, 1
      %p129 = por %p127, %p128
      %p131 = scmp.ne.s32.totalorder %s116, %s130
      %p132 = scmp.eq.s32.totalorder %s22, 0
      %p133 = por %p131, %p132
      %s135 = sadd.s32 %s134, 1
      %p138 = scmp.eq.s32.totalorder %s16, 1
      %p139 = scmp.ne.s32.totalorder %s134, %s136
      %p140 = scmp.eq.s32.totalorder %s16, 0
      %p141 = por %p139, %p140
      %p142 = scmp.ne.s32.totalorder %s134, %s136
      %p143 = scmp.eq.s32.totalorder %s21, 1
      %p144 = por %p142, %p143
      %p145 = scmp.ne.s32.totalorder %s136, %s137
      %p146 = scmp.eq.s32.totalorder %s21, 0
      %p147 = por %p145, %p146
      %p148 = scmp.ne.s32.totalorder %s136, %s137
      %p149 = scmp.eq.s32.totalorder %s22, 1
      %p150 = por %p148, %p149
      %p152 = scmp.ne.s32.totalorder %s137, %s151
      %p153 = scmp.eq.s32.totalorder %s22, 0
      %p154 = por %p152, %p153
      %s156 = sadd.s32 %s155, 1
      %p159 = scmp.eq.s32.totalorder %s16, 1
      %p160 = scmp.ne.s32.totalorder %s155, %s157
      %p161 = scmp.eq.s32.totalorder %s16, 0
      %p162 = por %p160, %p161
      %p163 = scmp.ne.s32.totalorder %s155, %s157
      %p164 = scmp.eq.s32.totalorder %s21, 1
      %p165 = por %p163, %p164
      %p166 = scmp.ne.s32.totalorder %s157, %s158
      %p167 = scmp.eq.s32.totalorder %s21, 0
      %p168 = por %p166, %p167
      %p169 = scmp.ne.s32.totalorder %s157, %s158
      %p170 = scmp.eq.s32.totalorder %s22, 1
      %p171 = por %p169, %p170
      %p173 = scmp.ne.s32.totalorder %s158, %s172
      %p174 = scmp.eq.s32.totalorder %s22, 0
      %p175 = por %p173, %p174
      %s177 = sadd.s32 %s176, 1
      %p180 = scmp.eq.s32.totalorder %s16, 1
      %p181 = scmp.ne.s32.totalorder %s176, %s178
      %p182 = scmp.eq.s32.totalorder %s16, 0
      %p183 = por %p181, %p182
      %p184 = scmp.ne.s32.totalorder %s176, %s178
      %p185 = scmp.eq.s32.totalorder %s21, 1
      %p186 = por %p184, %p185
      %p187 = scmp.ne.s32.totalorder %s178, %s179
      %p188 = scmp.eq.s32.totalorder %s21, 0
      %p189 = por %p187, %p188
      %p190 = scmp.ne.s32.totalorder %s178, %s179
      %p191 = scmp.eq.s32.totalorder %s22, 1
      %p192 = por %p190, %p191
      %p194 = scmp.ne.s32.totalorder %s179, %s193
      %p195 = scmp.eq.s32.totalorder %s22, 0
      %p196 = por %p194, %p195
      %s198 = sadd.s32 %s197, 1
      %p201 = scmp.eq.s32.totalorder %s16, 1
      %p202 = scmp.ne.s32.totalorder %s197, %s199
      %p203 = scmp.eq.s32.totalorder %s16, 0
      %p204 = por %p202, %p203
      %p205 = scmp.ne.s32.totalorder %s197, %s199
      %p206 = scmp.eq.s32.totalorder %s21, 1
      %p207 = por %p205, %p206
      %p208 = scmp.ne.s32.totalorder %s199, %s200
      %p209 = scmp.eq.s32.totalorder %s21, 0
      %p210 = por %p208, %p209
      %p211 = scmp.ne.s32.totalorder %s199, %s200
      %p212 = scmp.eq.s32.totalorder %s22, 1
      %p213 = por %p211, %p212
      %p215 = scmp.ne.s32.totalorder %s200, %s214
      %p216 = scmp.eq.s32.totalorder %s22, 0
      %p217 = por %p215, %p216
      %s218 = ssub.s32 %s16, %s23
      %p219 = scmp.eq.s32.totalorder %s218, 0
      %s221 = sadd.s32 %s220, 1
      %s222 = scalar_select %p219, %s220, %s221
      %p225 = pneg %p219
      %p226 = scmp.eq.s32.totalorder %s16, 1
      %p227 = por %p225, %p226
      %p228 = scmp.ne.s32.totalorder %s220, %s223
      %p229 = scmp.eq.s32.totalorder %s16, 0
      %p230 = por %p228, %p229
      %p231 = scmp.ne.s32.totalorder %s220, %s223
      %p232 = scmp.eq.s32.totalorder %s21, 1
      %p233 = por %p231, %p232
      %p234 = scmp.ne.s32.totalorder %s223, %s224
      %p235 = scmp.eq.s32.totalorder %s21, 0
      %p236 = por %p234, %p235
      %p237 = scmp.ne.s32.totalorder %s223, %s224
      %p238 = scmp.eq.s32.totalorder %s22, 1
      %p239 = por %p237, %p238
      %p241 = scmp.ne.s32.totalorder %s224, %s240
      %p242 = scmp.eq.s32.totalorder %s22, 0
      %p243 = por %p241, %p242
      %p244 = scmp.le.s32.totalorder 1, %s16
      %p245 = scmp.lt.s32.totalorder %s16, 3
      %p246 = pnand %p244, %p245
      %p247 = pneg %p246
      // Predicated region
      $region9: #{tpu_custom_call.1} parent=5 // pred_check
        _
      $region10: #{tpu_custom_call.1} parent=5 // pred_check_branch
        %249 = sbr.rel (%p246) target = $region12
      $region11: #{tpu_custom_call.1} parent=5 // pred_region
        %s250 = ssub.s32 %s16, 1
        // Predicated region
        $region13: #{tpu_custom_call.1} parent=11 // pred_check
          %p251 = pneg %p63
        $region14: #{tpu_custom_call.1} parent=11 // pred_check_branch
          %253 = sbr.rel (%p251) target = $region16
        $region15: #{tpu_custom_call.1} parent=11 // pred_region
          _
        $region16: #{tpu_custom_call.1} parent=11 // pred_fallthru
          _
        // Predicated region
        $region17: #{tpu_custom_call.1} parent=11 // pred_check
          %p254 = pneg %p84
        $region18: #{tpu_custom_call.1} parent=11 // pred_check_branch
          %256 = sbr.rel (%p254) target = $region20
        $region19: #{tpu_custom_call.1} parent=11 // pred_region
          _
        $region20: #{tpu_custom_call.1} parent=11 // pred_fallthru
          _
        // Predicated region
        $region21: #{tpu_custom_call.1} parent=11 // pred_check
          %p257 = pneg %p105
        $region22: #{tpu_custom_call.1} parent=11 // pred_check_branch
          %259 = sbr.rel (%p257) target = $region24
        $region23: #{tpu_custom_call.1} parent=11 // pred_region
          %261 = vsyncadd [#allocation5], 0
          %s262 = sshll.u32 %s3, 4
          %s263 = int_to_ptr.hbm [resolvable:$true] %s262
          %s264 = sshll.u32 [#allocation4], 4
          %s265 = int_to_ptr.vmem [resolvable:$true] %s264
          %270 = dma.hbm_to_vmem [thread:$0]  %s263, 9216, %s265, [#allocation5], 64, 64, 4
        $region24: #{tpu_custom_call.1} parent=11 // pred_fallthru
          _
        // Predicated region
        $region25: #{tpu_custom_call.1} parent=11 // pred_check
          %p271 = pneg %p126
        $region26: #{tpu_custom_call.1} parent=11 // pred_check_branch
          %273 = sbr.rel (%p271) target = $region28
        $region27: #{tpu_custom_call.1} parent=11 // pred_region
          _
        $region28: #{tpu_custom_call.1} parent=11 // pred_fallthru
          _
        // Predicated region
        $region29: #{tpu_custom_call.1} parent=11 // pred_check
          %p274 = pneg %p147
        $region30: #{tpu_custom_call.1} parent=11 // pred_check_branch
          %276 = sbr.rel (%p274) target = $region32
        $region31: #{tpu_custom_call.1} parent=11 // pred_region
          _
        $region32: #{tpu_custom_call.1} parent=11 // pred_fallthru
          _
        // Predicated region
        $region33: #{tpu_custom_call.1} parent=11 // pred_check
          %p277 = pneg %p168
        $region34: #{tpu_custom_call.1} parent=11 // pred_check_branch
          %279 = sbr.rel (%p277) target = $region36
        $region35: #{tpu_custom_call.1} parent=11 // pred_region
          _
        $region36: #{tpu_custom_call.1} parent=11 // pred_fallthru
          _
        // Predicated region
        $region37: #{tpu_custom_call.1} parent=11 // pred_check
          %p280 = pneg %p189
        $region38: #{tpu_custom_call.1} parent=11 // pred_check_branch
          %282 = sbr.rel (%p280) target = $region40
        $region39: #{tpu_custom_call.1} parent=11 // pred_region
          _
        $region40: #{tpu_custom_call.1} parent=11 // pred_fallthru
          _
        // Predicated region
        $region41: #{tpu_custom_call.1} parent=11 // pred_check
          %p283 = pneg %p210
        $region42: #{tpu_custom_call.1} parent=11 // pred_check_branch
          %285 = sbr.rel (%p283) target = $region44
        $region43: #{tpu_custom_call.1} parent=11 // pred_region
          _
        $region44: #{tpu_custom_call.1} parent=11 // pred_fallthru
          _
      $region12: #{tpu_custom_call.1} parent=5 // pred_fallthru
        _
      %p286 = scmp.lt.s32.totalorder %s16, 2
      // Predicated region
      $region45: #{tpu_custom_call.1} parent=5 // pred_check
        %p287 = pneg %p286
      $region46: #{tpu_custom_call.1} parent=5 // pred_check_branch
        %289 = sbr.rel (%p287) target = $region48
      $region47: #{tpu_custom_call.1} parent=5 // pred_region
        // Predicated region
        $region49: #{tpu_custom_call.1} parent=47 // pred_check
          %p290 = pneg %p36
        $region50: #{tpu_custom_call.1} parent=47 // pred_check_branch
          %292 = sbr.rel (%p290) target = $region52
        $region51: #{tpu_custom_call.1} parent=47 // pred_region
          %p293 = scmp.lt.s32.totalorder %s16, 1
          %s294 = scalar_select %p293, %s16, 1
          %s295 = smul.addr %s294, 32
          %s296 = smul.addr %s295, 4
          %s297 = scalar_lea.vmem %s0, %s296
        $region52: #{tpu_custom_call.1} parent=47 // pred_fallthru
          _
      $region48: #{tpu_custom_call.1} parent=5 // pred_fallthru
        _
      %p298 = scmp.le.s32.totalorder 1, %s16
      %p299 = scmp.lt.s32.totalorder %s16, 3
      %p300 = pnand %p298, %p299
      %p301 = pneg %p300
      // Predicated region
      $region53: #{tpu_custom_call.1} parent=5 // pred_check
        _
      $region54: #{tpu_custom_call.1} parent=5 // pred_check_branch
        %303 = sbr.rel (%p300) target = $region56
      $region55: #{tpu_custom_call.1} parent=5 // pred_region
        %s304 = ssub.s32 %s16, 1
        // Predicated region
        $region57: #{tpu_custom_call.1} parent=55 // pred_check
          %p305 = pneg %p105
        $region58: #{tpu_custom_call.1} parent=55 // pred_check_branch
          %307 = sbr.rel (%p305) target = $region60
        $region59: #{tpu_custom_call.1} parent=55 // pred_region
          %309 = dma.done [#allocation5], 9216
        $region60: #{tpu_custom_call.1} parent=55 // pred_fallthru
          _
        %p310 = scmp.lt.s32.totalorder %s21, 1
        %s311 = scalar_select %p310, %s21, 1
        %s312 = smul.addr %s311, 32
        %s313 = smul.addr %s312, 4
        %s314 = scalar_lea.vmem %s0, %s313
        %p315 = pneg %p42
        %p316 = pneg %p39
        %p317 = pneg %p63
        %p318 = pneg %p60
        %p319 = pneg %p84
        %p320 = pneg %p81
        %p321 = pneg %p105
        %p322 = pneg %p102
        %p323 = pneg %p126
        %p324 = pneg %p123
        %p325 = pneg %p147
        %p326 = pneg %p144
        %p327 = pneg %p168
        %p328 = pneg %p165
        %p329 = pneg %p189
        %p330 = pneg %p186
        %p331 = pneg %p210
        %p332 = pneg %p207
        %p333 = pneg %p236
        %p334 = pneg %p233
        %p335 = scmp.lt.s32.totalorder %s21, 1
        %s336 = scalar_select %p335, %s21, 1
        %s337 = smul.addr %s336, 32
        %s338 = smul.addr %s337, 4
        %s339 = scalar_lea.vmem %s9, %s338
        %p340 = scmp.lt.s32.totalorder %s21, 1
        %s341 = scalar_select %p340, %s21, 1
        %s342 = smul.addr %s341, 32
        %s343 = smul.addr %s342, 4
        %s344 = scalar_lea.vmem %s0, %s343
        %p345 = scmp.lt.s32.totalorder %s21, 1
        %s346 = scalar_select %p345, %s21, 1
        %s347 = smul.addr %s346, 32
        %s348 = smul.addr %s347, 4
        %s349 = scalar_lea.vmem %s9, %s348
        %v351 = vld [vmem:[%s344] sm:$0xf]
        %v352 = vld [vmem:[%s344 + $0x4] sm:$0xf]
        %v353 = vld [vmem:[%s344 + $0x8] sm:$0xf]
        %v354 = vld [vmem:[%s344 + $0xc] sm:$0xf]
        %v355 = vld [vmem:[%s344 + $0x10] sm:$0xf]
        %v356 = vld [vmem:[%s344 + $0x14] sm:$0xf]
        %v357 = vld [vmem:[%s344 + $0x18] sm:$0xf]
        %v358 = vld [vmem:[%s344 + $0x1c] sm:$0xf]
        %v359 = vld [vmem:[%s344 + $0x20] sm:$0xf]
        %v360 = vld [vmem:[%s344 + $0x24] sm:$0xf]
        %v361 = vld [vmem:[%s344 + $0x28] sm:$0xf]
        %v362 = vld [vmem:[%s344 + $0x2c] sm:$0xf]
        %v363 = vld [vmem:[%s344 + $0x30] sm:$0xf]
        %v364 = vld [vmem:[%s344 + $0x34] sm:$0xf]
        %v365 = vld [vmem:[%s344 + $0x38] sm:$0xf]
        %v366 = vld [vmem:[%s344 + $0x3c] sm:$0xf]
        %v367 = vld [vmem:[%s344 + $0x40] sm:$0xf]
        %v368 = vld [vmem:[%s344 + $0x44] sm:$0xf]
        %v369 = vld [vmem:[%s344 + $0x48] sm:$0xf]
        %v370 = vld [vmem:[%s344 + $0x4c] sm:$0xf]
        %v371 = vld [vmem:[%s344 + $0x50] sm:$0xf]
        %v372 = vld [vmem:[%s344 + $0x54] sm:$0xf]
        %v373 = vld [vmem:[%s344 + $0x58] sm:$0xf]
        %v374 = vld [vmem:[%s344 + $0x5c] sm:$0xf]
        %v375 = vld [vmem:[%s344 + $0x60] sm:$0xf]
        %v376 = vld [vmem:[%s344 + $0x64] sm:$0xf]
        %v377 = vld [vmem:[%s344 + $0x68] sm:$0xf]
        %v378 = vld [vmem:[%s344 + $0x6c] sm:$0xf]
        %v379 = vld [vmem:[%s344 + $0x70] sm:$0xf]
        %v380 = vld [vmem:[%s344 + $0x74] sm:$0xf]
        %v381 = vld [vmem:[%s344 + $0x78] sm:$0xf]
        %v382 = vld [vmem:[%s344 + $0x7c] sm:$0xf]
        %v383 = vld [vmem:[%s1] sm:$0x3]
        %v384 = vld [vmem:[%s2] sm:$0x1]
        %v386 = vperm.slane %v384, 0
        %v420 = vunpack.c.l.b16 %v351
        %v421 = vunpack.c.l.b16 %v352
        %v422 = vunpack.c.l.b16 %v353
        %v423 = vunpack.c.l.b16 %v354
        %v424 = vunpack.c.l.b16 %v355
        %v425 = vunpack.c.l.b16 %v356
        %v426 = vunpack.c.l.b16 %v357
        %v427 = vunpack.c.l.b16 %v358
        %v428 = vunpack.c.l.b16 %v359
        %v429 = vunpack.c.l.b16 %v360
        %v430 = vunpack.c.l.b16 %v361
        %v431 = vunpack.c.l.b16 %v362
        %v432 = vunpack.c.l.b16 %v363
        %v433 = vunpack.c.l.b16 %v364
        %v434 = vunpack.c.l.b16 %v365
        %v435 = vunpack.c.l.b16 %v366
        %v436 = vunpack.c.l.b16 %v367
        %v437 = vunpack.c.l.b16 %v368
        %v438 = vunpack.c.l.b16 %v369
        %v439 = vunpack.c.l.b16 %v370
        %v440 = vunpack.c.l.b16 %v371
        %v441 = vunpack.c.l.b16 %v372
        %v442 = vunpack.c.l.b16 %v373
        %v443 = vunpack.c.l.b16 %v374
        %v444 = vunpack.c.l.b16 %v375
        %v445 = vunpack.c.l.b16 %v376
        %v446 = vunpack.c.l.b16 %v377
        %v447 = vunpack.c.l.b16 %v378
        %v448 = vunpack.c.l.b16 %v379
        %v449 = vunpack.c.l.b16 %v380
        %v450 = vunpack.c.l.b16 %v381
        %v451 = vunpack.c.l.b16 %v382
        %v452 = vpack.c.b16 %v421, %v420
        %v453 = vpack.c.b16 %v423, %v422
        %v454 = vpack.c.b16 %v425, %v424
        %v455 = vpack.c.b16 %v427, %v426
        %v456 = vpack.c.b16 %v429, %v428
        %v457 = vpack.c.b16 %v431, %v430
        %v458 = vpack.c.b16 %v433, %v432
        %v459 = vpack.c.b16 %v435, %v434
        %v460 = vpack.c.b16 %v437, %v436
        %v461 = vpack.c.b16 %v439, %v438
        %v462 = vpack.c.b16 %v441, %v440
        %v463 = vpack.c.b16 %v443, %v442
        %v464 = vpack.c.b16 %v445, %v444
        %v465 = vpack.c.b16 %v447, %v446
        %v466 = vpack.c.b16 %v449, %v448
        %v467 = vpack.c.b16 %v451, %v450
        %vm468 = vcmask 31744
        %v470 = vsel %vm468, %v452, 0
        %v473 = vsel %vm468, %v453, 0
        %v476 = vsel %vm468, %v454, 0
        %v479 = vsel %vm468, %v455, 0
        %v482 = vsel %vm468, %v456, 0
        %v485 = vsel %vm468, %v457, 0
        %v488 = vsel %vm468, %v458, 0
        %v491 = vsel %vm468, %v459, 0
        %v494 = vsel %vm468, %v460, 0
        %v497 = vsel %vm468, %v461, 0
        %v500 = vsel %vm468, %v462, 0
        %v503 = vsel %vm468, %v463, 0
        %v506 = vsel %vm468, %v464, 0
        %v509 = vsel %vm468, %v465, 0
        %v512 = vsel %vm468, %v466, 0
        %v515 = vsel %vm468, %v467, 0
        %vm517 = vcmask 1041408
        %v519 = vsel %vm517, %v383, 0
        %521 = vmatpush.bf16.msra.mxu0 0
        %522 = vmatpush.bf16.msra.mxu0 0
        %523 = vmatpush.bf16.msra.mxu0 0
        %524 = vmatpush.bf16.msra.mxu0 0
        %525 = vmatpush.bf16.msra.mxu0 0
        %526 = vmatpush.bf16.msra.mxu0 0
        %527 = vmatpush.bf16.msra.mxu0 0
        %528 = vmatpush.bf16.msra.mxu0 %v519
        %529 = vmatmul.bf16.gmra.mxu0 %v470
        %v530 = vpop.f32.mrf.mxu0
        %v531 = vadd.f32 %v386, %v530
        %v532 = vpop.f32.mrf.mxu0
        %v533 = vadd.f32 %v386, %v532
        %534 = vmatmul.bf16.gmra.mxu0 %v473
        %v535 = vpop.f32.mrf.mxu0
        %v536 = vadd.f32 %v386, %v535
        %v537 = vpop.f32.mrf.mxu0
        %v538 = vadd.f32 %v386, %v537
        %539 = vmatmul.bf16.gmra.mxu0 %v476
        %v540 = vpop.f32.mrf.mxu0
        %v541 = vadd.f32 %v386, %v540
        %v542 = vpop.f32.mrf.mxu0
        %v543 = vadd.f32 %v386, %v542
        %544 = vmatmul.bf16.gmra.mxu0 %v479
        %v545 = vpop.f32.mrf.mxu0
        %v546 = vadd.f32 %v386, %v545
        %v547 = vpop.f32.mrf.mxu0
        %v548 = vadd.f32 %v386, %v547
        %549 = vmatmul.bf16.gmra.mxu0 %v482
        %v550 = vpop.f32.mrf.mxu0
        %v551 = vadd.f32 %v386, %v550
        %v552 = vpop.f32.mrf.mxu0
        %v553 = vadd.f32 %v386, %v552
        %554 = vmatmul.bf16.gmra.mxu0 %v485
        %v555 = vpop.f32.mrf.mxu0
        %v556 = vadd.f32 %v386, %v555
        %v557 = vpop.f32.mrf.mxu0
        %v558 = vadd.f32 %v386, %v557
        %559 = vmatmul.bf16.gmra.mxu0 %v488
        %v560 = vpop.f32.mrf.mxu0
        %v561 = vadd.f32 %v386, %v560
        %v562 = vpop.f32.mrf.mxu0
        %v563 = vadd.f32 %v386, %v562
        %564 = vmatmul.bf16.gmra.mxu0 %v491
        %v565 = vpop.f32.mrf.mxu0
        %v566 = vadd.f32 %v386, %v565
        %v567 = vpop.f32.mrf.mxu0
        %v568 = vadd.f32 %v386, %v567
        %569 = vmatmul.bf16.gmra.mxu0 %v494
        %v570 = vpop.f32.mrf.mxu0
        %v571 = vadd.f32 %v386, %v570
        %v572 = vpop.f32.mrf.mxu0
        %v573 = vadd.f32 %v386, %v572
        %574 = vmatmul.bf16.gmra.mxu0 %v497
        %v575 = vpop.f32.mrf.mxu0
        %v576 = vadd.f32 %v386, %v575
        %v577 = vpop.f32.mrf.mxu0
        %v578 = vadd.f32 %v386, %v577
        %579 = vmatmul.bf16.gmra.mxu0 %v500
        %v580 = vpop.f32.mrf.mxu0
        %v581 = vadd.f32 %v386, %v580
        %v582 = vpop.f32.mrf.mxu0
        %v583 = vadd.f32 %v386, %v582
        %584 = vmatmul.bf16.gmra.mxu0 %v503
        %v585 = vpop.f32.mrf.mxu0
        %v586 = vadd.f32 %v386, %v585
        %v587 = vpop.f32.mrf.mxu0
        %v588 = vadd.f32 %v386, %v587
        %589 = vmatmul.bf16.gmra.mxu0 %v506
        %v590 = vpop.f32.mrf.mxu0
        %v591 = vadd.f32 %v386, %v590
        %v592 = vpop.f32.mrf.mxu0
        %v593 = vadd.f32 %v386, %v592
        %594 = vmatmul.bf16.gmra.mxu0 %v509
        %v595 = vpop.f32.mrf.mxu0
        %v596 = vadd.f32 %v386, %v595
        %v597 = vpop.f32.mrf.mxu0
        %v598 = vadd.f32 %v386, %v597
        %599 = vmatmul.bf16.gmra.mxu0 %v512
        %v600 = vpop.f32.mrf.mxu0
        %v601 = vadd.f32 %v386, %v600
        %v602 = vpop.f32.mrf.mxu0
        %v603 = vadd.f32 %v386, %v602
        %604 = vmatmul.bf16.gmra.mxu0 %v515
        %v605 = vpop.f32.mrf.mxu0
        %v606 = vadd.f32 %v386, %v605
        %v607 = vpop.f32.mrf.mxu0
        %v608 = vadd.f32 %v386, %v607
        %609 = vdwg.mxu0
        %v610 = vmax.f32 %v531, 0.0
        %v611 = vmax.f32 %v533, 0.0
        %v612 = vmax.f32 %v536, 0.0
        %v613 = vmax.f32 %v538, 0.0
        %v614 = vmax.f32 %v541, 0.0
        %v615 = vmax.f32 %v543, 0.0
        %v616 = vmax.f32 %v546, 0.0
        %v617 = vmax.f32 %v548, 0.0
        %v618 = vmax.f32 %v551, 0.0
        %v619 = vmax.f32 %v553, 0.0
        %v620 = vmax.f32 %v556, 0.0
        %v621 = vmax.f32 %v558, 0.0
        %v622 = vmax.f32 %v561, 0.0
        %v623 = vmax.f32 %v563, 0.0
        %v624 = vmax.f32 %v566, 0.0
        %v625 = vmax.f32 %v568, 0.0
        %v626 = vmax.f32 %v571, 0.0
        %v627 = vmax.f32 %v573, 0.0
        %v628 = vmax.f32 %v576, 0.0
        %v629 = vmax.f32 %v578, 0.0
        %v630 = vmax.f32 %v581, 0.0
        %v631 = vmax.f32 %v583, 0.0
        %v632 = vmax.f32 %v586, 0.0
        %v633 = vmax.f32 %v588, 0.0
        %v634 = vmax.f32 %v591, 0.0
        %v635 = vmax.f32 %v593, 0.0
        %v636 = vmax.f32 %v596, 0.0
        %v637 = vmax.f32 %v598, 0.0
        %v638 = vmax.f32 %v601, 0.0
        %v639 = vmax.f32 %v603, 0.0
        %v640 = vmax.f32 %v606, 0.0
        %v641 = vmax.f32 %v608, 0.0
        %642 = vst [vmem:[#allocation2] sm:$0xf] 0
        %643 = vst [vmem:[#allocation2 + $0x4] sm:$0xf] 0
        %644 = vst [vmem:[#allocation2 + $0x8] sm:$0xf] 0
        %645 = vst [vmem:[#allocation2 + $0xc] sm:$0xf] 0
        %s646 = scalar_lea.vmem [#allocation2], 272
        %647 = vst [vmem:[%s646] sm:$0xf] 0
        %648 = vst [vmem:[%s646 + $0x4] sm:$0xf] 0
        %649 = vst [vmem:[%s646 + $0x8] sm:$0xf] 0
        %650 = vst [vmem:[%s646 + $0xc] sm:$0xf] 0
        %s651 = scalar_lea.vmem [#allocation2], 16
        %vm652 = vcmask 1040384
        %vm653 = vsmask.f32 256
        %vm654 = vmand %vm652, %vm653
        %v655 = vld [vmem:[%s651] sm:$0x1]
        %v656 = vsel %vm654, 0, %v655
        %657 = vst [vmem:[%s651] sm:$0x1] %v656
        %v658 = vld [vmem:[%s651 + $0x10] sm:$0x1]
        %v659 = vsel %vm654, 0, %v658
        %660 = vst [vmem:[%s651 + $0x10] sm:$0x1] %v659
        %v661 = vld [vmem:[%s651 + $0x20] sm:$0x1]
        %v662 = vsel %vm654, 0, %v661
        %663 = vst [vmem:[%s651 + $0x20] sm:$0x1] %v662
        %v664 = vld [vmem:[%s651 + $0x30] sm:$0x1]
        %v665 = vsel %vm654, 0, %v664
        %666 = vst [vmem:[%s651 + $0x30] sm:$0x1] %v665
        %v667 = vld [vmem:[%s651 + $0x40] sm:$0x1]
        %v668 = vsel %vm654, 0, %v667
        %669 = vst [vmem:[%s651 + $0x40] sm:$0x1] %v668
        %v670 = vld [vmem:[%s651 + $0x50] sm:$0x1]
        %v671 = vsel %vm654, 0, %v670
        %672 = vst [vmem:[%s651 + $0x50] sm:$0x1] %v671
        %v673 = vld [vmem:[%s651 + $0x60] sm:$0x1]
        %v674 = vsel %vm654, 0, %v673
        %675 = vst [vmem:[%s651 + $0x60] sm:$0x1] %v674
        %v676 = vld [vmem:[%s651 + $0x70] sm:$0x1]
        %v677 = vsel %vm654, 0, %v676
        %678 = vst [vmem:[%s651 + $0x70] sm:$0x1] %v677
        %v679 = vld [vmem:[%s651 + $0x80] sm:$0x1]
        %v680 = vsel %vm654, 0, %v679
        %681 = vst [vmem:[%s651 + $0x80] sm:$0x1] %v680
        %v682 = vld [vmem:[%s651 + $0x90] sm:$0x1]
        %v683 = vsel %vm654, 0, %v682
        %684 = vst [vmem:[%s651 + $0x90] sm:$0x1] %v683
        %v685 = vld [vmem:[%s651 + $0xa0] sm:$0x1]
        %v686 = vsel %vm654, 0, %v685
        %687 = vst [vmem:[%s651 + $0xa0] sm:$0x1] %v686
        %v688 = vld [vmem:[%s651 + $0xb0] sm:$0x1]
        %v689 = vsel %vm654, 0, %v688
        %690 = vst [vmem:[%s651 + $0xb0] sm:$0x1] %v689
        %v691 = vld [vmem:[%s651 + $0xc0] sm:$0x1]
        %v692 = vsel %vm654, 0, %v691
        %693 = vst [vmem:[%s651 + $0xc0] sm:$0x1] %v692
        %v694 = vld [vmem:[%s651 + $0xd0] sm:$0x1]
        %v695 = vsel %vm654, 0, %v694
        %696 = vst [vmem:[%s651 + $0xd0] sm:$0x1] %v695
        %v697 = vld [vmem:[%s651 + $0xe0] sm:$0x1]
        %v698 = vsel %vm654, 0, %v697
        %699 = vst [vmem:[%s651 + $0xe0] sm:$0x1] %v698
        %v700 = vld [vmem:[%s651 + $0xf0] sm:$0x1]
        %v701 = vsel %vm654, 0, %v700
        %702 = vst [vmem:[%s651 + $0xf0] sm:$0x1] %v701
        %vm703 = vsmask.f32 7938
        %vm704 = vmand %vm652, %vm703
        %v705 = vld [vmem:[%s651 + $0x8] sm:$0x1]
        %v706 = vsel %vm704, 0, %v705
        %707 = vst [vmem:[%s651 + $0x8] sm:$0x1] %v706
        %v708 = vld [vmem:[%s651 + $0x18] sm:$0x1]
        %v709 = vsel %vm704, 0, %v708
        %710 = vst [vmem:[%s651 + $0x18] sm:$0x1] %v709
        %v711 = vld [vmem:[%s651 + $0x28] sm:$0x1]
        %v712 = vsel %vm704, 0, %v711
        %713 = vst [vmem:[%s651 + $0x28] sm:$0x1] %v712
        %v714 = vld [vmem:[%s651 + $0x38] sm:$0x1]
        %v715 = vsel %vm704, 0, %v714
        %716 = vst [vmem:[%s651 + $0x38] sm:$0x1] %v715
        %v717 = vld [vmem:[%s651 + $0x48] sm:$0x1]
        %v718 = vsel %vm704, 0, %v717
        %719 = vst [vmem:[%s651 + $0x48] sm:$0x1] %v718
        %v720 = vld [vmem:[%s651 + $0x58] sm:$0x1]
        %v721 = vsel %vm704, 0, %v720
        %722 = vst [vmem:[%s651 + $0x58] sm:$0x1] %v721
        %v723 = vld [vmem:[%s651 + $0x68] sm:$0x1]
        %v724 = vsel %vm704, 0, %v723
        %725 = vst [vmem:[%s651 + $0x68] sm:$0x1] %v724
        %v726 = vld [vmem:[%s651 + $0x78] sm:$0x1]
        %v727 = vsel %vm704, 0, %v726
        %728 = vst [vmem:[%s651 + $0x78] sm:$0x1] %v727
        %v729 = vld [vmem:[%s651 + $0x88] sm:$0x1]
        %v730 = vsel %vm704, 0, %v729
        %731 = vst [vmem:[%s651 + $0x88] sm:$0x1] %v730
        %v732 = vld [vmem:[%s651 + $0x98] sm:$0x1]
        %v733 = vsel %vm704, 0, %v732
        %734 = vst [vmem:[%s651 + $0x98] sm:$0x1] %v733
        %v735 = vld [vmem:[%s651 + $0xa8] sm:$0x1]
        %v736 = vsel %vm704, 0, %v735
        %737 = vst [vmem:[%s651 + $0xa8] sm:$0x1] %v736
        %v738 = vld [vmem:[%s651 + $0xb8] sm:$0x1]
        %v739 = vsel %vm704, 0, %v738
        %740 = vst [vmem:[%s651 + $0xb8] sm:$0x1] %v739
        %v741 = vld [vmem:[%s651 + $0xc8] sm:$0x1]
        %v742 = vsel %vm704, 0, %v741
        %743 = vst [vmem:[%s651 + $0xc8] sm:$0x1] %v742
        %v744 = vld [vmem:[%s651 + $0xd8] sm:$0x1]
        %v745 = vsel %vm704, 0, %v744
        %746 = vst [vmem:[%s651 + $0xd8] sm:$0x1] %v745
        %v747 = vld [vmem:[%s651 + $0xe8] sm:$0x1]
        %v748 = vsel %vm704, 0, %v747
        %749 = vst [vmem:[%s651 + $0xe8] sm:$0x1] %v748
        %v750 = vld [vmem:[%s651 + $0xf8] sm:$0x1]
        %v751 = vsel %vm704, 0, %v750
        %752 = vst [vmem:[%s651 + $0xf8] sm:$0x1] %v751
        %v753 = vpack.c.bf16 %v610, %v610
        %v754 = vpack.c.bf16 %v611, %v611
        %v755 = vpack.c.bf16 %v612, %v612
        %v756 = vpack.c.bf16 %v613, %v613
        %v757 = vpack.c.bf16 %v614, %v614
        %v758 = vpack.c.bf16 %v615, %v615
        %v759 = vpack.c.bf16 %v616, %v616
        %v760 = vpack.c.bf16 %v617, %v617
        %v761 = vpack.c.bf16 %v618, %v618
        %v762 = vpack.c.bf16 %v619, %v619
        %v763 = vpack.c.bf16 %v620, %v620
        %v764 = vpack.c.bf16 %v621, %v621
        %v765 = vpack.c.bf16 %v622, %v622
        %v766 = vpack.c.bf16 %v623, %v623
        %v767 = vpack.c.bf16 %v624, %v624
        %v768 = vpack.c.bf16 %v625, %v625
        %v769 = vpack.c.bf16 %v626, %v626
        %v770 = vpack.c.bf16 %v627, %v627
        %v771 = vpack.c.bf16 %v628, %v628
        %v772 = vpack.c.bf16 %v629, %v629
        %v773 = vpack.c.bf16 %v630, %v630
        %v774 = vpack.c.bf16 %v631, %v631
        %v775 = vpack.c.bf16 %v632, %v632
        %v776 = vpack.c.bf16 %v633, %v633
        %v777 = vpack.c.bf16 %v634, %v634
        %v778 = vpack.c.bf16 %v635, %v635
        %v779 = vpack.c.bf16 %v636, %v636
        %v780 = vpack.c.bf16 %v637, %v637
        %v781 = vpack.c.bf16 %v638, %v638
        %v782 = vpack.c.bf16 %v639, %v639
        %v783 = vpack.c.bf16 %v640, %v640
        %v784 = vpack.c.bf16 %v641, %v641
        %vm785 = vsmask.f32 4368
        %vm786 = vmor %vm653, %vm785
        %v788 = vshrl.u32 %v753, 16
        %v790 = vrot.slane %v788, 7
        %v791 = vshll.u32 %v753, 16
        %v793 = vor.u32 %v790, %v791
        %v794 = vrot.slane %v790, 4
        %v796 = vshrl.u32 %v754, 16
        %v798 = vrot.slane %v796, 7
        %v799 = vshll.u32 %v754, 16
        %v801 = vor.u32 %v798, %v799
        %v802 = vsel %vm786, %v794, %v801
        %v803 = vrot.slane %v798, 4
        %v805 = vshrl.u32 %v755, 16
        %v807 = vrot.slane %v805, 7
        %v808 = vshll.u32 %v755, 16
        %v810 = vor.u32 %v807, %v808
        %v811 = vrot.slane %v807, 4
        %v813 = vshrl.u32 %v756, 16
        %v815 = vrot.slane %v813, 7
        %v816 = vshll.u32 %v756, 16
        %v818 = vor.u32 %v815, %v816
        %v819 = vsel %vm786, %v811, %v818
        %v820 = vrot.slane %v815, 4
        %v822 = vshrl.u32 %v757, 16
        %v824 = vrot.slane %v822, 7
        %v825 = vshll.u32 %v757, 16
        %v827 = vor.u32 %v824, %v825
        %v828 = vrot.slane %v824, 4
        %v830 = vshrl.u32 %v758, 16
        %v832 = vrot.slane %v830, 7
        %v833 = vshll.u32 %v758, 16
        %v835 = vor.u32 %v832, %v833
        %v836 = vsel %vm786, %v828, %v835
        %v837 = vrot.slane %v832, 4
        %v839 = vshrl.u32 %v759, 16
        %v841 = vrot.slane %v839, 7
        %v842 = vshll.u32 %v759, 16
        %v844 = vor.u32 %v841, %v842
        %v845 = vrot.slane %v841, 4
        %v847 = vshrl.u32 %v760, 16
        %v849 = vrot.slane %v847, 7
        %v850 = vshll.u32 %v760, 16
        %v852 = vor.u32 %v849, %v850
        %v853 = vsel %vm786, %v845, %v852
        %v854 = vrot.slane %v849, 4
        %v856 = vshrl.u32 %v761, 16
        %v858 = vrot.slane %v856, 7
        %v859 = vshll.u32 %v761, 16
        %v861 = vor.u32 %v858, %v859
        %v862 = vrot.slane %v858, 4
        %v864 = vshrl.u32 %v762, 16
        %v866 = vrot.slane %v864, 7
        %v867 = vshll.u32 %v762, 16
        %v869 = vor.u32 %v866, %v867
        %v870 = vsel %vm786, %v862, %v869
        %v871 = vrot.slane %v866, 4
        %v873 = vshrl.u32 %v763, 16
        %v875 = vrot.slane %v873, 7
        %v876 = vshll.u32 %v763, 16
        %v878 = vor.u32 %v875, %v876
        %v879 = vrot.slane %v875, 4
        %v881 = vshrl.u32 %v764, 16
        %v883 = vrot.slane %v881, 7
        %v884 = vshll.u32 %v764, 16
        %v886 = vor.u32 %v883, %v884
        %v887 = vsel %vm786, %v879, %v886
        %v888 = vrot.slane %v883, 4
        %v890 = vshrl.u32 %v765, 16
        %v892 = vrot.slane %v890, 7
        %v893 = vshll.u32 %v765, 16
        %v895 = vor.u32 %v892, %v893
        %v896 = vrot.slane %v892, 4
        %v898 = vshrl.u32 %v766, 16
        %v900 = vrot.slane %v898, 7
        %v901 = vshll.u32 %v766, 16
        %v903 = vor.u32 %v900, %v901
        %v904 = vsel %vm786, %v896, %v903
        %v905 = vrot.slane %v900, 4
        %v907 = vshrl.u32 %v767, 16
        %v909 = vrot.slane %v907, 7
        %v910 = vshll.u32 %v767, 16
        %v912 = vor.u32 %v909, %v910
        %v913 = vrot.slane %v909, 4
        %v915 = vshrl.u32 %v768, 16
        %v917 = vrot.slane %v915, 7
        %v918 = vshll.u32 %v768, 16
        %v920 = vor.u32 %v917, %v918
        %v921 = vsel %vm786, %v913, %v920
        %v922 = vrot.slane %v917, 4
        %v924 = vshrl.u32 %v769, 16
        %v926 = vrot.slane %v924, 7
        %v927 = vshll.u32 %v769, 16
        %v929 = vor.u32 %v926, %v927
        %v930 = vrot.slane %v926, 4
        %v932 = vshrl.u32 %v770, 16
        %v934 = vrot.slane %v932, 7
        %v935 = vshll.u32 %v770, 16
        %v937 = vor.u32 %v934, %v935
        %v938 = vsel %vm786, %v930, %v937
        %v939 = vrot.slane %v934, 4
        %v941 = vshrl.u32 %v771, 16
        %v943 = vrot.slane %v941, 7
        %v944 = vshll.u32 %v771, 16
        %v946 = vor.u32 %v943, %v944
        %v947 = vrot.slane %v943, 4
        %v949 = vshrl.u32 %v772, 16
        %v951 = vrot.slane %v949, 7
        %v952 = vshll.u32 %v772, 16
        %v954 = vor.u32 %v951, %v952
        %v955 = vsel %vm786, %v947, %v954
        %v956 = vrot.slane %v951, 4
        %v958 = vshrl.u32 %v773, 16
        %v960 = vrot.slane %v958, 7
        %v961 = vshll.u32 %v773, 16
        %v963 = vor.u32 %v960, %v961
        %v964 = vrot.slane %v960, 4
        %v966 = vshrl.u32 %v774, 16
        %v968 = vrot.slane %v966, 7
        %v969 = vshll.u32 %v774, 16
        %v971 = vor.u32 %v968, %v969
        %v972 = vsel %vm786, %v964, %v971
        %v973 = vrot.slane %v968, 4
        %v975 = vshrl.u32 %v775, 16
        %v977 = vrot.slane %v975, 7
        %v978 = vshll.u32 %v775, 16
        %v980 = vor.u32 %v977, %v978
        %v981 = vrot.slane %v977, 4
        %v983 = vshrl.u32 %v776, 16
        %v985 = vrot.slane %v983, 7
        %v986 = vshll.u32 %v776, 16
        %v988 = vor.u32 %v985, %v986
        %v989 = vsel %vm786, %v981, %v988
        %v990 = vrot.slane %v985, 4
        %v992 = vshrl.u32 %v777, 16
        %v994 = vrot.slane %v992, 7
        %v995 = vshll.u32 %v777, 16
        %v997 = vor.u32 %v994, %v995
        %v998 = vrot.slane %v994, 4
        %v1000 = vshrl.u32 %v778, 16
        %v1002 = vrot.slane %v1000, 7
        %v1003 = vshll.u32 %v778, 16
        %v1005 = vor.u32 %v1002, %v1003
        %v1006 = vsel %vm786, %v998, %v1005
        %v1007 = vrot.slane %v1002, 4
        %v1009 = vshrl.u32 %v779, 16
        %v1011 = vrot.slane %v1009, 7
        %v1012 = vshll.u32 %v779, 16
        %v1014 = vor.u32 %v1011, %v1012
        %v1015 = vrot.slane %v1011, 4
        %v1017 = vshrl.u32 %v780, 16
        %v1019 = vrot.slane %v1017, 7
        %v1020 = vshll.u32 %v780, 16
        %v1022 = vor.u32 %v1019, %v1020
        %v1023 = vsel %vm786, %v1015, %v1022
        %v1024 = vrot.slane %v1019, 4
        %v1026 = vshrl.u32 %v781, 16
        %v1028 = vrot.slane %v1026, 7
        %v1029 = vshll.u32 %v781, 16
        %v1031 = vor.u32 %v1028, %v1029
        %v1032 = vrot.slane %v1028, 4
        %v1034 = vshrl.u32 %v782, 16
        %v1036 = vrot.slane %v1034, 7
        %v1037 = vshll.u32 %v782, 16
        %v1039 = vor.u32 %v1036, %v1037
        %v1040 = vsel %vm786, %v1032, %v1039
        %v1041 = vrot.slane %v1036, 4
        %v1043 = vshrl.u32 %v783, 16
        %v1045 = vrot.slane %v1043, 7
        %v1046 = vshll.u32 %v783, 16
        %v1048 = vor.u32 %v1045, %v1046
        %v1049 = vrot.slane %v1045, 4
        %v1051 = vshrl.u32 %v784, 16
        %v1053 = vrot.slane %v1051, 7
        %v1054 = vshll.u32 %v784, 16
        %v1056 = vor.u32 %v1053, %v1054
        %v1057 = vsel %vm786, %v1049, %v1056
        %v1058 = vrot.slane %v1053, 4
        %vm1107 = vcmask 1043456
        %vm1108 = vmand %vm1107, %vm703
        %v1109 = vld [vmem:[%s651] sm:$0xf]
        %v1110 = vsel %vm1108, %v793, %v1109
        %1111 = vst [vmem:[%s651] sm:$0xf] %v1110
        %1112 = vst [vmem:[%s651 + $0x4] sm:$0xf] %v802
        %v1113 = vld [vmem:[%s651 + $0x8] sm:$0x1]
        %v1114 = vsel %vm654, %v803, %v1113
        %1115 = vst [vmem:[%s651 + $0x8] sm:$0x1] %v1114
        %v1116 = vld [vmem:[%s651 + $0x10] sm:$0xf]
        %v1117 = vsel %vm1108, %v810, %v1116
        %1118 = vst [vmem:[%s651 + $0x10] sm:$0xf] %v1117
        %1119 = vst [vmem:[%s651 + $0x14] sm:$0xf] %v819
        %v1120 = vld [vmem:[%s651 + $0x18] sm:$0x1]
        %v1121 = vsel %vm654, %v820, %v1120
        %1122 = vst [vmem:[%s651 + $0x18] sm:$0x1] %v1121
        %v1123 = vld [vmem:[%s651 + $0x20] sm:$0xf]
        %v1124 = vsel %vm1108, %v827, %v1123
        %1125 = vst [vmem:[%s651 + $0x20] sm:$0xf] %v1124
        %1126 = vst [vmem:[%s651 + $0x24] sm:$0xf] %v836
        %v1127 = vld [vmem:[%s651 + $0x28] sm:$0x1]
        %v1128 = vsel %vm654, %v837, %v1127
        %1129 = vst [vmem:[%s651 + $0x28] sm:$0x1] %v1128
        %v1130 = vld [vmem:[%s651 + $0x30] sm:$0xf]
        %v1131 = vsel %vm1108, %v844, %v1130
        %1132 = vst [vmem:[%s651 + $0x30] sm:$0xf] %v1131
        %1133 = vst [vmem:[%s651 + $0x34] sm:$0xf] %v853
        %v1134 = vld [vmem:[%s651 + $0x38] sm:$0x1]
        %v1135 = vsel %vm654, %v854, %v1134
        %1136 = vst [vmem:[%s651 + $0x38] sm:$0x1] %v1135
        %v1137 = vld [vmem:[%s651 + $0x40] sm:$0xf]
        %v1138 = vsel %vm1108, %v861, %v1137
        %1139 = vst [vmem:[%s651 + $0x40] sm:$0xf] %v1138
        %1140 = vst [vmem:[%s651 + $0x44] sm:$0xf] %v870
        %v1141 = vld [vmem:[%s651 + $0x48] sm:$0x1]
        %v1142 = vsel %vm654, %v871, %v1141
        %1143 = vst [vmem:[%s651 + $0x48] sm:$0x1] %v1142
        %v1144 = vld [vmem:[%s651 + $0x50] sm:$0xf]
        %v1145 = vsel %vm1108, %v878, %v1144
        %1146 = vst [vmem:[%s651 + $0x50] sm:$0xf] %v1145
        %1147 = vst [vmem:[%s651 + $0x54] sm:$0xf] %v887
        %v1148 = vld [vmem:[%s651 + $0x58] sm:$0x1]
        %v1149 = vsel %vm654, %v888, %v1148
        %1150 = vst [vmem:[%s651 + $0x58] sm:$0x1] %v1149
        %v1151 = vld [vmem:[%s651 + $0x60] sm:$0xf]
        %v1152 = vsel %vm1108, %v895, %v1151
        %1153 = vst [vmem:[%s651 + $0x60] sm:$0xf] %v1152
        %1154 = vst [vmem:[%s651 + $0x64] sm:$0xf] %v904
        %v1155 = vld [vmem:[%s651 + $0x68] sm:$0x1]
        %v1156 = vsel %vm654, %v905, %v1155
        %1157 = vst [vmem:[%s651 + $0x68] sm:$0x1] %v1156
        %v1158 = vld [vmem:[%s651 + $0x70] sm:$0xf]
        %v1159 = vsel %vm1108, %v912, %v1158
        %1160 = vst [vmem:[%s651 + $0x70] sm:$0xf] %v1159
        %1161 = vst [vmem:[%s651 + $0x74] sm:$0xf] %v921
        %v1162 = vld [vmem:[%s651 + $0x78] sm:$0x1]
        %v1163 = vsel %vm654, %v922, %v1162
        %1164 = vst [vmem:[%s651 + $0x78] sm:$0x1] %v1163
        %v1165 = vld [vmem:[%s651 + $0x80] sm:$0xf]
        %v1166 = vsel %vm1108, %v929, %v1165
        %1167 = vst [vmem:[%s651 + $0x80] sm:$0xf] %v1166
        %1168 = vst [vmem:[%s651 + $0x84] sm:$0xf] %v938
        %v1169 = vld [vmem:[%s651 + $0x88] sm:$0x1]
        %v1170 = vsel %vm654, %v939, %v1169
        %1171 = vst [vmem:[%s651 + $0x88] sm:$0x1] %v1170
        %v1172 = vld [vmem:[%s651 + $0x90] sm:$0xf]
        %v1173 = vsel %vm1108, %v946, %v1172
        %1174 = vst [vmem:[%s651 + $0x90] sm:$0xf] %v1173
        %1175 = vst [vmem:[%s651 + $0x94] sm:$0xf] %v955
        %v1176 = vld [vmem:[%s651 + $0x98] sm:$0x1]
        %v1177 = vsel %vm654, %v956, %v1176
        %1178 = vst [vmem:[%s651 + $0x98] sm:$0x1] %v1177
        %v1179 = vld [vmem:[%s651 + $0xa0] sm:$0xf]
        %v1180 = vsel %vm1108, %v963, %v1179
        %1181 = vst [vmem:[%s651 + $0xa0] sm:$0xf] %v1180
        %1182 = vst [vmem:[%s651 + $0xa4] sm:$0xf] %v972
        %v1183 = vld [vmem:[%s651 + $0xa8] sm:$0x1]
        %v1184 = vsel %vm654, %v973, %v1183
        %1185 = vst [vmem:[%s651 + $0xa8] sm:$0x1] %v1184
        %v1186 = vld [vmem:[%s651 + $0xb0] sm:$0xf]
        %v1187 = vsel %vm1108, %v980, %v1186
        %1188 = vst [vmem:[%s651 + $0xb0] sm:$0xf] %v1187
        %1189 = vst [vmem:[%s651 + $0xb4] sm:$0xf] %v989
        %v1190 = vld [vmem:[%s651 + $0xb8] sm:$0x1]
        %v1191 = vsel %vm654, %v990, %v1190
        %1192 = vst [vmem:[%s651 + $0xb8] sm:$0x1] %v1191
        %v1193 = vld [vmem:[%s651 + $0xc0] sm:$0xf]
        %v1194 = vsel %vm1108, %v997, %v1193
        %1195 = vst [vmem:[%s651 + $0xc0] sm:$0xf] %v1194
        %1196 = vst [vmem:[%s651 + $0xc4] sm:$0xf] %v1006
        %v1197 = vld [vmem:[%s651 + $0xc8] sm:$0x1]
        %v1198 = vsel %vm654, %v1007, %v1197
        %1199 = vst [vmem:[%s651 + $0xc8] sm:$0x1] %v1198
        %v1200 = vld [vmem:[%s651 + $0xd0] sm:$0xf]
        %v1201 = vsel %vm1108, %v1014, %v1200
        %1202 = vst [vmem:[%s651 + $0xd0] sm:$0xf] %v1201
        %1203 = vst [vmem:[%s651 + $0xd4] sm:$0xf] %v1023
        %v1204 = vld [vmem:[%s651 + $0xd8] sm:$0x1]
        %v1205 = vsel %vm654, %v1024, %v1204
        %1206 = vst [vmem:[%s651 + $0xd8] sm:$0x1] %v1205
        %v1207 = vld [vmem:[%s651 + $0xe0] sm:$0xf]
        %v1208 = vsel %vm1108, %v1031, %v1207
        %1209 = vst [vmem:[%s651 + $0xe0] sm:$0xf] %v1208
        %1210 = vst [vmem:[%s651 + $0xe4] sm:$0xf] %v1040
        %v1211 = vld [vmem:[%s651 + $0xe8] sm:$0x1]
        %v1212 = vsel %vm654, %v1041, %v1211
        %1213 = vst [vmem:[%s651 + $0xe8] sm:$0x1] %v1212
        %v1214 = vld [vmem:[%s651 + $0xf0] sm:$0xf]
        %v1215 = vsel %vm1108, %v1048, %v1214
        %1216 = vst [vmem:[%s651 + $0xf0] sm:$0xf] %v1215
        %1217 = vst [vmem:[%s651 + $0xf4] sm:$0xf] %v1057
        %v1218 = vld [vmem:[%s651 + $0xf8] sm:$0x1]
        %v1219 = vsel %vm654, %v1058, %v1218
        %1220 = vst [vmem:[%s651 + $0xf8] sm:$0x1] %v1219
        %v1221 = vld [vmem:[#allocation2] sm:$0xf]
        %v1222 = vld [vmem:[#allocation2 + $0x4] sm:$0xf]
        %v1223 = vld [vmem:[#allocation2 + $0x10] sm:$0xf]
        %v1224 = vld [vmem:[#allocation2 + $0x14] sm:$0xf]
        %v1225 = vld [vmem:[#allocation2 + $0x20] sm:$0xf]
        %v1226 = vld [vmem:[#allocation2 + $0x24] sm:$0xf]
        %v1227 = vld [vmem:[#allocation2 + $0x30] sm:$0xf]
        %v1228 = vld [vmem:[#allocation2 + $0x34] sm:$0xf]
        %v1229 = vld [vmem:[#allocation2 + $0x40] sm:$0xf]
        %v1230 = vld [vmem:[#allocation2 + $0x44] sm:$0xf]
        %v1231 = vld [vmem:[#allocation2 + $0x50] sm:$0xf]
        %v1232 = vld [vmem:[#allocation2 + $0x54] sm:$0xf]
        %v1233 = vld [vmem:[#allocation2 + $0x60] sm:$0xf]
        %v1234 = vld [vmem:[#allocation2 + $0x64] sm:$0xf]
        %v1235 = vld [vmem:[#allocation2 + $0x70] sm:$0xf]
        %v1236 = vld [vmem:[#allocation2 + $0x74] sm:$0xf]
        %v1237 = vld [vmem:[#allocation2 + $0x80] sm:$0xf]
        %v1238 = vld [vmem:[#allocation2 + $0x84] sm:$0xf]
        %v1239 = vld [vmem:[#allocation2 + $0x90] sm:$0xf]
        %v1240 = vld [vmem:[#allocation2 + $0x94] sm:$0xf]
        %v1241 = vld [vmem:[#allocation2 + $0xa0] sm:$0xf]
        %v1242 = vld [vmem:[#allocation2 + $0xa4] sm:$0xf]
        %v1243 = vld [vmem:[#allocation2 + $0xb0] sm:$0xf]
        %v1244 = vld [vmem:[#allocation2 + $0xb4] sm:$0xf]
        %v1245 = vld [vmem:[#allocation2 + $0xc0] sm:$0xf]
        %v1246 = vld [vmem:[#allocation2 + $0xc4] sm:$0xf]
        %v1247 = vld [vmem:[#allocation2 + $0xd0] sm:$0xf]
        %v1248 = vld [vmem:[#allocation2 + $0xd4] sm:$0xf]
        %v1249 = vld [vmem:[#allocation2 + $0xe0] sm:$0xf]
        %v1250 = vld [vmem:[#allocation2 + $0xe4] sm:$0xf]
        %v1251 = vld [vmem:[#allocation2 + $0xf0] sm:$0xf]
        %v1252 = vld [vmem:[#allocation2 + $0xf4] sm:$0xf]
        %1253 = vst [vmem:[#allocation3] sm:$0xf] %v1221
        %1254 = vst [vmem:[#allocation3 + $0x24] sm:$0xf] %v1222
        %1255 = vst [vmem:[#allocation3 + $0x48] sm:$0xf] %v1223
        %1256 = vst [vmem:[#allocation3 + $0x6c] sm:$0xf] %v1224
        %1257 = vst [vmem:[#allocation3 + $0x90] sm:$0xf] %v1225
        %1258 = vst [vmem:[#allocation3 + $0xb4] sm:$0xf] %v1226
        %1259 = vst [vmem:[#allocation3 + $0xd8] sm:$0xf] %v1227
        %1260 = vst [vmem:[#allocation3 + $0xfc] sm:$0xf] %v1228
        %1261 = vst [vmem:[#allocation3 + $0x120] sm:$0xf] %v1229
        %1262 = vst [vmem:[#allocation3 + $0x144] sm:$0xf] %v1230
        %1263 = vst [vmem:[#allocation3 + $0x168] sm:$0xf] %v1231
        %1264 = vst [vmem:[#allocation3 + $0x18c] sm:$0xf] %v1232
        %1265 = vst [vmem:[#allocation3 + $0x1b0] sm:$0xf] %v1233
        %1266 = vst [vmem:[#allocation3 + $0x1d4] sm:$0xf] %v1234
        %1267 = vst [vmem:[#allocation3 + $0x1f8] sm:$0xf] %v1235
        %1268 = vst [vmem:[#allocation3 + $0x21c] sm:$0xf] %v1236
        %1269 = vst [vmem:[#allocation3 + $0x240] sm:$0xf] %v1237
        %1270 = vst [vmem:[#allocation3 + $0x264] sm:$0xf] %v1238
        %1271 = vst [vmem:[#allocation3 + $0x288] sm:$0xf] %v1239
        %1272 = vst [vmem:[#allocation3 + $0x2ac] sm:$0xf] %v1240
        %1273 = vst [vmem:[#allocation3 + $0x2d0] sm:$0xf] %v1241
        %1274 = vst [vmem:[#allocation3 + $0x2f4] sm:$0xf] %v1242
        %1275 = vst [vmem:[#allocation3 + $0x318] sm:$0xf] %v1243
        %1276 = vst [vmem:[#allocation3 + $0x33c] sm:$0xf] %v1244
        %1277 = vst [vmem:[#allocation3 + $0x360] sm:$0xf] %v1245
        %1278 = vst [vmem:[#allocation3 + $0x384] sm:$0xf] %v1246
        %1279 = vst [vmem:[#allocation3 + $0x3a8] sm:$0xf] %v1247
        %1280 = vst [vmem:[#allocation3 + $0x3cc] sm:$0xf] %v1248
        %1281 = vst [vmem:[#allocation3 + $0x3f0] sm:$0xf] %v1249
        %1282 = vst [vmem:[#allocation3 + $0x414] sm:$0xf] %v1250
        %1283 = vst [vmem:[#allocation3 + $0x438] sm:$0xf] %v1251
        %1284 = vst [vmem:[#allocation3 + $0x45c] sm:$0xf] %v1252
        %v1285 = vld [vmem:[#allocation2] sm:$0xf]
        %v1286 = vld [vmem:[#allocation2 + $0x4] sm:$0xf]
        %v1287 = vld [vmem:[#allocation2 + $0x8] sm:$0x1]
        %v1288 = vld [vmem:[#allocation2 + $0x10] sm:$0xf]
        %v1289 = vld [vmem:[#allocation2 + $0x14] sm:$0xf]
        %v1290 = vld [vmem:[#allocation2 + $0x18] sm:$0x1]
        %v1291 = vld [vmem:[#allocation2 + $0x20] sm:$0xf]
        %v1292 = vld [vmem:[#allocation2 + $0x24] sm:$0xf]
        %v1293 = vld [vmem:[#allocation2 + $0x28] sm:$0x1]
        %v1294 = vld [vmem:[#allocation2 + $0x30] sm:$0xf]
        %v1295 = vld [vmem:[#allocation2 + $0x34] sm:$0xf]
        %v1296 = vld [vmem:[#allocation2 + $0x38] sm:$0x1]
        %v1297 = vld [vmem:[#allocation2 + $0x40] sm:$0xf]
        %v1298 = vld [vmem:[#allocation2 + $0x44] sm:$0xf]
        %v1299 = vld [vmem:[#allocation2 + $0x48] sm:$0x1]
        %v1300 = vld [vmem:[#allocation2 + $0x50] sm:$0xf]
        %v1301 = vld [vmem:[#allocation2 + $0x54] sm:$0xf]
        %v1302 = vld [vmem:[#allocation2 + $0x58] sm:$0x1]
        %v1303 = vld [vmem:[#allocation2 + $0x60] sm:$0xf]
        %v1304 = vld [vmem:[#allocation2 + $0x64] sm:$0xf]
        %v1305 = vld [vmem:[#allocation2 + $0x68] sm:$0x1]
        %v1306 = vld [vmem:[#allocation2 + $0x70] sm:$0xf]
        %v1307 = vld [vmem:[#allocation2 + $0x74] sm:$0xf]
        %v1308 = vld [vmem:[#allocation2 + $0x78] sm:$0x1]
        %v1309 = vld [vmem:[#allocation2 + $0x80] sm:$0xf]
        %v1310 = vld [vmem:[#allocation2 + $0x84] sm:$0xf]
        %v1311 = vld [vmem:[#allocation2 + $0x88] sm:$0x1]
        %v1312 = vld [vmem:[#allocation2 + $0x90] sm:$0xf]
        %v1313 = vld [vmem:[#allocation2 + $0x94] sm:$0xf]
        %v1314 = vld [vmem:[#allocation2 + $0x98] sm:$0x1]
        %v1315 = vld [vmem:[#allocation2 + $0xa0] sm:$0xf]
        %v1316 = vld [vmem:[#allocation2 + $0xa4] sm:$0xf]
        %v1317 = vld [vmem:[#allocation2 + $0xa8] sm:$0x1]
        %v1318 = vld [vmem:[#allocation2 + $0xb0] sm:$0xf]
        %v1319 = vld [vmem:[#allocation2 + $0xb4] sm:$0xf]
        %v1320 = vld [vmem:[#allocation2 + $0xb8] sm:$0x1]
        %v1321 = vld [vmem:[#allocation2 + $0xc0] sm:$0xf]
        %v1322 = vld [vmem:[#allocation2 + $0xc4] sm:$0xf]
        %v1323 = vld [vmem:[#allocation2 + $0xc8] sm:$0x1]
        %v1324 = vld [vmem:[#allocation2 + $0xd0] sm:$0xf]
        %v1325 = vld [vmem:[#allocation2 + $0xd4] sm:$0xf]
        %v1326 = vld [vmem:[#allocation2 + $0xd8] sm:$0x1]
        %v1327 = vld [vmem:[#allocation2 + $0xe0] sm:$0xf]
        %v1328 = vld [vmem:[#allocation2 + $0xe4] sm:$0xf]
        %v1329 = vld [vmem:[#allocation2 + $0xe8] sm:$0x1]
        %v1330 = vld [vmem:[#allocation2 + $0xf0] sm:$0xf]
        %v1331 = vld [vmem:[#allocation2 + $0xf4] sm:$0xf]
        %v1332 = vld [vmem:[#allocation2 + $0xf8] sm:$0x1]
        %vm1333 = vsmask.f32 3328
        %vm1334 = vsmask.f32 7440
        %vm1335 = vmor %vm1333, %vm1334
        %v1337 = vshrl.u32 %v1285, 16
        %v1339 = vrot.slane %v1337, 4
        %v1340 = vshll.u32 %v1285, 16
        %v1342 = vrot.slane %v1340, 5
        %v1343 = vor.u32 %v1339, %v1342
        %v1344 = vrot.slane %v1343, 4
        %v1346 = vshll.u32 %v1286, 16
        %v1348 = vrot.slane %v1346, 5
        %v1349 = vsel %vm1335, %v1344, %v1348
        %v1350 = vshrl.u32 %v1286, 16
        %v1352 = vrot.slane %v1350, 4
        %v1353 = vor.u32 %v1352, %v1348
        %v1354 = vrot.slane %v1353, 4
        %v1356 = vshll.u32 %v1287, 16
        %v1358 = vrot.slane %v1356, 5
        %v1359 = vsel %vm1335, %v1354, %v1358
        %v1361 = vshrl.u32 %v1288, 16
        %v1363 = vrot.slane %v1361, 4
        %v1364 = vshll.u32 %v1288, 16
        %v1366 = vrot.slane %v1364, 5
        %v1367 = vor.u32 %v1363, %v1366
        %v1368 = vrot.slane %v1367, 4
        %v1370 = vshll.u32 %v1289, 16
        %v1372 = vrot.slane %v1370, 5
        %v1373 = vsel %vm1335, %v1368, %v1372
        %v1374 = vshrl.u32 %v1289, 16
        %v1376 = vrot.slane %v1374, 4
        %v1377 = vor.u32 %v1376, %v1372
        %v1378 = vrot.slane %v1377, 4
        %v1380 = vshll.u32 %v1290, 16
        %v1382 = vrot.slane %v1380, 5
        %v1383 = vsel %vm1335, %v1378, %v1382
        %v1385 = vshrl.u32 %v1291, 16
        %v1387 = vrot.slane %v1385, 4
        %v1388 = vshll.u32 %v1291, 16
        %v1390 = vrot.slane %v1388, 5
        %v1391 = vor.u32 %v1387, %v1390
        %v1392 = vrot.slane %v1391, 4
        %v1394 = vshll.u32 %v1292, 16
        %v1396 = vrot.slane %v1394, 5
        %v1397 = vsel %vm1335, %v1392, %v1396
        %v1398 = vshrl.u32 %v1292, 16
        %v1400 = vrot.slane %v1398, 4
        %v1401 = vor.u32 %v1400, %v1396
        %v1402 = vrot.slane %v1401, 4
        %v1404 = vshll.u32 %v1293, 16
        %v1406 = vrot.slane %v1404, 5
        %v1407 = vsel %vm1335, %v1402, %v1406
        %v1409 = vshrl.u32 %v1294, 16
        %v1411 = vrot.slane %v1409, 4
        %v1412 = vshll.u32 %v1294, 16
        %v1414 = vrot.slane %v1412, 5
        %v1415 = vor.u32 %v1411, %v1414
        %v1416 = vrot.slane %v1415, 4
        %v1418 = vshll.u32 %v1295, 16
        %v1420 = vrot.slane %v1418, 5
        %v1421 = vsel %vm1335, %v1416, %v1420
        %v1422 = vshrl.u32 %v1295, 16
        %v1424 = vrot.slane %v1422, 4
        %v1425 = vor.u32 %v1424, %v1420
        %v1426 = vrot.slane %v1425, 4
        %v1428 = vshll.u32 %v1296, 16
        %v1430 = vrot.slane %v1428, 5
        %v1431 = vsel %vm1335, %v1426, %v1430
        %v1433 = vshrl.u32 %v1297, 16
        %v1435 = vrot.slane %v1433, 4
        %v1436 = vshll.u32 %v1297, 16
        %v1438 = vrot.slane %v1436, 5
        %v1439 = vor.u32 %v1435, %v1438
        %v1440 = vrot.slane %v1439, 4
        %v1442 = vshll.u32 %v1298, 16
        %v1444 = vrot.slane %v1442, 5
        %v1445 = vsel %vm1335, %v1440, %v1444
        %v1446 = vshrl.u32 %v1298, 16
        %v1448 = vrot.slane %v1446, 4
        %v1449 = vor.u32 %v1448, %v1444
        %v1450 = vrot.slane %v1449, 4
        %v1452 = vshll.u32 %v1299, 16
        %v1454 = vrot.slane %v1452, 5
        %v1455 = vsel %vm1335, %v1450, %v1454
        %v1457 = vshrl.u32 %v1300, 16
        %v1459 = vrot.slane %v1457, 4
        %v1460 = vshll.u32 %v1300, 16
        %v1462 = vrot.slane %v1460, 5
        %v1463 = vor.u32 %v1459, %v1462
        %v1464 = vrot.slane %v1463, 4
        %v1466 = vshll.u32 %v1301, 16
        %v1468 = vrot.slane %v1466, 5
        %v1469 = vsel %vm1335, %v1464, %v1468
        %v1470 = vshrl.u32 %v1301, 16
        %v1472 = vrot.slane %v1470, 4
        %v1473 = vor.u32 %v1472, %v1468
        %v1474 = vrot.slane %v1473, 4
        %v1476 = vshll.u32 %v1302, 16
        %v1478 = vrot.slane %v1476, 5
        %v1479 = vsel %vm1335, %v1474, %v1478
        %v1481 = vshrl.u32 %v1303, 16
        %v1483 = vrot.slane %v1481, 4
        %v1484 = vshll.u32 %v1303, 16
        %v1486 = vrot.slane %v1484, 5
        %v1487 = vor.u32 %v1483, %v1486
        %v1488 = vrot.slane %v1487, 4
        %v1490 = vshll.u32 %v1304, 16
        %v1492 = vrot.slane %v1490, 5
        %v1493 = vsel %vm1335, %v1488, %v1492
        %v1494 = vshrl.u32 %v1304, 16
        %v1496 = vrot.slane %v1494, 4
        %v1497 = vor.u32 %v1496, %v1492
        %v1498 = vrot.slane %v1497, 4
        %v1500 = vshll.u32 %v1305, 16
        %v1502 = vrot.slane %v1500, 5
        %v1503 = vsel %vm1335, %v1498, %v1502
        %v1505 = vshrl.u32 %v1306, 16
        %v1507 = vrot.slane %v1505, 4
        %v1508 = vshll.u32 %v1306, 16
        %v1510 = vrot.slane %v1508, 5
        %v1511 = vor.u32 %v1507, %v1510
        %v1512 = vrot.slane %v1511, 4
        %v1514 = vshll.u32 %v1307, 16
        %v1516 = vrot.slane %v1514, 5
        %v1517 = vsel %vm1335, %v1512, %v1516
        %v1518 = vshrl.u32 %v1307, 16
        %v1520 = vrot.slane %v1518, 4
        %v1521 = vor.u32 %v1520, %v1516
        %v1522 = vrot.slane %v1521, 4
        %v1524 = vshll.u32 %v1308, 16
        %v1526 = vrot.slane %v1524, 5
        %v1527 = vsel %vm1335, %v1522, %v1526
        %v1529 = vshrl.u32 %v1309, 16
        %v1531 = vrot.slane %v1529, 4
        %v1532 = vshll.u32 %v1309, 16
        %v1534 = vrot.slane %v1532, 5
        %v1535 = vor.u32 %v1531, %v1534
        %v1536 = vrot.slane %v1535, 4
        %v1538 = vshll.u32 %v1310, 16
        %v1540 = vrot.slane %v1538, 5
        %v1541 = vsel %vm1335, %v1536, %v1540
        %v1542 = vshrl.u32 %v1310, 16
        %v1544 = vrot.slane %v1542, 4
        %v1545 = vor.u32 %v1544, %v1540
        %v1546 = vrot.slane %v1545, 4
        %v1548 = vshll.u32 %v1311, 16
        %v1550 = vrot.slane %v1548, 5
        %v1551 = vsel %vm1335, %v1546, %v1550
        %v1553 = vshrl.u32 %v1312, 16
        %v1555 = vrot.slane %v1553, 4
        %v1556 = vshll.u32 %v1312, 16
        %v1558 = vrot.slane %v1556, 5
        %v1559 = vor.u32 %v1555, %v1558
        %v1560 = vrot.slane %v1559, 4
        %v1562 = vshll.u32 %v1313, 16
        %v1564 = vrot.slane %v1562, 5
        %v1565 = vsel %vm1335, %v1560, %v1564
        %v1566 = vshrl.u32 %v1313, 16
        %v1568 = vrot.slane %v1566, 4
        %v1569 = vor.u32 %v1568, %v1564
        %v1570 = vrot.slane %v1569, 4
        %v1572 = vshll.u32 %v1314, 16
        %v1574 = vrot.slane %v1572, 5
        %v1575 = vsel %vm1335, %v1570, %v1574
        %v1577 = vshrl.u32 %v1315, 16
        %v1579 = vrot.slane %v1577, 4
        %v1580 = vshll.u32 %v1315, 16
        %v1582 = vrot.slane %v1580, 5
        %v1583 = vor.u32 %v1579, %v1582
        %v1584 = vrot.slane %v1583, 4
        %v1586 = vshll.u32 %v1316, 16
        %v1588 = vrot.slane %v1586, 5
        %v1589 = vsel %vm1335, %v1584, %v1588
        %v1590 = vshrl.u32 %v1316, 16
        %v1592 = vrot.slane %v1590, 4
        %v1593 = vor.u32 %v1592, %v1588
        %v1594 = vrot.slane %v1593, 4
        %v1596 = vshll.u32 %v1317, 16
        %v1598 = vrot.slane %v1596, 5
        %v1599 = vsel %vm1335, %v1594, %v1598
        %v1601 = vshrl.u32 %v1318, 16
        %v1603 = vrot.slane %v1601, 4
        %v1604 = vshll.u32 %v1318, 16
        %v1606 = vrot.slane %v1604, 5
        %v1607 = vor.u32 %v1603, %v1606
        %v1608 = vrot.slane %v1607, 4
        %v1610 = vshll.u32 %v1319, 16
        %v1612 = vrot.slane %v1610, 5
        %v1613 = vsel %vm1335, %v1608, %v1612
        %v1614 = vshrl.u32 %v1319, 16
        %v1616 = vrot.slane %v1614, 4
        %v1617 = vor.u32 %v1616, %v1612
        %v1618 = vrot.slane %v1617, 4
        %v1620 = vshll.u32 %v1320, 16
        %v1622 = vrot.slane %v1620, 5
        %v1623 = vsel %vm1335, %v1618, %v1622
        %v1625 = vshrl.u32 %v1321, 16
        %v1627 = vrot.slane %v1625, 4
        %v1628 = vshll.u32 %v1321, 16
        %v1630 = vrot.slane %v1628, 5
        %v1631 = vor.u32 %v1627, %v1630
        %v1632 = vrot.slane %v1631, 4
        %v1634 = vshll.u32 %v1322, 16
        %v1636 = vrot.slane %v1634, 5
        %v1637 = vsel %vm1335, %v1632, %v1636
        %v1638 = vshrl.u32 %v1322, 16
        %v1640 = vrot.slane %v1638, 4
        %v1641 = vor.u32 %v1640, %v1636
        %v1642 = vrot.slane %v1641, 4
        %v1644 = vshll.u32 %v1323, 16
        %v1646 = vrot.slane %v1644, 5
        %v1647 = vsel %vm1335, %v1642, %v1646
        %v1649 = vshrl.u32 %v1324, 16
        %v1651 = vrot.slane %v1649, 4
        %v1652 = vshll.u32 %v1324, 16
        %v1654 = vrot.slane %v1652, 5
        %v1655 = vor.u32 %v1651, %v1654
        %v1656 = vrot.slane %v1655, 4
        %v1658 = vshll.u32 %v1325, 16
        %v1660 = vrot.slane %v1658, 5
        %v1661 = vsel %vm1335, %v1656, %v1660
        %v1662 = vshrl.u32 %v1325, 16
        %v1664 = vrot.slane %v1662, 4
        %v1665 = vor.u32 %v1664, %v1660
        %v1666 = vrot.slane %v1665, 4
        %v1668 = vshll.u32 %v1326, 16
        %v1670 = vrot.slane %v1668, 5
        %v1671 = vsel %vm1335, %v1666, %v1670
        %v1673 = vshrl.u32 %v1327, 16
        %v1675 = vrot.slane %v1673, 4
        %v1676 = vshll.u32 %v1327, 16
        %v1678 = vrot.slane %v1676, 5
        %v1679 = vor.u32 %v1675, %v1678
        %v1680 = vrot.slane %v1679, 4
        %v1682 = vshll.u32 %v1328, 16
        %v1684 = vrot.slane %v1682, 5
        %v1685 = vsel %vm1335, %v1680, %v1684
        %v1686 = vshrl.u32 %v1328, 16
        %v1688 = vrot.slane %v1686, 4
        %v1689 = vor.u32 %v1688, %v1684
        %v1690 = vrot.slane %v1689, 4
        %v1692 = vshll.u32 %v1329, 16
        %v1694 = vrot.slane %v1692, 5
        %v1695 = vsel %vm1335, %v1690, %v1694
        %v1697 = vshrl.u32 %v1330, 16
        %v1699 = vrot.slane %v1697, 4
        %v1700 = vshll.u32 %v1330, 16
        %v1702 = vrot.slane %v1700, 5
        %v1703 = vor.u32 %v1699, %v1702
        %v1704 = vrot.slane %v1703, 4
        %v1706 = vshll.u32 %v1331, 16
        %v1708 = vrot.slane %v1706, 5
        %v1709 = vsel %vm1335, %v1704, %v1708
        %v1710 = vshrl.u32 %v1331, 16
        %v1712 = vrot.slane %v1710, 4
        %v1713 = vor.u32 %v1712, %v1708
        %v1714 = vrot.slane %v1713, 4
        %v1716 = vshll.u32 %v1332, 16
        %v1718 = vrot.slane %v1716, 5
        %v1719 = vsel %vm1335, %v1714, %v1718
        %1752 = vst [vmem:[#allocation3 + $0x4] sm:$0xf] %v1349
        %1753 = vst [vmem:[#allocation3 + $0x28] sm:$0xf] %v1359
        %1754 = vst [vmem:[#allocation3 + $0x4c] sm:$0xf] %v1373
        %1755 = vst [vmem:[#allocation3 + $0x70] sm:$0xf] %v1383
        %1756 = vst [vmem:[#allocation3 + $0x94] sm:$0xf] %v1397
        %1757 = vst [vmem:[#allocation3 + $0xb8] sm:$0xf] %v1407
        %1758 = vst [vmem:[#allocation3 + $0xdc] sm:$0xf] %v1421
        %1759 = vst [vmem:[#allocation3 + $0x100] sm:$0xf] %v1431
        %1760 = vst [vmem:[#allocation3 + $0x124] sm:$0xf] %v1445
        %1761 = vst [vmem:[#allocation3 + $0x148] sm:$0xf] %v1455
        %1762 = vst [vmem:[#allocation3 + $0x16c] sm:$0xf] %v1469
        %1763 = vst [vmem:[#allocation3 + $0x190] sm:$0xf] %v1479
        %1764 = vst [vmem:[#allocation3 + $0x1b4] sm:$0xf] %v1493
        %1765 = vst [vmem:[#allocation3 + $0x1d8] sm:$0xf] %v1503
        %1766 = vst [vmem:[#allocation3 + $0x1fc] sm:$0xf] %v1517
        %1767 = vst [vmem:[#allocation3 + $0x220] sm:$0xf] %v1527
        %1768 = vst [vmem:[#allocation3 + $0x244] sm:$0xf] %v1541
        %1769 = vst [vmem:[#allocation3 + $0x268] sm:$0xf] %v1551
        %1770 = vst [vmem:[#allocation3 + $0x28c] sm:$0xf] %v1565
        %1771 = vst [vmem:[#allocation3 + $0x2b0] sm:$0xf] %v1575
        %1772 = vst [vmem:[#allocation3 + $0x2d4] sm:$0xf] %v1589
        %1773 = vst [vmem:[#allocation3 + $0x2f8] sm:$0xf] %v1599
        %1774 = vst [vmem:[#allocation3 + $0x31c] sm:$0xf] %v1613
        %1775 = vst [vmem:[#allocation3 + $0x340] sm:$0xf] %v1623
        %1776 = vst [vmem:[#allocation3 + $0x364] sm:$0xf] %v1637
        %1777 = vst [vmem:[#allocation3 + $0x388] sm:$0xf] %v1647
        %1778 = vst [vmem:[#allocation3 + $0x3ac] sm:$0xf] %v1661
        %1779 = vst [vmem:[#allocation3 + $0x3d0] sm:$0xf] %v1671
        %1780 = vst [vmem:[#allocation3 + $0x3f4] sm:$0xf] %v1685
        %1781 = vst [vmem:[#allocation3 + $0x418] sm:$0xf] %v1695
        %1782 = vst [vmem:[#allocation3 + $0x43c] sm:$0xf] %v1709
        %1783 = vst [vmem:[#allocation3 + $0x460] sm:$0xf] %v1719
        %v1784 = vld [vmem:[#allocation2] sm:$0xe]
        %v1785 = vld [vmem:[#allocation2 + $0x4] sm:$0xf]
        %v1786 = vld [vmem:[#allocation2 + $0x8] sm:$0x1]
        %v1787 = vld [vmem:[#allocation2 + $0x10] sm:$0xe]
        %v1788 = vld [vmem:[#allocation2 + $0x14] sm:$0xf]
        %v1789 = vld [vmem:[#allocation2 + $0x18] sm:$0x1]
        %v1790 = vld [vmem:[#allocation2 + $0x20] sm:$0xe]
        %v1791 = vld [vmem:[#allocation2 + $0x24] sm:$0xf]
        %v1792 = vld [vmem:[#allocation2 + $0x28] sm:$0x1]
        %v1793 = vld [vmem:[#allocation2 + $0x30] sm:$0xe]
        %v1794 = vld [vmem:[#allocation2 + $0x34] sm:$0xf]
        %v1795 = vld [vmem:[#allocation2 + $0x38] sm:$0x1]
        %v1796 = vld [vmem:[#allocation2 + $0x40] sm:$0xe]
        %v1797 = vld [vmem:[#allocation2 + $0x44] sm:$0xf]
        %v1798 = vld [vmem:[#allocation2 + $0x48] sm:$0x1]
        %v1799 = vld [vmem:[#allocation2 + $0x50] sm:$0xe]
        %v1800 = vld [vmem:[#allocation2 + $0x54] sm:$0xf]
        %v1801 = vld [vmem:[#allocation2 + $0x58] sm:$0x1]
        %v1802 = vld [vmem:[#allocation2 + $0x60] sm:$0xe]
        %v1803 = vld [vmem:[#allocation2 + $0x64] sm:$0xf]
        %v1804 = vld [vmem:[#allocation2 + $0x68] sm:$0x1]
        %v1805 = vld [vmem:[#allocation2 + $0x70] sm:$0xe]
        %v1806 = vld [vmem:[#allocation2 + $0x74] sm:$0xf]
        %v1807 = vld [vmem:[#allocation2 + $0x78] sm:$0x1]
        %v1808 = vld [vmem:[#allocation2 + $0x80] sm:$0xe]
        %v1809 = vld [vmem:[#allocation2 + $0x84] sm:$0xf]
        %v1810 = vld [vmem:[#allocation2 + $0x88] sm:$0x1]
        %v1811 = vld [vmem:[#allocation2 + $0x90] sm:$0xe]
        %v1812 = vld [vmem:[#allocation2 + $0x94] sm:$0xf]
        %v1813 = vld [vmem:[#allocation2 + $0x98] sm:$0x1]
        %v1814 = vld [vmem:[#allocation2 + $0xa0] sm:$0xe]
        %v1815 = vld [vmem:[#allocation2 + $0xa4] sm:$0xf]
        %v1816 = vld [vmem:[#allocation2 + $0xa8] sm:$0x1]
        %v1817 = vld [vmem:[#allocation2 + $0xb0] sm:$0xe]
        %v1818 = vld [vmem:[#allocation2 + $0xb4] sm:$0xf]
        %v1819 = vld [vmem:[#allocation2 + $0xb8] sm:$0x1]
        %v1820 = vld [vmem:[#allocation2 + $0xc0] sm:$0xe]
        %v1821 = vld [vmem:[#allocation2 + $0xc4] sm:$0xf]
        %v1822 = vld [vmem:[#allocation2 + $0xc8] sm:$0x1]
        %v1823 = vld [vmem:[#allocation2 + $0xd0] sm:$0xe]
        %v1824 = vld [vmem:[#allocation2 + $0xd4] sm:$0xf]
        %v1825 = vld [vmem:[#allocation2 + $0xd8] sm:$0x1]
        %v1826 = vld [vmem:[#allocation2 + $0xe0] sm:$0xe]
        %v1827 = vld [vmem:[#allocation2 + $0xe4] sm:$0xf]
        %v1828 = vld [vmem:[#allocation2 + $0xe8] sm:$0x1]
        %v1829 = vld [vmem:[#allocation2 + $0xf0] sm:$0xe]
        %v1830 = vld [vmem:[#allocation2 + $0xf4] sm:$0xf]
        %v1831 = vld [vmem:[#allocation2 + $0xf8] sm:$0x1]
        %vm1880 = vcmask 1042432
        %vm1881 = vcmask 1046532
        %vm1882 = vmor %vm1880, %vm1881
        %v1883 = vrot.slane %v1784, 5
        %v1884 = vrot.slane %v1883, 4
        %v1885 = vrot.slane %v1785, 5
        %v1886 = vsel %vm1882, %v1884, %v1885
        %v1887 = vrot.slane %v1885, 4
        %v1888 = vrot.slane %v1786, 5
        %v1889 = vsel %vm1882, %v1887, %v1888
        %v1890 = vrot.slane %v1787, 5
        %v1891 = vrot.slane %v1890, 4
        %v1892 = vrot.slane %v1788, 5
        %v1893 = vsel %vm1882, %v1891, %v1892
        %v1894 = vrot.slane %v1892, 4
        %v1895 = vrot.slane %v1789, 5
        %v1896 = vsel %vm1882, %v1894, %v1895
        %v1897 = vrot.slane %v1790, 5
        %v1898 = vrot.slane %v1897, 4
        %v1899 = vrot.slane %v1791, 5
        %v1900 = vsel %vm1882, %v1898, %v1899
        %v1901 = vrot.slane %v1899, 4
        %v1902 = vrot.slane %v1792, 5
        %v1903 = vsel %vm1882, %v1901, %v1902
        %v1904 = vrot.slane %v1793, 5
        %v1905 = vrot.slane %v1904, 4
        %v1906 = vrot.slane %v1794, 5
        %v1907 = vsel %vm1882, %v1905, %v1906
        %v1908 = vrot.slane %v1906, 4
        %v1909 = vrot.slane %v1795, 5
        %v1910 = vsel %vm1882, %v1908, %v1909
        %v1911 = vrot.slane %v1796, 5
        %v1912 = vrot.slane %v1911, 4
        %v1913 = vrot.slane %v1797, 5
        %v1914 = vsel %vm1882, %v1912, %v1913
        %v1915 = vrot.slane %v1913, 4
        %v1916 = vrot.slane %v1798, 5
        %v1917 = vsel %vm1882, %v1915, %v1916
        %v1918 = vrot.slane %v1799, 5
        %v1919 = vrot.slane %v1918, 4
        %v1920 = vrot.slane %v1800, 5
        %v1921 = vsel %vm1882, %v1919, %v1920
        %v1922 = vrot.slane %v1920, 4
        %v1923 = vrot.slane %v1801, 5
        %v1924 = vsel %vm1882, %v1922, %v1923
        %v1925 = vrot.slane %v1802, 5
        %v1926 = vrot.slane %v1925, 4
        %v1927 = vrot.slane %v1803, 5
        %v1928 = vsel %vm1882, %v1926, %v1927
        %v1929 = vrot.slane %v1927, 4
        %v1930 = vrot.slane %v1804, 5
        %v1931 = vsel %vm1882, %v1929, %v1930
        %v1932 = vrot.slane %v1805, 5
        %v1933 = vrot.slane %v1932, 4
        %v1934 = vrot.slane %v1806, 5
        %v1935 = vsel %vm1882, %v1933, %v1934
        %v1936 = vrot.slane %v1934, 4
        %v1937 = vrot.slane %v1807, 5
        %v1938 = vsel %vm1882, %v1936, %v1937
        %v1939 = vrot.slane %v1808, 5
        %v1940 = vrot.slane %v1939, 4
        %v1941 = vrot.slane %v1809, 5
        %v1942 = vsel %vm1882, %v1940, %v1941
        %v1943 = vrot.slane %v1941, 4
        %v1944 = vrot.slane %v1810, 5
        %v1945 = vsel %vm1882, %v1943, %v1944
        %v1946 = vrot.slane %v1811, 5
        %v1947 = vrot.slane %v1946, 4
        %v1948 = vrot.slane %v1812, 5
        %v1949 = vsel %vm1882, %v1947, %v1948
        %v1950 = vrot.slane %v1948, 4
        %v1951 = vrot.slane %v1813, 5
        %v1952 = vsel %vm1882, %v1950, %v1951
        %v1953 = vrot.slane %v1814, 5
        %v1954 = vrot.slane %v1953, 4
        %v1955 = vrot.slane %v1815, 5
        %v1956 = vsel %vm1882, %v1954, %v1955
        %v1957 = vrot.slane %v1955, 4
        %v1958 = vrot.slane %v1816, 5
        %v1959 = vsel %vm1882, %v1957, %v1958
        %v1960 = vrot.slane %v1817, 5
        %v1961 = vrot.slane %v1960, 4
        %v1962 = vrot.slane %v1818, 5
        %v1963 = vsel %vm1882, %v1961, %v1962
        %v1964 = vrot.slane %v1962, 4
        %v1965 = vrot.slane %v1819, 5
        %v1966 = vsel %vm1882, %v1964, %v1965
        %v1967 = vrot.slane %v1820, 5
        %v1968 = vrot.slane %v1967, 4
        %v1969 = vrot.slane %v1821, 5
        %v1970 = vsel %vm1882, %v1968, %v1969
        %v1971 = vrot.slane %v1969, 4
        %v1972 = vrot.slane %v1822, 5
        %v1973 = vsel %vm1882, %v1971, %v1972
        %v1974 = vrot.slane %v1823, 5
        %v1975 = vrot.slane %v1974, 4
        %v1976 = vrot.slane %v1824, 5
        %v1977 = vsel %vm1882, %v1975, %v1976
        %v1978 = vrot.slane %v1976, 4
        %v1979 = vrot.slane %v1825, 5
        %v1980 = vsel %vm1882, %v1978, %v1979
        %v1981 = vrot.slane %v1826, 5
        %v1982 = vrot.slane %v1981, 4
        %v1983 = vrot.slane %v1827, 5
        %v1984 = vsel %vm1882, %v1982, %v1983
        %v1985 = vrot.slane %v1983, 4
        %v1986 = vrot.slane %v1828, 5
        %v1987 = vsel %vm1882, %v1985, %v1986
        %v1988 = vrot.slane %v1829, 5
        %v1989 = vrot.slane %v1988, 4
        %v1990 = vrot.slane %v1830, 5
        %v1991 = vsel %vm1882, %v1989, %v1990
        %v1992 = vrot.slane %v1990, 4
        %v1993 = vrot.slane %v1831, 5
        %v1994 = vsel %vm1882, %v1992, %v1993
        %2027 = vst [vmem:[#allocation3 + $0x8] sm:$0xf] %v1886
        %2028 = vst [vmem:[#allocation3 + $0x2c] sm:$0xf] %v1889
        %2029 = vst [vmem:[#allocation3 + $0x50] sm:$0xf] %v1893
        %2030 = vst [vmem:[#allocation3 + $0x74] sm:$0xf] %v1896
        %2031 = vst [vmem:[#allocation3 + $0x98] sm:$0xf] %v1900
        %2032 = vst [vmem:[#allocation3 + $0xbc] sm:$0xf] %v1903
        %2033 = vst [vmem:[#allocation3 + $0xe0] sm:$0xf] %v1907
        %2034 = vst [vmem:[#allocation3 + $0x104] sm:$0xf] %v1910
        %2035 = vst [vmem:[#allocation3 + $0x128] sm:$0xf] %v1914
        %2036 = vst [vmem:[#allocation3 + $0x14c] sm:$0xf] %v1917
        %2037 = vst [vmem:[#allocation3 + $0x170] sm:$0xf] %v1921
        %2038 = vst [vmem:[#allocation3 + $0x194] sm:$0xf] %v1924
        %2039 = vst [vmem:[#allocation3 + $0x1b8] sm:$0xf] %v1928
        %2040 = vst [vmem:[#allocation3 + $0x1dc] sm:$0xf] %v1931
        %2041 = vst [vmem:[#allocation3 + $0x200] sm:$0xf] %v1935
        %2042 = vst [vmem:[#allocation3 + $0x224] sm:$0xf] %v1938
        %2043 = vst [vmem:[#allocation3 + $0x248] sm:$0xf] %v1942
        %2044 = vst [vmem:[#allocation3 + $0x26c] sm:$0xf] %v1945
        %2045 = vst [vmem:[#allocation3 + $0x290] sm:$0xf] %v1949
        %2046 = vst [vmem:[#allocation3 + $0x2b4] sm:$0xf] %v1952
        %2047 = vst [vmem:[#allocation3 + $0x2d8] sm:$0xf] %v1956
        %2048 = vst [vmem:[#allocation3 + $0x2fc] sm:$0xf] %v1959
        %2049 = vst [vmem:[#allocation3 + $0x320] sm:$0xf] %v1963
        %2050 = vst [vmem:[#allocation3 + $0x344] sm:$0xf] %v1966
        %2051 = vst [vmem:[#allocation3 + $0x368] sm:$0xf] %v1970
        %2052 = vst [vmem:[#allocation3 + $0x38c] sm:$0xf] %v1973
        %2053 = vst [vmem:[#allocation3 + $0x3b0] sm:$0xf] %v1977
        %2054 = vst [vmem:[#allocation3 + $0x3d4] sm:$0xf] %v1980
        %2055 = vst [vmem:[#allocation3 + $0x3f8] sm:$0xf] %v1984
        %2056 = vst [vmem:[#allocation3 + $0x41c] sm:$0xf] %v1987
        %2057 = vst [vmem:[#allocation3 + $0x440] sm:$0xf] %v1991
        %2058 = vst [vmem:[#allocation3 + $0x464] sm:$0xf] %v1994
        %v2059 = vld [vmem:[%s651] sm:$0xf]
        %v2060 = vld [vmem:[%s651 + $0x4] sm:$0xf]
        %v2061 = vld [vmem:[%s651 + $0x10] sm:$0xf]
        %v2062 = vld [vmem:[%s651 + $0x14] sm:$0xf]
        %v2063 = vld [vmem:[%s651 + $0x20] sm:$0xf]
        %v2064 = vld [vmem:[%s651 + $0x24] sm:$0xf]
        %v2065 = vld [vmem:[%s651 + $0x30] sm:$0xf]
        %v2066 = vld [vmem:[%s651 + $0x34] sm:$0xf]
        %v2067 = vld [vmem:[%s651 + $0x40] sm:$0xf]
        %v2068 = vld [vmem:[%s651 + $0x44] sm:$0xf]
        %v2069 = vld [vmem:[%s651 + $0x50] sm:$0xf]
        %v2070 = vld [vmem:[%s651 + $0x54] sm:$0xf]
        %v2071 = vld [vmem:[%s651 + $0x60] sm:$0xf]
        %v2072 = vld [vmem:[%s651 + $0x64] sm:$0xf]
        %v2073 = vld [vmem:[%s651 + $0x70] sm:$0xf]
        %v2074 = vld [vmem:[%s651 + $0x74] sm:$0xf]
        %v2075 = vld [vmem:[%s651 + $0x80] sm:$0xf]
        %v2076 = vld [vmem:[%s651 + $0x84] sm:$0xf]
        %v2077 = vld [vmem:[%s651 + $0x90] sm:$0xf]
        %v2078 = vld [vmem:[%s651 + $0x94] sm:$0xf]
        %v2079 = vld [vmem:[%s651 + $0xa0] sm:$0xf]
        %v2080 = vld [vmem:[%s651 + $0xa4] sm:$0xf]
        %v2081 = vld [vmem:[%s651 + $0xb0] sm:$0xf]
        %v2082 = vld [vmem:[%s651 + $0xb4] sm:$0xf]
        %v2083 = vld [vmem:[%s651 + $0xc0] sm:$0xf]
        %v2084 = vld [vmem:[%s651 + $0xc4] sm:$0xf]
        %v2085 = vld [vmem:[%s651 + $0xd0] sm:$0xf]
        %v2086 = vld [vmem:[%s651 + $0xd4] sm:$0xf]
        %v2087 = vld [vmem:[%s651 + $0xe0] sm:$0xf]
        %v2088 = vld [vmem:[%s651 + $0xe4] sm:$0xf]
        %v2089 = vld [vmem:[%s651 + $0xf0] sm:$0xf]
        %v2090 = vld [vmem:[%s651 + $0xf4] sm:$0xf]
        %2091 = vst [vmem:[#allocation3 + $0xc] sm:$0xf] %v2059
        %2092 = vst [vmem:[#allocation3 + $0x30] sm:$0xf] %v2060
        %2093 = vst [vmem:[#allocation3 + $0x54] sm:$0xf] %v2061
        %2094 = vst [vmem:[#allocation3 + $0x78] sm:$0xf] %v2062
        %2095 = vst [vmem:[#allocation3 + $0x9c] sm:$0xf] %v2063
        %2096 = vst [vmem:[#allocation3 + $0xc0] sm:$0xf] %v2064
        %2097 = vst [vmem:[#allocation3 + $0xe4] sm:$0xf] %v2065
        %2098 = vst [vmem:[#allocation3 + $0x108] sm:$0xf] %v2066
        %2099 = vst [vmem:[#allocation3 + $0x12c] sm:$0xf] %v2067
        %2100 = vst [vmem:[#allocation3 + $0x150] sm:$0xf] %v2068
        %2101 = vst [vmem:[#allocation3 + $0x174] sm:$0xf] %v2069
        %2102 = vst [vmem:[#allocation3 + $0x198] sm:$0xf] %v2070
        %2103 = vst [vmem:[#allocation3 + $0x1bc] sm:$0xf] %v2071
        %2104 = vst [vmem:[#allocation3 + $0x1e0] sm:$0xf] %v2072
        %2105 = vst [vmem:[#allocation3 + $0x204] sm:$0xf] %v2073
        %2106 = vst [vmem:[#allocation3 + $0x228] sm:$0xf] %v2074
        %2107 = vst [vmem:[#allocation3 + $0x24c] sm:$0xf] %v2075
        %2108 = vst [vmem:[#allocation3 + $0x270] sm:$0xf] %v2076
        %2109 = vst [vmem:[#allocation3 + $0x294] sm:$0xf] %v2077
        %2110 = vst [vmem:[#allocation3 + $0x2b8] sm:$0xf] %v2078
        %2111 = vst [vmem:[#allocation3 + $0x2dc] sm:$0xf] %v2079
        %2112 = vst [vmem:[#allocation3 + $0x300] sm:$0xf] %v2080
        %2113 = vst [vmem:[#allocation3 + $0x324] sm:$0xf] %v2081
        %2114 = vst [vmem:[#allocation3 + $0x348] sm:$0xf] %v2082
        %2115 = vst [vmem:[#allocation3 + $0x36c] sm:$0xf] %v2083
        %2116 = vst [vmem:[#allocation3 + $0x390] sm:$0xf] %v2084
        %2117 = vst [vmem:[#allocation3 + $0x3b4] sm:$0xf] %v2085
        %2118 = vst [vmem:[#allocation3 + $0x3d8] sm:$0xf] %v2086
        %2119 = vst [vmem:[#allocation3 + $0x3fc] sm:$0xf] %v2087
        %2120 = vst [vmem:[#allocation3 + $0x420] sm:$0xf] %v2088
        %2121 = vst [vmem:[#allocation3 + $0x444] sm:$0xf] %v2089
        %2122 = vst [vmem:[#allocation3 + $0x468] sm:$0xf] %v2090
        %v2123 = vld [vmem:[%s651] sm:$0xf]
        %v2124 = vld [vmem:[%s651 + $0x4] sm:$0xf]
        %v2125 = vld [vmem:[%s651 + $0x8] sm:$0x1]
        %v2126 = vld [vmem:[%s651 + $0x10] sm:$0xf]
        %v2127 = vld [vmem:[%s651 + $0x14] sm:$0xf]
        %v2128 = vld [vmem:[%s651 + $0x18] sm:$0x1]
        %v2129 = vld [vmem:[%s651 + $0x20] sm:$0xf]
        %v2130 = vld [vmem:[%s651 + $0x24] sm:$0xf]
        %v2131 = vld [vmem:[%s651 + $0x28] sm:$0x1]
        %v2132 = vld [vmem:[%s651 + $0x30] sm:$0xf]
        %v2133 = vld [vmem:[%s651 + $0x34] sm:$0xf]
        %v2134 = vld [vmem:[%s651 + $0x38] sm:$0x1]
        %v2135 = vld [vmem:[%s651 + $0x40] sm:$0xf]
        %v2136 = vld [vmem:[%s651 + $0x44] sm:$0xf]
        %v2137 = vld [vmem:[%s651 + $0x48] sm:$0x1]
        %v2138 = vld [vmem:[%s651 + $0x50] sm:$0xf]
        %v2139 = vld [vmem:[%s651 + $0x54] sm:$0xf]
        %v2140 = vld [vmem:[%s651 + $0x58] sm:$0x1]
        %v2141 = vld [vmem:[%s651 + $0x60] sm:$0xf]
        %v2142 = vld [vmem:[%s651 + $0x64] sm:$0xf]
        %v2143 = vld [vmem:[%s651 + $0x68] sm:$0x1]
        %v2144 = vld [vmem:[%s651 + $0x70] sm:$0xf]
        %v2145 = vld [vmem:[%s651 + $0x74] sm:$0xf]
        %v2146 = vld [vmem:[%s651 + $0x78] sm:$0x1]
        %v2147 = vld [vmem:[%s651 + $0x80] sm:$0xf]
        %v2148 = vld [vmem:[%s651 + $0x84] sm:$0xf]
        %v2149 = vld [vmem:[%s651 + $0x88] sm:$0x1]
        %v2150 = vld [vmem:[%s651 + $0x90] sm:$0xf]
        %v2151 = vld [vmem:[%s651 + $0x94] sm:$0xf]
        %v2152 = vld [vmem:[%s651 + $0x98] sm:$0x1]
        %v2153 = vld [vmem:[%s651 + $0xa0] sm:$0xf]
        %v2154 = vld [vmem:[%s651 + $0xa4] sm:$0xf]
        %v2155 = vld [vmem:[%s651 + $0xa8] sm:$0x1]
        %v2156 = vld [vmem:[%s651 + $0xb0] sm:$0xf]
        %v2157 = vld [vmem:[%s651 + $0xb4] sm:$0xf]
        %v2158 = vld [vmem:[%s651 + $0xb8] sm:$0x1]
        %v2159 = vld [vmem:[%s651 + $0xc0] sm:$0xf]
        %v2160 = vld [vmem:[%s651 + $0xc4] sm:$0xf]
        %v2161 = vld [vmem:[%s651 + $0xc8] sm:$0x1]
        %v2162 = vld [vmem:[%s651 + $0xd0] sm:$0xf]
        %v2163 = vld [vmem:[%s651 + $0xd4] sm:$0xf]
        %v2164 = vld [vmem:[%s651 + $0xd8] sm:$0x1]
        %v2165 = vld [vmem:[%s651 + $0xe0] sm:$0xf]
        %v2166 = vld [vmem:[%s651 + $0xe4] sm:$0xf]
        %v2167 = vld [vmem:[%s651 + $0xe8] sm:$0x1]
        %v2168 = vld [vmem:[%s651 + $0xf0] sm:$0xf]
        %v2169 = vld [vmem:[%s651 + $0xf4] sm:$0xf]
        %v2170 = vld [vmem:[%s651 + $0xf8] sm:$0x1]
        %v2172 = vshrl.u32 %v2123, 16
        %v2174 = vrot.slane %v2172, 4
        %v2175 = vshll.u32 %v2123, 16
        %v2177 = vrot.slane %v2175, 5
        %v2178 = vor.u32 %v2174, %v2177
        %v2179 = vrot.slane %v2178, 4
        %v2181 = vshll.u32 %v2124, 16
        %v2183 = vrot.slane %v2181, 5
        %v2184 = vsel %vm1335, %v2179, %v2183
        %v2185 = vshrl.u32 %v2124, 16
        %v2187 = vrot.slane %v2185, 4
        %v2188 = vor.u32 %v2187, %v2183
        %v2189 = vrot.slane %v2188, 4
        %v2191 = vshll.u32 %v2125, 16
        %v2193 = vrot.slane %v2191, 5
        %v2194 = vsel %vm1335, %v2189, %v2193
        %v2196 = vshrl.u32 %v2126, 16
        %v2198 = vrot.slane %v2196, 4
        %v2199 = vshll.u32 %v2126, 16
        %v2201 = vrot.slane %v2199, 5
        %v2202 = vor.u32 %v2198, %v2201
        %v2203 = vrot.slane %v2202, 4
        %v2205 = vshll.u32 %v2127, 16
        %v2207 = vrot.slane %v2205, 5
        %v2208 = vsel %vm1335, %v2203, %v2207
        %v2209 = vshrl.u32 %v2127, 16
        %v2211 = vrot.slane %v2209, 4
        %v2212 = vor.u32 %v2211, %v2207
        %v2213 = vrot.slane %v2212, 4
        %v2215 = vshll.u32 %v2128, 16
        %v2217 = vrot.slane %v2215, 5
        %v2218 = vsel %vm1335, %v2213, %v2217
        %v2220 = vshrl.u32 %v2129, 16
        %v2222 = vrot.slane %v2220, 4
        %v2223 = vshll.u32 %v2129, 16
        %v2225 = vrot.slane %v2223, 5
        %v2226 = vor.u32 %v2222, %v2225
        %v2227 = vrot.slane %v2226, 4
        %v2229 = vshll.u32 %v2130, 16
        %v2231 = vrot.slane %v2229, 5
        %v2232 = vsel %vm1335, %v2227, %v2231
        %v2233 = vshrl.u32 %v2130, 16
        %v2235 = vrot.slane %v2233, 4
        %v2236 = vor.u32 %v2235, %v2231
        %v2237 = vrot.slane %v2236, 4
        %v2239 = vshll.u32 %v2131, 16
        %v2241 = vrot.slane %v2239, 5
        %v2242 = vsel %vm1335, %v2237, %v2241
        %v2244 = vshrl.u32 %v2132, 16
        %v2246 = vrot.slane %v2244, 4
        %v2247 = vshll.u32 %v2132, 16
        %v2249 = vrot.slane %v2247, 5
        %v2250 = vor.u32 %v2246, %v2249
        %v2251 = vrot.slane %v2250, 4
        %v2253 = vshll.u32 %v2133, 16
        %v2255 = vrot.slane %v2253, 5
        %v2256 = vsel %vm1335, %v2251, %v2255
        %v2257 = vshrl.u32 %v2133, 16
        %v2259 = vrot.slane %v2257, 4
        %v2260 = vor.u32 %v2259, %v2255
        %v2261 = vrot.slane %v2260, 4
        %v2263 = vshll.u32 %v2134, 16
        %v2265 = vrot.slane %v2263, 5
        %v2266 = vsel %vm1335, %v2261, %v2265
        %v2268 = vshrl.u32 %v2135, 16
        %v2270 = vrot.slane %v2268, 4
        %v2271 = vshll.u32 %v2135, 16
        %v2273 = vrot.slane %v2271, 5
        %v2274 = vor.u32 %v2270, %v2273
        %v2275 = vrot.slane %v2274, 4
        %v2277 = vshll.u32 %v2136, 16
        %v2279 = vrot.slane %v2277, 5
        %v2280 = vsel %vm1335, %v2275, %v2279
        %v2281 = vshrl.u32 %v2136, 16
        %v2283 = vrot.slane %v2281, 4
        %v2284 = vor.u32 %v2283, %v2279
        %v2285 = vrot.slane %v2284, 4
        %v2287 = vshll.u32 %v2137, 16
        %v2289 = vrot.slane %v2287, 5
        %v2290 = vsel %vm1335, %v2285, %v2289
        %v2292 = vshrl.u32 %v2138, 16
        %v2294 = vrot.slane %v2292, 4
        %v2295 = vshll.u32 %v2138, 16
        %v2297 = vrot.slane %v2295, 5
        %v2298 = vor.u32 %v2294, %v2297
        %v2299 = vrot.slane %v2298, 4
        %v2301 = vshll.u32 %v2139, 16
        %v2303 = vrot.slane %v2301, 5
        %v2304 = vsel %vm1335, %v2299, %v2303
        %v2305 = vshrl.u32 %v2139, 16
        %v2307 = vrot.slane %v2305, 4
        %v2308 = vor.u32 %v2307, %v2303
        %v2309 = vrot.slane %v2308, 4
        %v2311 = vshll.u32 %v2140, 16
        %v2313 = vrot.slane %v2311, 5
        %v2314 = vsel %vm1335, %v2309, %v2313
        %v2316 = vshrl.u32 %v2141, 16
        %v2318 = vrot.slane %v2316, 4
        %v2319 = vshll.u32 %v2141, 16
        %v2321 = vrot.slane %v2319, 5
        %v2322 = vor.u32 %v2318, %v2321
        %v2323 = vrot.slane %v2322, 4
        %v2325 = vshll.u32 %v2142, 16
        %v2327 = vrot.slane %v2325, 5
        %v2328 = vsel %vm1335, %v2323, %v2327
        %v2329 = vshrl.u32 %v2142, 16
        %v2331 = vrot.slane %v2329, 4
        %v2332 = vor.u32 %v2331, %v2327
        %v2333 = vrot.slane %v2332, 4
        %v2335 = vshll.u32 %v2143, 16
        %v2337 = vrot.slane %v2335, 5
        %v2338 = vsel %vm1335, %v2333, %v2337
        %v2340 = vshrl.u32 %v2144, 16
        %v2342 = vrot.slane %v2340, 4
        %v2343 = vshll.u32 %v2144, 16
        %v2345 = vrot.slane %v2343, 5
        %v2346 = vor.u32 %v2342, %v2345
        %v2347 = vrot.slane %v2346, 4
        %v2349 = vshll.u32 %v2145, 16
        %v2351 = vrot.slane %v2349, 5
        %v2352 = vsel %vm1335, %v2347, %v2351
        %v2353 = vshrl.u32 %v2145, 16
        %v2355 = vrot.slane %v2353, 4
        %v2356 = vor.u32 %v2355, %v2351
        %v2357 = vrot.slane %v2356, 4
        %v2359 = vshll.u32 %v2146, 16
        %v2361 = vrot.slane %v2359, 5
        %v2362 = vsel %vm1335, %v2357, %v2361
        %v2364 = vshrl.u32 %v2147, 16
        %v2366 = vrot.slane %v2364, 4
        %v2367 = vshll.u32 %v2147, 16
        %v2369 = vrot.slane %v2367, 5
        %v2370 = vor.u32 %v2366, %v2369
        %v2371 = vrot.slane %v2370, 4
        %v2373 = vshll.u32 %v2148, 16
        %v2375 = vrot.slane %v2373, 5
        %v2376 = vsel %vm1335, %v2371, %v2375
        %v2377 = vshrl.u32 %v2148, 16
        %v2379 = vrot.slane %v2377, 4
        %v2380 = vor.u32 %v2379, %v2375
        %v2381 = vrot.slane %v2380, 4
        %v2383 = vshll.u32 %v2149, 16
        %v2385 = vrot.slane %v2383, 5
        %v2386 = vsel %vm1335, %v2381, %v2385
        %v2388 = vshrl.u32 %v2150, 16
        %v2390 = vrot.slane %v2388, 4
        %v2391 = vshll.u32 %v2150, 16
        %v2393 = vrot.slane %v2391, 5
        %v2394 = vor.u32 %v2390, %v2393
        %v2395 = vrot.slane %v2394, 4
        %v2397 = vshll.u32 %v2151, 16
        %v2399 = vrot.slane %v2397, 5
        %v2400 = vsel %vm1335, %v2395, %v2399
        %v2401 = vshrl.u32 %v2151, 16
        %v2403 = vrot.slane %v2401, 4
        %v2404 = vor.u32 %v2403, %v2399
        %v2405 = vrot.slane %v2404, 4
        %v2407 = vshll.u32 %v2152, 16
        %v2409 = vrot.slane %v2407, 5
        %v2410 = vsel %vm1335, %v2405, %v2409
        %v2412 = vshrl.u32 %v2153, 16
        %v2414 = vrot.slane %v2412, 4
        %v2415 = vshll.u32 %v2153, 16
        %v2417 = vrot.slane %v2415, 5
        %v2418 = vor.u32 %v2414, %v2417
        %v2419 = vrot.slane %v2418, 4
        %v2421 = vshll.u32 %v2154, 16
        %v2423 = vrot.slane %v2421, 5
        %v2424 = vsel %vm1335, %v2419, %v2423
        %v2425 = vshrl.u32 %v2154, 16
        %v2427 = vrot.slane %v2425, 4
        %v2428 = vor.u32 %v2427, %v2423
        %v2429 = vrot.slane %v2428, 4
        %v2431 = vshll.u32 %v2155, 16
        %v2433 = vrot.slane %v2431, 5
        %v2434 = vsel %vm1335, %v2429, %v2433
        %v2436 = vshrl.u32 %v2156, 16
        %v2438 = vrot.slane %v2436, 4
        %v2439 = vshll.u32 %v2156, 16
        %v2441 = vrot.slane %v2439, 5
        %v2442 = vor.u32 %v2438, %v2441
        %v2443 = vrot.slane %v2442, 4
        %v2445 = vshll.u32 %v2157, 16
        %v2447 = vrot.slane %v2445, 5
        %v2448 = vsel %vm1335, %v2443, %v2447
        %v2449 = vshrl.u32 %v2157, 16
        %v2451 = vrot.slane %v2449, 4
        %v2452 = vor.u32 %v2451, %v2447
        %v2453 = vrot.slane %v2452, 4
        %v2455 = vshll.u32 %v2158, 16
        %v2457 = vrot.slane %v2455, 5
        %v2458 = vsel %vm1335, %v2453, %v2457
        %v2460 = vshrl.u32 %v2159, 16
        %v2462 = vrot.slane %v2460, 4
        %v2463 = vshll.u32 %v2159, 16
        %v2465 = vrot.slane %v2463, 5
        %v2466 = vor.u32 %v2462, %v2465
        %v2467 = vrot.slane %v2466, 4
        %v2469 = vshll.u32 %v2160, 16
        %v2471 = vrot.slane %v2469, 5
        %v2472 = vsel %vm1335, %v2467, %v2471
        %v2473 = vshrl.u32 %v2160, 16
        %v2475 = vrot.slane %v2473, 4
        %v2476 = vor.u32 %v2475, %v2471
        %v2477 = vrot.slane %v2476, 4
        %v2479 = vshll.u32 %v2161, 16
        %v2481 = vrot.slane %v2479, 5
        %v2482 = vsel %vm1335, %v2477, %v2481
        %v2484 = vshrl.u32 %v2162, 16
        %v2486 = vrot.slane %v2484, 4
        %v2487 = vshll.u32 %v2162, 16
        %v2489 = vrot.slane %v2487, 5
        %v2490 = vor.u32 %v2486, %v2489
        %v2491 = vrot.slane %v2490, 4
        %v2493 = vshll.u32 %v2163, 16
        %v2495 = vrot.slane %v2493, 5
        %v2496 = vsel %vm1335, %v2491, %v2495
        %v2497 = vshrl.u32 %v2163, 16
        %v2499 = vrot.slane %v2497, 4
        %v2500 = vor.u32 %v2499, %v2495
        %v2501 = vrot.slane %v2500, 4
        %v2503 = vshll.u32 %v2164, 16
        %v2505 = vrot.slane %v2503, 5
        %v2506 = vsel %vm1335, %v2501, %v2505
        %v2508 = vshrl.u32 %v2165, 16
        %v2510 = vrot.slane %v2508, 4
        %v2511 = vshll.u32 %v2165, 16
        %v2513 = vrot.slane %v2511, 5
        %v2514 = vor.u32 %v2510, %v2513
        %v2515 = vrot.slane %v2514, 4
        %v2517 = vshll.u32 %v2166, 16
        %v2519 = vrot.slane %v2517, 5
        %v2520 = vsel %vm1335, %v2515, %v2519
        %v2521 = vshrl.u32 %v2166, 16
        %v2523 = vrot.slane %v2521, 4
        %v2524 = vor.u32 %v2523, %v2519
        %v2525 = vrot.slane %v2524, 4
        %v2527 = vshll.u32 %v2167, 16
        %v2529 = vrot.slane %v2527, 5
        %v2530 = vsel %vm1335, %v2525, %v2529
        %v2532 = vshrl.u32 %v2168, 16
        %v2534 = vrot.slane %v2532, 4
        %v2535 = vshll.u32 %v2168, 16
        %v2537 = vrot.slane %v2535, 5
        %v2538 = vor.u32 %v2534, %v2537
        %v2539 = vrot.slane %v2538, 4
        %v2541 = vshll.u32 %v2169, 16
        %v2543 = vrot.slane %v2541, 5
        %v2544 = vsel %vm1335, %v2539, %v2543
        %v2545 = vshrl.u32 %v2169, 16
        %v2547 = vrot.slane %v2545, 4
        %v2548 = vor.u32 %v2547, %v2543
        %v2549 = vrot.slane %v2548, 4
        %v2551 = vshll.u32 %v2170, 16
        %v2553 = vrot.slane %v2551, 5
        %v2554 = vsel %vm1335, %v2549, %v2553
        %2587 = vst [vmem:[#allocation3 + $0x10] sm:$0xf] %v2184
        %2588 = vst [vmem:[#allocation3 + $0x34] sm:$0xf] %v2194
        %2589 = vst [vmem:[#allocation3 + $0x58] sm:$0xf] %v2208
        %2590 = vst [vmem:[#allocation3 + $0x7c] sm:$0xf] %v2218
        %2591 = vst [vmem:[#allocation3 + $0xa0] sm:$0xf] %v2232
        %2592 = vst [vmem:[#allocation3 + $0xc4] sm:$0xf] %v2242
        %2593 = vst [vmem:[#allocation3 + $0xe8] sm:$0xf] %v2256
        %2594 = vst [vmem:[#allocation3 + $0x10c] sm:$0xf] %v2266
        %2595 = vst [vmem:[#allocation3 + $0x130] sm:$0xf] %v2280
        %2596 = vst [vmem:[#allocation3 + $0x154] sm:$0xf] %v2290
        %2597 = vst [vmem:[#allocation3 + $0x178] sm:$0xf] %v2304
        %2598 = vst [vmem:[#allocation3 + $0x19c] sm:$0xf] %v2314
        %2599 = vst [vmem:[#allocation3 + $0x1c0] sm:$0xf] %v2328
        %2600 = vst [vmem:[#allocation3 + $0x1e4] sm:$0xf] %v2338
        %2601 = vst [vmem:[#allocation3 + $0x208] sm:$0xf] %v2352
        %2602 = vst [vmem:[#allocation3 + $0x22c] sm:$0xf] %v2362
        %2603 = vst [vmem:[#allocation3 + $0x250] sm:$0xf] %v2376
        %2604 = vst [vmem:[#allocation3 + $0x274] sm:$0xf] %v2386
        %2605 = vst [vmem:[#allocation3 + $0x298] sm:$0xf] %v2400
        %2606 = vst [vmem:[#allocation3 + $0x2bc] sm:$0xf] %v2410
        %2607 = vst [vmem:[#allocation3 + $0x2e0] sm:$0xf] %v2424
        %2608 = vst [vmem:[#allocation3 + $0x304] sm:$0xf] %v2434
        %2609 = vst [vmem:[#allocation3 + $0x328] sm:$0xf] %v2448
        %2610 = vst [vmem:[#allocation3 + $0x34c] sm:$0xf] %v2458
        %2611 = vst [vmem:[#allocation3 + $0x370] sm:$0xf] %v2472
        %2612 = vst [vmem:[#allocation3 + $0x394] sm:$0xf] %v2482
        %2613 = vst [vmem:[#allocation3 + $0x3b8] sm:$0xf] %v2496
        %2614 = vst [vmem:[#allocation3 + $0x3dc] sm:$0xf] %v2506
        %2615 = vst [vmem:[#allocation3 + $0x400] sm:$0xf] %v2520
        %2616 = vst [vmem:[#allocation3 + $0x424] sm:$0xf] %v2530
        %2617 = vst [vmem:[#allocation3 + $0x448] sm:$0xf] %v2544
        %2618 = vst [vmem:[#allocation3 + $0x46c] sm:$0xf] %v2554
        %v2619 = vld [vmem:[%s651] sm:$0xe]
        %v2620 = vld [vmem:[%s651 + $0x4] sm:$0xf]
        %v2621 = vld [vmem:[%s651 + $0x8] sm:$0x1]
        %v2622 = vld [vmem:[%s651 + $0x10] sm:$0xe]
        %v2623 = vld [vmem:[%s651 + $0x14] sm:$0xf]
        %v2624 = vld [vmem:[%s651 + $0x18] sm:$0x1]
        %v2625 = vld [vmem:[%s651 + $0x20] sm:$0xe]
        %v2626 = vld [vmem:[%s651 + $0x24] sm:$0xf]
        %v2627 = vld [vmem:[%s651 + $0x28] sm:$0x1]
        %v2628 = vld [vmem:[%s651 + $0x30] sm:$0xe]
        %v2629 = vld [vmem:[%s651 + $0x34] sm:$0xf]
        %v2630 = vld [vmem:[%s651 + $0x38] sm:$0x1]
        %v2631 = vld [vmem:[%s651 + $0x40] sm:$0xe]
        %v2632 = vld [vmem:[%s651 + $0x44] sm:$0xf]
        %v2633 = vld [vmem:[%s651 + $0x48] sm:$0x1]
        %v2634 = vld [vmem:[%s651 + $0x50] sm:$0xe]
        %v2635 = vld [vmem:[%s651 + $0x54] sm:$0xf]
        %v2636 = vld [vmem:[%s651 + $0x58] sm:$0x1]
        %v2637 = vld [vmem:[%s651 + $0x60] sm:$0xe]
        %v2638 = vld [vmem:[%s651 + $0x64] sm:$0xf]
        %v2639 = vld [vmem:[%s651 + $0x68] sm:$0x1]
        %v2640 = vld [vmem:[%s651 + $0x70] sm:$0xe]
        %v2641 = vld [vmem:[%s651 + $0x74] sm:$0xf]
        %v2642 = vld [vmem:[%s651 + $0x78] sm:$0x1]
        %v2643 = vld [vmem:[%s651 + $0x80] sm:$0xe]
        %v2644 = vld [vmem:[%s651 + $0x84] sm:$0xf]
        %v2645 = vld [vmem:[%s651 + $0x88] sm:$0x1]
        %v2646 = vld [vmem:[%s651 + $0x90] sm:$0xe]
        %v2647 = vld [vmem:[%s651 + $0x94] sm:$0xf]
        %v2648 = vld [vmem:[%s651 + $0x98] sm:$0x1]
        %v2649 = vld [vmem:[%s651 + $0xa0] sm:$0xe]
        %v2650 = vld [vmem:[%s651 + $0xa4] sm:$0xf]
        %v2651 = vld [vmem:[%s651 + $0xa8] sm:$0x1]
        %v2652 = vld [vmem:[%s651 + $0xb0] sm:$0xe]
        %v2653 = vld [vmem:[%s651 + $0xb4] sm:$0xf]
        %v2654 = vld [vmem:[%s651 + $0xb8] sm:$0x1]
        %v2655 = vld [vmem:[%s651 + $0xc0] sm:$0xe]
        %v2656 = vld [vmem:[%s651 + $0xc4] sm:$0xf]
        %v2657 = vld [vmem:[%s651 + $0xc8] sm:$0x1]
        %v2658 = vld [vmem:[%s651 + $0xd0] sm:$0xe]
        %v2659 = vld [vmem:[%s651 + $0xd4] sm:$0xf]
        %v2660 = vld [vmem:[%s651 + $0xd8] sm:$0x1]
        %v2661 = vld [vmem:[%s651 + $0xe0] sm:$0xe]
        %v2662 = vld [vmem:[%s651 + $0xe4] sm:$0xf]
        %v2663 = vld [vmem:[%s651 + $0xe8] sm:$0x1]
        %v2664 = vld [vmem:[%s651 + $0xf0] sm:$0xe]
        %v2665 = vld [vmem:[%s651 + $0xf4] sm:$0xf]
        %v2666 = vld [vmem:[%s651 + $0xf8] sm:$0x1]
        %v2715 = vrot.slane %v2619, 5
        %v2716 = vrot.slane %v2715, 4
        %v2717 = vrot.slane %v2620, 5
        %v2718 = vsel %vm1882, %v2716, %v2717
        %v2719 = vrot.slane %v2717, 4
        %v2720 = vrot.slane %v2621, 5
        %v2721 = vsel %vm1882, %v2719, %v2720
        %v2722 = vrot.slane %v2622, 5
        %v2723 = vrot.slane %v2722, 4
        %v2724 = vrot.slane %v2623, 5
        %v2725 = vsel %vm1882, %v2723, %v2724
        %v2726 = vrot.slane %v2724, 4
        %v2727 = vrot.slane %v2624, 5
        %v2728 = vsel %vm1882, %v2726, %v2727
        %v2729 = vrot.slane %v2625, 5
        %v2730 = vrot.slane %v2729, 4
        %v2731 = vrot.slane %v2626, 5
        %v2732 = vsel %vm1882, %v2730, %v2731
        %v2733 = vrot.slane %v2731, 4
        %v2734 = vrot.slane %v2627, 5
        %v2735 = vsel %vm1882, %v2733, %v2734
        %v2736 = vrot.slane %v2628, 5
        %v2737 = vrot.slane %v2736, 4
        %v2738 = vrot.slane %v2629, 5
        %v2739 = vsel %vm1882, %v2737, %v2738
        %v2740 = vrot.slane %v2738, 4
        %v2741 = vrot.slane %v2630, 5
        %v2742 = vsel %vm1882, %v2740, %v2741
        %v2743 = vrot.slane %v2631, 5
        %v2744 = vrot.slane %v2743, 4
        %v2745 = vrot.slane %v2632, 5
        %v2746 = vsel %vm1882, %v2744, %v2745
        %v2747 = vrot.slane %v2745, 4
        %v2748 = vrot.slane %v2633, 5
        %v2749 = vsel %vm1882, %v2747, %v2748
        %v2750 = vrot.slane %v2634, 5
        %v2751 = vrot.slane %v2750, 4
        %v2752 = vrot.slane %v2635, 5
        %v2753 = vsel %vm1882, %v2751, %v2752
        %v2754 = vrot.slane %v2752, 4
        %v2755 = vrot.slane %v2636, 5
        %v2756 = vsel %vm1882, %v2754, %v2755
        %v2757 = vrot.slane %v2637, 5
        %v2758 = vrot.slane %v2757, 4
        %v2759 = vrot.slane %v2638, 5
        %v2760 = vsel %vm1882, %v2758, %v2759
        %v2761 = vrot.slane %v2759, 4
        %v2762 = vrot.slane %v2639, 5
        %v2763 = vsel %vm1882, %v2761, %v2762
        %v2764 = vrot.slane %v2640, 5
        %v2765 = vrot.slane %v2764, 4
        %v2766 = vrot.slane %v2641, 5
        %v2767 = vsel %vm1882, %v2765, %v2766
        %v2768 = vrot.slane %v2766, 4
        %v2769 = vrot.slane %v2642, 5
        %v2770 = vsel %vm1882, %v2768, %v2769
        %v2771 = vrot.slane %v2643, 5
        %v2772 = vrot.slane %v2771, 4
        %v2773 = vrot.slane %v2644, 5
        %v2774 = vsel %vm1882, %v2772, %v2773
        %v2775 = vrot.slane %v2773, 4
        %v2776 = vrot.slane %v2645, 5
        %v2777 = vsel %vm1882, %v2775, %v2776
        %v2778 = vrot.slane %v2646, 5
        %v2779 = vrot.slane %v2778, 4
        %v2780 = vrot.slane %v2647, 5
        %v2781 = vsel %vm1882, %v2779, %v2780
        %v2782 = vrot.slane %v2780, 4
        %v2783 = vrot.slane %v2648, 5
        %v2784 = vsel %vm1882, %v2782, %v2783
        %v2785 = vrot.slane %v2649, 5
        %v2786 = vrot.slane %v2785, 4
        %v2787 = vrot.slane %v2650, 5
        %v2788 = vsel %vm1882, %v2786, %v2787
        %v2789 = vrot.slane %v2787, 4
        %v2790 = vrot.slane %v2651, 5
        %v2791 = vsel %vm1882, %v2789, %v2790
        %v2792 = vrot.slane %v2652, 5
        %v2793 = vrot.slane %v2792, 4
        %v2794 = vrot.slane %v2653, 5
        %v2795 = vsel %vm1882, %v2793, %v2794
        %v2796 = vrot.slane %v2794, 4
        %v2797 = vrot.slane %v2654, 5
        %v2798 = vsel %vm1882, %v2796, %v2797
        %v2799 = vrot.slane %v2655, 5
        %v2800 = vrot.slane %v2799, 4
        %v2801 = vrot.slane %v2656, 5
        %v2802 = vsel %vm1882, %v2800, %v2801
        %v2803 = vrot.slane %v2801, 4
        %v2804 = vrot.slane %v2657, 5
        %v2805 = vsel %vm1882, %v2803, %v2804
        %v2806 = vrot.slane %v2658, 5
        %v2807 = vrot.slane %v2806, 4
        %v2808 = vrot.slane %v2659, 5
        %v2809 = vsel %vm1882, %v2807, %v2808
        %v2810 = vrot.slane %v2808, 4
        %v2811 = vrot.slane %v2660, 5
        %v2812 = vsel %vm1882, %v2810, %v2811
        %v2813 = vrot.slane %v2661, 5
        %v2814 = vrot.slane %v2813, 4
        %v2815 = vrot.slane %v2662, 5
        %v2816 = vsel %vm1882, %v2814, %v2815
        %v2817 = vrot.slane %v2815, 4
        %v2818 = vrot.slane %v2663, 5
        %v2819 = vsel %vm1882, %v2817, %v2818
        %v2820 = vrot.slane %v2664, 5
        %v2821 = vrot.slane %v2820, 4
        %v2822 = vrot.slane %v2665, 5
        %v2823 = vsel %vm1882, %v2821, %v2822
        %v2824 = vrot.slane %v2822, 4
        %v2825 = vrot.slane %v2666, 5
        %v2826 = vsel %vm1882, %v2824, %v2825
        %2859 = vst [vmem:[#allocation3 + $0x14] sm:$0xf] %v2718
        %2860 = vst [vmem:[#allocation3 + $0x38] sm:$0xf] %v2721
        %2861 = vst [vmem:[#allocation3 + $0x5c] sm:$0xf] %v2725
        %2862 = vst [vmem:[#allocation3 + $0x80] sm:$0xf] %v2728
        %2863 = vst [vmem:[#allocation3 + $0xa4] sm:$0xf] %v2732
        %2864 = vst [vmem:[#allocation3 + $0xc8] sm:$0xf] %v2735
        %2865 = vst [vmem:[#allocation3 + $0xec] sm:$0xf] %v2739
        %2866 = vst [vmem:[#allocation3 + $0x110] sm:$0xf] %v2742
        %2867 = vst [vmem:[#allocation3 + $0x134] sm:$0xf] %v2746
        %2868 = vst [vmem:[#allocation3 + $0x158] sm:$0xf] %v2749
        %2869 = vst [vmem:[#allocation3 + $0x17c] sm:$0xf] %v2753
        %2870 = vst [vmem:[#allocation3 + $0x1a0] sm:$0xf] %v2756
        %2871 = vst [vmem:[#allocation3 + $0x1c4] sm:$0xf] %v2760
        %2872 = vst [vmem:[#allocation3 + $0x1e8] sm:$0xf] %v2763
        %2873 = vst [vmem:[#allocation3 + $0x20c] sm:$0xf] %v2767
        %2874 = vst [vmem:[#allocation3 + $0x230] sm:$0xf] %v2770
        %2875 = vst [vmem:[#allocation3 + $0x254] sm:$0xf] %v2774
        %2876 = vst [vmem:[#allocation3 + $0x278] sm:$0xf] %v2777
        %2877 = vst [vmem:[#allocation3 + $0x29c] sm:$0xf] %v2781
        %2878 = vst [vmem:[#allocation3 + $0x2c0] sm:$0xf] %v2784
        %2879 = vst [vmem:[#allocation3 + $0x2e4] sm:$0xf] %v2788
        %2880 = vst [vmem:[#allocation3 + $0x308] sm:$0xf] %v2791
        %2881 = vst [vmem:[#allocation3 + $0x32c] sm:$0xf] %v2795
        %2882 = vst [vmem:[#allocation3 + $0x350] sm:$0xf] %v2798
        %2883 = vst [vmem:[#allocation3 + $0x374] sm:$0xf] %v2802
        %2884 = vst [vmem:[#allocation3 + $0x398] sm:$0xf] %v2805
        %2885 = vst [vmem:[#allocation3 + $0x3bc] sm:$0xf] %v2809
        %2886 = vst [vmem:[#allocation3 + $0x3e0] sm:$0xf] %v2812
        %2887 = vst [vmem:[#allocation3 + $0x404] sm:$0xf] %v2816
        %2888 = vst [vmem:[#allocation3 + $0x428] sm:$0xf] %v2819
        %2889 = vst [vmem:[#allocation3 + $0x44c] sm:$0xf] %v2823
        %2890 = vst [vmem:[#allocation3 + $0x470] sm:$0xf] %v2826
        %s2891 = scalar_lea.vmem [#allocation2], 32
        %v2892 = vld [vmem:[%s2891] sm:$0xf]
        %v2893 = vld [vmem:[%s2891 + $0x4] sm:$0xf]
        %v2894 = vld [vmem:[%s2891 + $0x10] sm:$0xf]
        %v2895 = vld [vmem:[%s2891 + $0x14] sm:$0xf]
        %v2896 = vld [vmem:[%s2891 + $0x20] sm:$0xf]
        %v2897 = vld [vmem:[%s2891 + $0x24] sm:$0xf]
        %v2898 = vld [vmem:[%s2891 + $0x30] sm:$0xf]
        %v2899 = vld [vmem:[%s2891 + $0x34] sm:$0xf]
        %v2900 = vld [vmem:[%s2891 + $0x40] sm:$0xf]
        %v2901 = vld [vmem:[%s2891 + $0x44] sm:$0xf]
        %v2902 = vld [vmem:[%s2891 + $0x50] sm:$0xf]
        %v2903 = vld [vmem:[%s2891 + $0x54] sm:$0xf]
        %v2904 = vld [vmem:[%s2891 + $0x60] sm:$0xf]
        %v2905 = vld [vmem:[%s2891 + $0x64] sm:$0xf]
        %v2906 = vld [vmem:[%s2891 + $0x70] sm:$0xf]
        %v2907 = vld [vmem:[%s2891 + $0x74] sm:$0xf]
        %v2908 = vld [vmem:[%s2891 + $0x80] sm:$0xf]
        %v2909 = vld [vmem:[%s2891 + $0x84] sm:$0xf]
        %v2910 = vld [vmem:[%s2891 + $0x90] sm:$0xf]
        %v2911 = vld [vmem:[%s2891 + $0x94] sm:$0xf]
        %v2912 = vld [vmem:[%s2891 + $0xa0] sm:$0xf]
        %v2913 = vld [vmem:[%s2891 + $0xa4] sm:$0xf]
        %v2914 = vld [vmem:[%s2891 + $0xb0] sm:$0xf]
        %v2915 = vld [vmem:[%s2891 + $0xb4] sm:$0xf]
        %v2916 = vld [vmem:[%s2891 + $0xc0] sm:$0xf]
        %v2917 = vld [vmem:[%s2891 + $0xc4] sm:$0xf]
        %v2918 = vld [vmem:[%s2891 + $0xd0] sm:$0xf]
        %v2919 = vld [vmem:[%s2891 + $0xd4] sm:$0xf]
        %v2920 = vld [vmem:[%s2891 + $0xe0] sm:$0xf]
        %v2921 = vld [vmem:[%s2891 + $0xe4] sm:$0xf]
        %v2922 = vld [vmem:[%s2891 + $0xf0] sm:$0xf]
        %v2923 = vld [vmem:[%s2891 + $0xf4] sm:$0xf]
        %2924 = vst [vmem:[#allocation3 + $0x18] sm:$0xf] %v2892
        %2925 = vst [vmem:[#allocation3 + $0x3c] sm:$0xf] %v2893
        %2926 = vst [vmem:[#allocation3 + $0x60] sm:$0xf] %v2894
        %2927 = vst [vmem:[#allocation3 + $0x84] sm:$0xf] %v2895
        %2928 = vst [vmem:[#allocation3 + $0xa8] sm:$0xf] %v2896
        %2929 = vst [vmem:[#allocation3 + $0xcc] sm:$0xf] %v2897
        %2930 = vst [vmem:[#allocation3 + $0xf0] sm:$0xf] %v2898
        %2931 = vst [vmem:[#allocation3 + $0x114] sm:$0xf] %v2899
        %2932 = vst [vmem:[#allocation3 + $0x138] sm:$0xf] %v2900
        %2933 = vst [vmem:[#allocation3 + $0x15c] sm:$0xf] %v2901
        %2934 = vst [vmem:[#allocation3 + $0x180] sm:$0xf] %v2902
        %2935 = vst [vmem:[#allocation3 + $0x1a4] sm:$0xf] %v2903
        %2936 = vst [vmem:[#allocation3 + $0x1c8] sm:$0xf] %v2904
        %2937 = vst [vmem:[#allocation3 + $0x1ec] sm:$0xf] %v2905
        %2938 = vst [vmem:[#allocation3 + $0x210] sm:$0xf] %v2906
        %2939 = vst [vmem:[#allocation3 + $0x234] sm:$0xf] %v2907
        %2940 = vst [vmem:[#allocation3 + $0x258] sm:$0xf] %v2908
        %2941 = vst [vmem:[#allocation3 + $0x27c] sm:$0xf] %v2909
        %2942 = vst [vmem:[#allocation3 + $0x2a0] sm:$0xf] %v2910
        %2943 = vst [vmem:[#allocation3 + $0x2c4] sm:$0xf] %v2911
        %2944 = vst [vmem:[#allocation3 + $0x2e8] sm:$0xf] %v2912
        %2945 = vst [vmem:[#allocation3 + $0x30c] sm:$0xf] %v2913
        %2946 = vst [vmem:[#allocation3 + $0x330] sm:$0xf] %v2914
        %2947 = vst [vmem:[#allocation3 + $0x354] sm:$0xf] %v2915
        %2948 = vst [vmem:[#allocation3 + $0x378] sm:$0xf] %v2916
        %2949 = vst [vmem:[#allocation3 + $0x39c] sm:$0xf] %v2917
        %2950 = vst [vmem:[#allocation3 + $0x3c0] sm:$0xf] %v2918
        %2951 = vst [vmem:[#allocation3 + $0x3e4] sm:$0xf] %v2919
        %2952 = vst [vmem:[#allocation3 + $0x408] sm:$0xf] %v2920
        %2953 = vst [vmem:[#allocation3 + $0x42c] sm:$0xf] %v2921
        %2954 = vst [vmem:[#allocation3 + $0x450] sm:$0xf] %v2922
        %2955 = vst [vmem:[#allocation3 + $0x474] sm:$0xf] %v2923
        %v2956 = vld [vmem:[%s2891] sm:$0xf]
        %v2957 = vld [vmem:[%s2891 + $0x4] sm:$0xf]
        %v2958 = vld [vmem:[%s2891 + $0x8] sm:$0x1]
        %v2959 = vld [vmem:[%s2891 + $0x10] sm:$0xf]
        %v2960 = vld [vmem:[%s2891 + $0x14] sm:$0xf]
        %v2961 = vld [vmem:[%s2891 + $0x18] sm:$0x1]
        %v2962 = vld [vmem:[%s2891 + $0x20] sm:$0xf]
        %v2963 = vld [vmem:[%s2891 + $0x24] sm:$0xf]
        %v2964 = vld [vmem:[%s2891 + $0x28] sm:$0x1]
        %v2965 = vld [vmem:[%s2891 + $0x30] sm:$0xf]
        %v2966 = vld [vmem:[%s2891 + $0x34] sm:$0xf]
        %v2967 = vld [vmem:[%s2891 + $0x38] sm:$0x1]
        %v2968 = vld [vmem:[%s2891 + $0x40] sm:$0xf]
        %v2969 = vld [vmem:[%s2891 + $0x44] sm:$0xf]
        %v2970 = vld [vmem:[%s2891 + $0x48] sm:$0x1]
        %v2971 = vld [vmem:[%s2891 + $0x50] sm:$0xf]
        %v2972 = vld [vmem:[%s2891 + $0x54] sm:$0xf]
        %v2973 = vld [vmem:[%s2891 + $0x58] sm:$0x1]
        %v2974 = vld [vmem:[%s2891 + $0x60] sm:$0xf]
        %v2975 = vld [vmem:[%s2891 + $0x64] sm:$0xf]
        %v2976 = vld [vmem:[%s2891 + $0x68] sm:$0x1]
        %v2977 = vld [vmem:[%s2891 + $0x70] sm:$0xf]
        %v2978 = vld [vmem:[%s2891 + $0x74] sm:$0xf]
        %v2979 = vld [vmem:[%s2891 + $0x78] sm:$0x1]
        %v2980 = vld [vmem:[%s2891 + $0x80] sm:$0xf]
        %v2981 = vld [vmem:[%s2891 + $0x84] sm:$0xf]
        %v2982 = vld [vmem:[%s2891 + $0x88] sm:$0x1]
        %v2983 = vld [vmem:[%s2891 + $0x90] sm:$0xf]
        %v2984 = vld [vmem:[%s2891 + $0x94] sm:$0xf]
        %v2985 = vld [vmem:[%s2891 + $0x98] sm:$0x1]
        %v2986 = vld [vmem:[%s2891 + $0xa0] sm:$0xf]
        %v2987 = vld [vmem:[%s2891 + $0xa4] sm:$0xf]
        %v2988 = vld [vmem:[%s2891 + $0xa8] sm:$0x1]
        %v2989 = vld [vmem:[%s2891 + $0xb0] sm:$0xf]
        %v2990 = vld [vmem:[%s2891 + $0xb4] sm:$0xf]
        %v2991 = vld [vmem:[%s2891 + $0xb8] sm:$0x1]
        %v2992 = vld [vmem:[%s2891 + $0xc0] sm:$0xf]
        %v2993 = vld [vmem:[%s2891 + $0xc4] sm:$0xf]
        %v2994 = vld [vmem:[%s2891 + $0xc8] sm:$0x1]
        %v2995 = vld [vmem:[%s2891 + $0xd0] sm:$0xf]
        %v2996 = vld [vmem:[%s2891 + $0xd4] sm:$0xf]
        %v2997 = vld [vmem:[%s2891 + $0xd8] sm:$0x1]
        %v2998 = vld [vmem:[%s2891 + $0xe0] sm:$0xf]
        %v2999 = vld [vmem:[%s2891 + $0xe4] sm:$0xf]
        %v3000 = vld [vmem:[%s2891 + $0xe8] sm:$0x1]
        %v3001 = vld [vmem:[%s2891 + $0xf0] sm:$0xf]
        %v3002 = vld [vmem:[%s2891 + $0xf4] sm:$0xf]
        %v3003 = vld [vmem:[%s2891 + $0xf8] sm:$0x1]
        %v3005 = vshrl.u32 %v2956, 16
        %v3007 = vrot.slane %v3005, 4
        %v3008 = vshll.u32 %v2956, 16
        %v3010 = vrot.slane %v3008, 5
        %v3011 = vor.u32 %v3007, %v3010
        %v3012 = vrot.slane %v3011, 4
        %v3014 = vshll.u32 %v2957, 16
        %v3016 = vrot.slane %v3014, 5
        %v3017 = vsel %vm1335, %v3012, %v3016
        %v3018 = vshrl.u32 %v2957, 16
        %v3020 = vrot.slane %v3018, 4
        %v3021 = vor.u32 %v3020, %v3016
        %v3022 = vrot.slane %v3021, 4
        %v3024 = vshll.u32 %v2958, 16
        %v3026 = vrot.slane %v3024, 5
        %v3027 = vsel %vm1335, %v3022, %v3026
        %v3029 = vshrl.u32 %v2959, 16
        %v3031 = vrot.slane %v3029, 4
        %v3032 = vshll.u32 %v2959, 16
        %v3034 = vrot.slane %v3032, 5
        %v3035 = vor.u32 %v3031, %v3034
        %v3036 = vrot.slane %v3035, 4
        %v3038 = vshll.u32 %v2960, 16
        %v3040 = vrot.slane %v3038, 5
        %v3041 = vsel %vm1335, %v3036, %v3040
        %v3042 = vshrl.u32 %v2960, 16
        %v3044 = vrot.slane %v3042, 4
        %v3045 = vor.u32 %v3044, %v3040
        %v3046 = vrot.slane %v3045, 4
        %v3048 = vshll.u32 %v2961, 16
        %v3050 = vrot.slane %v3048, 5
        %v3051 = vsel %vm1335, %v3046, %v3050
        %v3053 = vshrl.u32 %v2962, 16
        %v3055 = vrot.slane %v3053, 4
        %v3056 = vshll.u32 %v2962, 16
        %v3058 = vrot.slane %v3056, 5
        %v3059 = vor.u32 %v3055, %v3058
        %v3060 = vrot.slane %v3059, 4
        %v3062 = vshll.u32 %v2963, 16
        %v3064 = vrot.slane %v3062, 5
        %v3065 = vsel %vm1335, %v3060, %v3064
        %v3066 = vshrl.u32 %v2963, 16
        %v3068 = vrot.slane %v3066, 4
        %v3069 = vor.u32 %v3068, %v3064
        %v3070 = vrot.slane %v3069, 4
        %v3072 = vshll.u32 %v2964, 16
        %v3074 = vrot.slane %v3072, 5
        %v3075 = vsel %vm1335, %v3070, %v3074
        %v3077 = vshrl.u32 %v2965, 16
        %v3079 = vrot.slane %v3077, 4
        %v3080 = vshll.u32 %v2965, 16
        %v3082 = vrot.slane %v3080, 5
        %v3083 = vor.u32 %v3079, %v3082
        %v3084 = vrot.slane %v3083, 4
        %v3086 = vshll.u32 %v2966, 16
        %v3088 = vrot.slane %v3086, 5
        %v3089 = vsel %vm1335, %v3084, %v3088
        %v3090 = vshrl.u32 %v2966, 16
        %v3092 = vrot.slane %v3090, 4
        %v3093 = vor.u32 %v3092, %v3088
        %v3094 = vrot.slane %v3093, 4
        %v3096 = vshll.u32 %v2967, 16
        %v3098 = vrot.slane %v3096, 5
        %v3099 = vsel %vm1335, %v3094, %v3098
        %v3101 = vshrl.u32 %v2968, 16
        %v3103 = vrot.slane %v3101, 4
        %v3104 = vshll.u32 %v2968, 16
        %v3106 = vrot.slane %v3104, 5
        %v3107 = vor.u32 %v3103, %v3106
        %v3108 = vrot.slane %v3107, 4
        %v3110 = vshll.u32 %v2969, 16
        %v3112 = vrot.slane %v3110, 5
        %v3113 = vsel %vm1335, %v3108, %v3112
        %v3114 = vshrl.u32 %v2969, 16
        %v3116 = vrot.slane %v3114, 4
        %v3117 = vor.u32 %v3116, %v3112
        %v3118 = vrot.slane %v3117, 4
        %v3120 = vshll.u32 %v2970, 16
        %v3122 = vrot.slane %v3120, 5
        %v3123 = vsel %vm1335, %v3118, %v3122
        %v3125 = vshrl.u32 %v2971, 16
        %v3127 = vrot.slane %v3125, 4
        %v3128 = vshll.u32 %v2971, 16
        %v3130 = vrot.slane %v3128, 5
        %v3131 = vor.u32 %v3127, %v3130
        %v3132 = vrot.slane %v3131, 4
        %v3134 = vshll.u32 %v2972, 16
        %v3136 = vrot.slane %v3134, 5
        %v3137 = vsel %vm1335, %v3132, %v3136
        %v3138 = vshrl.u32 %v2972, 16
        %v3140 = vrot.slane %v3138, 4
        %v3141 = vor.u32 %v3140, %v3136
        %v3142 = vrot.slane %v3141, 4
        %v3144 = vshll.u32 %v2973, 16
        %v3146 = vrot.slane %v3144, 5
        %v3147 = vsel %vm1335, %v3142, %v3146
        %v3149 = vshrl.u32 %v2974, 16
        %v3151 = vrot.slane %v3149, 4
        %v3152 = vshll.u32 %v2974, 16
        %v3154 = vrot.slane %v3152, 5
        %v3155 = vor.u32 %v3151, %v3154
        %v3156 = vrot.slane %v3155, 4
        %v3158 = vshll.u32 %v2975, 16
        %v3160 = vrot.slane %v3158, 5
        %v3161 = vsel %vm1335, %v3156, %v3160
        %v3162 = vshrl.u32 %v2975, 16
        %v3164 = vrot.slane %v3162, 4
        %v3165 = vor.u32 %v3164, %v3160
        %v3166 = vrot.slane %v3165, 4
        %v3168 = vshll.u32 %v2976, 16
        %v3170 = vrot.slane %v3168, 5
        %v3171 = vsel %vm1335, %v3166, %v3170
        %v3173 = vshrl.u32 %v2977, 16
        %v3175 = vrot.slane %v3173, 4
        %v3176 = vshll.u32 %v2977, 16
        %v3178 = vrot.slane %v3176, 5
        %v3179 = vor.u32 %v3175, %v3178
        %v3180 = vrot.slane %v3179, 4
        %v3182 = vshll.u32 %v2978, 16
        %v3184 = vrot.slane %v3182, 5
        %v3185 = vsel %vm1335, %v3180, %v3184
        %v3186 = vshrl.u32 %v2978, 16
        %v3188 = vrot.slane %v3186, 4
        %v3189 = vor.u32 %v3188, %v3184
        %v3190 = vrot.slane %v3189, 4
        %v3192 = vshll.u32 %v2979, 16
        %v3194 = vrot.slane %v3192, 5
        %v3195 = vsel %vm1335, %v3190, %v3194
        %v3197 = vshrl.u32 %v2980, 16
        %v3199 = vrot.slane %v3197, 4
        %v3200 = vshll.u32 %v2980, 16
        %v3202 = vrot.slane %v3200, 5
        %v3203 = vor.u32 %v3199, %v3202
        %v3204 = vrot.slane %v3203, 4
        %v3206 = vshll.u32 %v2981, 16
        %v3208 = vrot.slane %v3206, 5
        %v3209 = vsel %vm1335, %v3204, %v3208
        %v3210 = vshrl.u32 %v2981, 16
        %v3212 = vrot.slane %v3210, 4
        %v3213 = vor.u32 %v3212, %v3208
        %v3214 = vrot.slane %v3213, 4
        %v3216 = vshll.u32 %v2982, 16
        %v3218 = vrot.slane %v3216, 5
        %v3219 = vsel %vm1335, %v3214, %v3218
        %v3221 = vshrl.u32 %v2983, 16
        %v3223 = vrot.slane %v3221, 4
        %v3224 = vshll.u32 %v2983, 16
        %v3226 = vrot.slane %v3224, 5
        %v3227 = vor.u32 %v3223, %v3226
        %v3228 = vrot.slane %v3227, 4
        %v3230 = vshll.u32 %v2984, 16
        %v3232 = vrot.slane %v3230, 5
        %v3233 = vsel %vm1335, %v3228, %v3232
        %v3234 = vshrl.u32 %v2984, 16
        %v3236 = vrot.slane %v3234, 4
        %v3237 = vor.u32 %v3236, %v3232
        %v3238 = vrot.slane %v3237, 4
        %v3240 = vshll.u32 %v2985, 16
        %v3242 = vrot.slane %v3240, 5
        %v3243 = vsel %vm1335, %v3238, %v3242
        %v3245 = vshrl.u32 %v2986, 16
        %v3247 = vrot.slane %v3245, 4
        %v3248 = vshll.u32 %v2986, 16
        %v3250 = vrot.slane %v3248, 5
        %v3251 = vor.u32 %v3247, %v3250
        %v3252 = vrot.slane %v3251, 4
        %v3254 = vshll.u32 %v2987, 16
        %v3256 = vrot.slane %v3254, 5
        %v3257 = vsel %vm1335, %v3252, %v3256
        %v3258 = vshrl.u32 %v2987, 16
        %v3260 = vrot.slane %v3258, 4
        %v3261 = vor.u32 %v3260, %v3256
        %v3262 = vrot.slane %v3261, 4
        %v3264 = vshll.u32 %v2988, 16
        %v3266 = vrot.slane %v3264, 5
        %v3267 = vsel %vm1335, %v3262, %v3266
        %v3269 = vshrl.u32 %v2989, 16
        %v3271 = vrot.slane %v3269, 4
        %v3272 = vshll.u32 %v2989, 16
        %v3274 = vrot.slane %v3272, 5
        %v3275 = vor.u32 %v3271, %v3274
        %v3276 = vrot.slane %v3275, 4
        %v3278 = vshll.u32 %v2990, 16
        %v3280 = vrot.slane %v3278, 5
        %v3281 = vsel %vm1335, %v3276, %v3280
        %v3282 = vshrl.u32 %v2990, 16
        %v3284 = vrot.slane %v3282, 4
        %v3285 = vor.u32 %v3284, %v3280
        %v3286 = vrot.slane %v3285, 4
        %v3288 = vshll.u32 %v2991, 16
        %v3290 = vrot.slane %v3288, 5
        %v3291 = vsel %vm1335, %v3286, %v3290
        %v3293 = vshrl.u32 %v2992, 16
        %v3295 = vrot.slane %v3293, 4
        %v3296 = vshll.u32 %v2992, 16
        %v3298 = vrot.slane %v3296, 5
        %v3299 = vor.u32 %v3295, %v3298
        %v3300 = vrot.slane %v3299, 4
        %v3302 = vshll.u32 %v2993, 16
        %v3304 = vrot.slane %v3302, 5
        %v3305 = vsel %vm1335, %v3300, %v3304
        %v3306 = vshrl.u32 %v2993, 16
        %v3308 = vrot.slane %v3306, 4
        %v3309 = vor.u32 %v3308, %v3304
        %v3310 = vrot.slane %v3309, 4
        %v3312 = vshll.u32 %v2994, 16
        %v3314 = vrot.slane %v3312, 5
        %v3315 = vsel %vm1335, %v3310, %v3314
        %v3317 = vshrl.u32 %v2995, 16
        %v3319 = vrot.slane %v3317, 4
        %v3320 = vshll.u32 %v2995, 16
        %v3322 = vrot.slane %v3320, 5
        %v3323 = vor.u32 %v3319, %v3322
        %v3324 = vrot.slane %v3323, 4
        %v3326 = vshll.u32 %v2996, 16
        %v3328 = vrot.slane %v3326, 5
        %v3329 = vsel %vm1335, %v3324, %v3328
        %v3330 = vshrl.u32 %v2996, 16
        %v3332 = vrot.slane %v3330, 4
        %v3333 = vor.u32 %v3332, %v3328
        %v3334 = vrot.slane %v3333, 4
        %v3336 = vshll.u32 %v2997, 16
        %v3338 = vrot.slane %v3336, 5
        %v3339 = vsel %vm1335, %v3334, %v3338
        %v3341 = vshrl.u32 %v2998, 16
        %v3343 = vrot.slane %v3341, 4
        %v3344 = vshll.u32 %v2998, 16
        %v3346 = vrot.slane %v3344, 5
        %v3347 = vor.u32 %v3343, %v3346
        %v3348 = vrot.slane %v3347, 4
        %v3350 = vshll.u32 %v2999, 16
        %v3352 = vrot.slane %v3350, 5
        %v3353 = vsel %vm1335, %v3348, %v3352
        %v3354 = vshrl.u32 %v2999, 16
        %v3356 = vrot.slane %v3354, 4
        %v3357 = vor.u32 %v3356, %v3352
        %v3358 = vrot.slane %v3357, 4
        %v3360 = vshll.u32 %v3000, 16
        %v3362 = vrot.slane %v3360, 5
        %v3363 = vsel %vm1335, %v3358, %v3362
        %v3365 = vshrl.u32 %v3001, 16
        %v3367 = vrot.slane %v3365, 4
        %v3368 = vshll.u32 %v3001, 16
        %v3370 = vrot.slane %v3368, 5
        %v3371 = vor.u32 %v3367, %v3370
        %v3372 = vrot.slane %v3371, 4
        %v3374 = vshll.u32 %v3002, 16
        %v3376 = vrot.slane %v3374, 5
        %v3377 = vsel %vm1335, %v3372, %v3376
        %v3378 = vshrl.u32 %v3002, 16
        %v3380 = vrot.slane %v3378, 4
        %v3381 = vor.u32 %v3380, %v3376
        %v3382 = vrot.slane %v3381, 4
        %v3384 = vshll.u32 %v3003, 16
        %v3386 = vrot.slane %v3384, 5
        %v3387 = vsel %vm1335, %v3382, %v3386
        %3420 = vst [vmem:[#allocation3 + $0x1c] sm:$0xf] %v3017
        %3421 = vst [vmem:[#allocation3 + $0x40] sm:$0xf] %v3027
        %3422 = vst [vmem:[#allocation3 + $0x64] sm:$0xf] %v3041
        %3423 = vst [vmem:[#allocation3 + $0x88] sm:$0xf] %v3051
        %3424 = vst [vmem:[#allocation3 + $0xac] sm:$0xf] %v3065
        %3425 = vst [vmem:[#allocation3 + $0xd0] sm:$0xf] %v3075
        %3426 = vst [vmem:[#allocation3 + $0xf4] sm:$0xf] %v3089
        %3427 = vst [vmem:[#allocation3 + $0x118] sm:$0xf] %v3099
        %3428 = vst [vmem:[#allocation3 + $0x13c] sm:$0xf] %v3113
        %3429 = vst [vmem:[#allocation3 + $0x160] sm:$0xf] %v3123
        %3430 = vst [vmem:[#allocation3 + $0x184] sm:$0xf] %v3137
        %3431 = vst [vmem:[#allocation3 + $0x1a8] sm:$0xf] %v3147
        %3432 = vst [vmem:[#allocation3 + $0x1cc] sm:$0xf] %v3161
        %3433 = vst [vmem:[#allocation3 + $0x1f0] sm:$0xf] %v3171
        %3434 = vst [vmem:[#allocation3 + $0x214] sm:$0xf] %v3185
        %3435 = vst [vmem:[#allocation3 + $0x238] sm:$0xf] %v3195
        %3436 = vst [vmem:[#allocation3 + $0x25c] sm:$0xf] %v3209
        %3437 = vst [vmem:[#allocation3 + $0x280] sm:$0xf] %v3219
        %3438 = vst [vmem:[#allocation3 + $0x2a4] sm:$0xf] %v3233
        %3439 = vst [vmem:[#allocation3 + $0x2c8] sm:$0xf] %v3243
        %3440 = vst [vmem:[#allocation3 + $0x2ec] sm:$0xf] %v3257
        %3441 = vst [vmem:[#allocation3 + $0x310] sm:$0xf] %v3267
        %3442 = vst [vmem:[#allocation3 + $0x334] sm:$0xf] %v3281
        %3443 = vst [vmem:[#allocation3 + $0x358] sm:$0xf] %v3291
        %3444 = vst [vmem:[#allocation3 + $0x37c] sm:$0xf] %v3305
        %3445 = vst [vmem:[#allocation3 + $0x3a0] sm:$0xf] %v3315
        %3446 = vst [vmem:[#allocation3 + $0x3c4] sm:$0xf] %v3329
        %3447 = vst [vmem:[#allocation3 + $0x3e8] sm:$0xf] %v3339
        %3448 = vst [vmem:[#allocation3 + $0x40c] sm:$0xf] %v3353
        %3449 = vst [vmem:[#allocation3 + $0x430] sm:$0xf] %v3363
        %3450 = vst [vmem:[#allocation3 + $0x454] sm:$0xf] %v3377
        %3451 = vst [vmem:[#allocation3 + $0x478] sm:$0xf] %v3387
        %v3452 = vld [vmem:[%s2891] sm:$0xe]
        %v3453 = vld [vmem:[%s2891 + $0x4] sm:$0xf]
        %v3454 = vld [vmem:[%s2891 + $0x8] sm:$0x1]
        %v3455 = vld [vmem:[%s2891 + $0x10] sm:$0xe]
        %v3456 = vld [vmem:[%s2891 + $0x14] sm:$0xf]
        %v3457 = vld [vmem:[%s2891 + $0x18] sm:$0x1]
        %v3458 = vld [vmem:[%s2891 + $0x20] sm:$0xe]
        %v3459 = vld [vmem:[%s2891 + $0x24] sm:$0xf]
        %v3460 = vld [vmem:[%s2891 + $0x28] sm:$0x1]
        %v3461 = vld [vmem:[%s2891 + $0x30] sm:$0xe]
        %v3462 = vld [vmem:[%s2891 + $0x34] sm:$0xf]
        %v3463 = vld [vmem:[%s2891 + $0x38] sm:$0x1]
        %v3464 = vld [vmem:[%s2891 + $0x40] sm:$0xe]
        %v3465 = vld [vmem:[%s2891 + $0x44] sm:$0xf]
        %v3466 = vld [vmem:[%s2891 + $0x48] sm:$0x1]
        %v3467 = vld [vmem:[%s2891 + $0x50] sm:$0xe]
        %v3468 = vld [vmem:[%s2891 + $0x54] sm:$0xf]
        %v3469 = vld [vmem:[%s2891 + $0x58] sm:$0x1]
        %v3470 = vld [vmem:[%s2891 + $0x60] sm:$0xe]
        %v3471 = vld [vmem:[%s2891 + $0x64] sm:$0xf]
        %v3472 = vld [vmem:[%s2891 + $0x68] sm:$0x1]
        %v3473 = vld [vmem:[%s2891 + $0x70] sm:$0xe]
        %v3474 = vld [vmem:[%s2891 + $0x74] sm:$0xf]
        %v3475 = vld [vmem:[%s2891 + $0x78] sm:$0x1]
        %v3476 = vld [vmem:[%s2891 + $0x80] sm:$0xe]
        %v3477 = vld [vmem:[%s2891 + $0x84] sm:$0xf]
        %v3478 = vld [vmem:[%s2891 + $0x88] sm:$0x1]
        %v3479 = vld [vmem:[%s2891 + $0x90] sm:$0xe]
        %v3480 = vld [vmem:[%s2891 + $0x94] sm:$0xf]
        %v3481 = vld [vmem:[%s2891 + $0x98] sm:$0x1]
        %v3482 = vld [vmem:[%s2891 + $0xa0] sm:$0xe]
        %v3483 = vld [vmem:[%s2891 + $0xa4] sm:$0xf]
        %v3484 = vld [vmem:[%s2891 + $0xa8] sm:$0x1]
        %v3485 = vld [vmem:[%s2891 + $0xb0] sm:$0xe]
        %v3486 = vld [vmem:[%s2891 + $0xb4] sm:$0xf]
        %v3487 = vld [vmem:[%s2891 + $0xb8] sm:$0x1]
        %v3488 = vld [vmem:[%s2891 + $0xc0] sm:$0xe]
        %v3489 = vld [vmem:[%s2891 + $0xc4] sm:$0xf]
        %v3490 = vld [vmem:[%s2891 + $0xc8] sm:$0x1]
        %v3491 = vld [vmem:[%s2891 + $0xd0] sm:$0xe]
        %v3492 = vld [vmem:[%s2891 + $0xd4] sm:$0xf]
        %v3493 = vld [vmem:[%s2891 + $0xd8] sm:$0x1]
        %v3494 = vld [vmem:[%s2891 + $0xe0] sm:$0xe]
        %v3495 = vld [vmem:[%s2891 + $0xe4] sm:$0xf]
        %v3496 = vld [vmem:[%s2891 + $0xe8] sm:$0x1]
        %v3497 = vld [vmem:[%s2891 + $0xf0] sm:$0xe]
        %v3498 = vld [vmem:[%s2891 + $0xf4] sm:$0xf]
        %v3499 = vld [vmem:[%s2891 + $0xf8] sm:$0x1]
        %v3548 = vrot.slane %v3452, 5
        %v3549 = vrot.slane %v3548, 4
        %v3550 = vrot.slane %v3453, 5
        %v3551 = vsel %vm1882, %v3549, %v3550
        %v3552 = vrot.slane %v3550, 4
        %v3553 = vrot.slane %v3454, 5
        %v3554 = vsel %vm1882, %v3552, %v3553
        %v3555 = vrot.slane %v3455, 5
        %v3556 = vrot.slane %v3555, 4
        %v3557 = vrot.slane %v3456, 5
        %v3558 = vsel %vm1882, %v3556, %v3557
        %v3559 = vrot.slane %v3557, 4
        %v3560 = vrot.slane %v3457, 5
        %v3561 = vsel %vm1882, %v3559, %v3560
        %v3562 = vrot.slane %v3458, 5
        %v3563 = vrot.slane %v3562, 4
        %v3564 = vrot.slane %v3459, 5
        %v3565 = vsel %vm1882, %v3563, %v3564
        %v3566 = vrot.slane %v3564, 4
        %v3567 = vrot.slane %v3460, 5
        %v3568 = vsel %vm1882, %v3566, %v3567
        %v3569 = vrot.slane %v3461, 5
        %v3570 = vrot.slane %v3569, 4
        %v3571 = vrot.slane %v3462, 5
        %v3572 = vsel %vm1882, %v3570, %v3571
        %v3573 = vrot.slane %v3571, 4
        %v3574 = vrot.slane %v3463, 5
        %v3575 = vsel %vm1882, %v3573, %v3574
        %v3576 = vrot.slane %v3464, 5
        %v3577 = vrot.slane %v3576, 4
        %v3578 = vrot.slane %v3465, 5
        %v3579 = vsel %vm1882, %v3577, %v3578
        %v3580 = vrot.slane %v3578, 4
        %v3581 = vrot.slane %v3466, 5
        %v3582 = vsel %vm1882, %v3580, %v3581
        %v3583 = vrot.slane %v3467, 5
        %v3584 = vrot.slane %v3583, 4
        %v3585 = vrot.slane %v3468, 5
        %v3586 = vsel %vm1882, %v3584, %v3585
        %v3587 = vrot.slane %v3585, 4
        %v3588 = vrot.slane %v3469, 5
        %v3589 = vsel %vm1882, %v3587, %v3588
        %v3590 = vrot.slane %v3470, 5
        %v3591 = vrot.slane %v3590, 4
        %v3592 = vrot.slane %v3471, 5
        %v3593 = vsel %vm1882, %v3591, %v3592
        %v3594 = vrot.slane %v3592, 4
        %v3595 = vrot.slane %v3472, 5
        %v3596 = vsel %vm1882, %v3594, %v3595
        %v3597 = vrot.slane %v3473, 5
        %v3598 = vrot.slane %v3597, 4
        %v3599 = vrot.slane %v3474, 5
        %v3600 = vsel %vm1882, %v3598, %v3599
        %v3601 = vrot.slane %v3599, 4
        %v3602 = vrot.slane %v3475, 5
        %v3603 = vsel %vm1882, %v3601, %v3602
        %v3604 = vrot.slane %v3476, 5
        %v3605 = vrot.slane %v3604, 4
        %v3606 = vrot.slane %v3477, 5
        %v3607 = vsel %vm1882, %v3605, %v3606
        %v3608 = vrot.slane %v3606, 4
        %v3609 = vrot.slane %v3478, 5
        %v3610 = vsel %vm1882, %v3608, %v3609
        %v3611 = vrot.slane %v3479, 5
        %v3612 = vrot.slane %v3611, 4
        %v3613 = vrot.slane %v3480, 5
        %v3614 = vsel %vm1882, %v3612, %v3613
        %v3615 = vrot.slane %v3613, 4
        %v3616 = vrot.slane %v3481, 5
        %v3617 = vsel %vm1882, %v3615, %v3616
        %v3618 = vrot.slane %v3482, 5
        %v3619 = vrot.slane %v3618, 4
        %v3620 = vrot.slane %v3483, 5
        %v3621 = vsel %vm1882, %v3619, %v3620
        %v3622 = vrot.slane %v3620, 4
        %v3623 = vrot.slane %v3484, 5
        %v3624 = vsel %vm1882, %v3622, %v3623
        %v3625 = vrot.slane %v3485, 5
        %v3626 = vrot.slane %v3625, 4
        %v3627 = vrot.slane %v3486, 5
        %v3628 = vsel %vm1882, %v3626, %v3627
        %v3629 = vrot.slane %v3627, 4
        %v3630 = vrot.slane %v3487, 5
        %v3631 = vsel %vm1882, %v3629, %v3630
        %v3632 = vrot.slane %v3488, 5
        %v3633 = vrot.slane %v3632, 4
        %v3634 = vrot.slane %v3489, 5
        %v3635 = vsel %vm1882, %v3633, %v3634
        %v3636 = vrot.slane %v3634, 4
        %v3637 = vrot.slane %v3490, 5
        %v3638 = vsel %vm1882, %v3636, %v3637
        %v3639 = vrot.slane %v3491, 5
        %v3640 = vrot.slane %v3639, 4
        %v3641 = vrot.slane %v3492, 5
        %v3642 = vsel %vm1882, %v3640, %v3641
        %v3643 = vrot.slane %v3641, 4
        %v3644 = vrot.slane %v3493, 5
        %v3645 = vsel %vm1882, %v3643, %v3644
        %v3646 = vrot.slane %v3494, 5
        %v3647 = vrot.slane %v3646, 4
        %v3648 = vrot.slane %v3495, 5
        %v3649 = vsel %vm1882, %v3647, %v3648
        %v3650 = vrot.slane %v3648, 4
        %v3651 = vrot.slane %v3496, 5
        %v3652 = vsel %vm1882, %v3650, %v3651
        %v3653 = vrot.slane %v3497, 5
        %v3654 = vrot.slane %v3653, 4
        %v3655 = vrot.slane %v3498, 5
        %v3656 = vsel %vm1882, %v3654, %v3655
        %v3657 = vrot.slane %v3655, 4
        %v3658 = vrot.slane %v3499, 5
        %v3659 = vsel %vm1882, %v3657, %v3658
        %3692 = vst [vmem:[#allocation3 + $0x20] sm:$0xf] %v3551
        %3693 = vst [vmem:[#allocation3 + $0x44] sm:$0xf] %v3554
        %3694 = vst [vmem:[#allocation3 + $0x68] sm:$0xf] %v3558
        %3695 = vst [vmem:[#allocation3 + $0x8c] sm:$0xf] %v3561
        %3696 = vst [vmem:[#allocation3 + $0xb0] sm:$0xf] %v3565
        %3697 = vst [vmem:[#allocation3 + $0xd4] sm:$0xf] %v3568
        %3698 = vst [vmem:[#allocation3 + $0xf8] sm:$0xf] %v3572
        %3699 = vst [vmem:[#allocation3 + $0x11c] sm:$0xf] %v3575
        %3700 = vst [vmem:[#allocation3 + $0x140] sm:$0xf] %v3579
        %3701 = vst [vmem:[#allocation3 + $0x164] sm:$0xf] %v3582
        %3702 = vst [vmem:[#allocation3 + $0x188] sm:$0xf] %v3586
        %3703 = vst [vmem:[#allocation3 + $0x1ac] sm:$0xf] %v3589
        %3704 = vst [vmem:[#allocation3 + $0x1d0] sm:$0xf] %v3593
        %3705 = vst [vmem:[#allocation3 + $0x1f4] sm:$0xf] %v3596
        %3706 = vst [vmem:[#allocation3 + $0x218] sm:$0xf] %v3600
        %3707 = vst [vmem:[#allocation3 + $0x23c] sm:$0xf] %v3603
        %3708 = vst [vmem:[#allocation3 + $0x260] sm:$0xf] %v3607
        %3709 = vst [vmem:[#allocation3 + $0x284] sm:$0xf] %v3610
        %3710 = vst [vmem:[#allocation3 + $0x2a8] sm:$0xf] %v3614
        %3711 = vst [vmem:[#allocation3 + $0x2cc] sm:$0xf] %v3617
        %3712 = vst [vmem:[#allocation3 + $0x2f0] sm:$0xf] %v3621
        %3713 = vst [vmem:[#allocation3 + $0x314] sm:$0xf] %v3624
        %3714 = vst [vmem:[#allocation3 + $0x338] sm:$0xf] %v3628
        %3715 = vst [vmem:[#allocation3 + $0x35c] sm:$0xf] %v3631
        %3716 = vst [vmem:[#allocation3 + $0x380] sm:$0xf] %v3635
        %3717 = vst [vmem:[#allocation3 + $0x3a4] sm:$0xf] %v3638
        %3718 = vst [vmem:[#allocation3 + $0x3c8] sm:$0xf] %v3642
        %3719 = vst [vmem:[#allocation3 + $0x3ec] sm:$0xf] %v3645
        %3720 = vst [vmem:[#allocation3 + $0x410] sm:$0xf] %v3649
        %3721 = vst [vmem:[#allocation3 + $0x434] sm:$0xf] %v3652
        %3722 = vst [vmem:[#allocation3 + $0x458] sm:$0xf] %v3656
        %3723 = vst [vmem:[#allocation3 + $0x47c] sm:$0xf] %v3659
        %v3724 = vld [vmem:[#allocation3] sm:$0xff]
        %v3725 = vld [vmem:[#allocation3 + $0x8] sm:$0xff]
        %v3726 = vld [vmem:[#allocation3 + $0x10] sm:$0xff]
        %v3727 = vld [vmem:[#allocation3 + $0x18] sm:$0xff]
        %v3728 = vld [vmem:[#allocation3 + $0x20] sm:$0xf]
        %v3729 = vld [vmem:[#allocation3 + $0x24] sm:$0xff]
        %v3730 = vld [vmem:[#allocation3 + $0x2c] sm:$0xff]
        %v3731 = vld [vmem:[#allocation3 + $0x34] sm:$0xff]
        %v3732 = vld [vmem:[#allocation3 + $0x3c] sm:$0xff]
        %v3733 = vld [vmem:[#allocation3 + $0x44] sm:$0xf]
        %v3734 = vld [vmem:[#allocation3 + $0x48] sm:$0xff]
        %v3735 = vld [vmem:[#allocation3 + $0x50] sm:$0xff]
        %v3736 = vld [vmem:[#allocation3 + $0x58] sm:$0xff]
        %v3737 = vld [vmem:[#allocation3 + $0x60] sm:$0xff]
        %v3738 = vld [vmem:[#allocation3 + $0x68] sm:$0xf]
        %v3739 = vld [vmem:[#allocation3 + $0x6c] sm:$0xff]
        %v3740 = vld [vmem:[#allocation3 + $0x74] sm:$0xff]
        %v3741 = vld [vmem:[#allocation3 + $0x7c] sm:$0xff]
        %v3742 = vld [vmem:[#allocation3 + $0x84] sm:$0xff]
        %v3743 = vld [vmem:[#allocation3 + $0x8c] sm:$0xf]
        %v3744 = vld [vmem:[#allocation3 + $0x90] sm:$0xff]
        %v3745 = vld [vmem:[#allocation3 + $0x98] sm:$0xff]
        %v3746 = vld [vmem:[#allocation3 + $0xa0] sm:$0xff]
        %v3747 = vld [vmem:[#allocation3 + $0xa8] sm:$0xff]
        %v3748 = vld [vmem:[#allocation3 + $0xb0] sm:$0xf]
        %v3749 = vld [vmem:[#allocation3 + $0xb4] sm:$0xff]
        %v3750 = vld [vmem:[#allocation3 + $0xbc] sm:$0xff]
        %v3751 = vld [vmem:[#allocation3 + $0xc4] sm:$0xff]
        %v3752 = vld [vmem:[#allocation3 + $0xcc] sm:$0xff]
        %v3753 = vld [vmem:[#allocation3 + $0xd4] sm:$0xf]
        %v3754 = vld [vmem:[#allocation3 + $0xd8] sm:$0xff]
        %v3755 = vld [vmem:[#allocation3 + $0xe0] sm:$0xff]
        %v3756 = vld [vmem:[#allocation3 + $0xe8] sm:$0xff]
        %v3757 = vld [vmem:[#allocation3 + $0xf0] sm:$0xff]
        %v3758 = vld [vmem:[#allocation3 + $0xf8] sm:$0xf]
        %v3759 = vld [vmem:[#allocation3 + $0xfc] sm:$0xff]
        %v3760 = vld [vmem:[#allocation3 + $0x104] sm:$0xff]
        %v3761 = vld [vmem:[#allocation3 + $0x10c] sm:$0xff]
        %v3762 = vld [vmem:[#allocation3 + $0x114] sm:$0xff]
        %v3763 = vld [vmem:[#allocation3 + $0x11c] sm:$0xf]
        %v3764 = vld [vmem:[#allocation3 + $0x120] sm:$0xff]
        %v3765 = vld [vmem:[#allocation3 + $0x128] sm:$0xff]
        %v3766 = vld [vmem:[#allocation3 + $0x130] sm:$0xff]
        %v3767 = vld [vmem:[#allocation3 + $0x138] sm:$0xff]
        %v3768 = vld [vmem:[#allocation3 + $0x140] sm:$0xf]
        %v3769 = vld [vmem:[#allocation3 + $0x144] sm:$0xff]
        %v3770 = vld [vmem:[#allocation3 + $0x14c] sm:$0xff]
        %v3771 = vld [vmem:[#allocation3 + $0x154] sm:$0xff]
        %v3772 = vld [vmem:[#allocation3 + $0x15c] sm:$0xff]
        %v3773 = vld [vmem:[#allocation3 + $0x164] sm:$0xf]
        %v3774 = vld [vmem:[#allocation3 + $0x168] sm:$0xff]
        %v3775 = vld [vmem:[#allocation3 + $0x170] sm:$0xff]
        %v3776 = vld [vmem:[#allocation3 + $0x178] sm:$0xff]
        %v3777 = vld [vmem:[#allocation3 + $0x180] sm:$0xff]
        %v3778 = vld [vmem:[#allocation3 + $0x188] sm:$0xf]
        %v3779 = vld [vmem:[#allocation3 + $0x18c] sm:$0xff]
        %v3780 = vld [vmem:[#allocation3 + $0x194] sm:$0xff]
        %v3781 = vld [vmem:[#allocation3 + $0x19c] sm:$0xff]
        %v3782 = vld [vmem:[#allocation3 + $0x1a4] sm:$0xff]
        %v3783 = vld [vmem:[#allocation3 + $0x1ac] sm:$0xf]
        %v3784 = vld [vmem:[#allocation3 + $0x1b0] sm:$0xff]
        %v3785 = vld [vmem:[#allocation3 + $0x1b8] sm:$0xff]
        %v3786 = vld [vmem:[#allocation3 + $0x1c0] sm:$0xff]
        %v3787 = vld [vmem:[#allocation3 + $0x1c8] sm:$0xff]
        %v3788 = vld [vmem:[#allocation3 + $0x1d0] sm:$0xf]
        %v3789 = vld [vmem:[#allocation3 + $0x1d4] sm:$0xff]
        %v3790 = vld [vmem:[#allocation3 + $0x1dc] sm:$0xff]
        %v3791 = vld [vmem:[#allocation3 + $0x1e4] sm:$0xff]
        %v3792 = vld [vmem:[#allocation3 + $0x1ec] sm:$0xff]
        %v3793 = vld [vmem:[#allocation3 + $0x1f4] sm:$0xf]
        %v3794 = vld [vmem:[#allocation3 + $0x1f8] sm:$0xff]
        %v3795 = vld [vmem:[#allocation3 + $0x200] sm:$0xff]
        %v3796 = vld [vmem:[#allocation3 + $0x208] sm:$0xff]
        %v3797 = vld [vmem:[#allocation3 + $0x210] sm:$0xff]
        %v3798 = vld [vmem:[#allocation3 + $0x218] sm:$0xf]
        %v3799 = vld [vmem:[#allocation3 + $0x21c] sm:$0xff]
        %v3800 = vld [vmem:[#allocation3 + $0x224] sm:$0xff]
        %v3801 = vld [vmem:[#allocation3 + $0x22c] sm:$0xff]
        %v3802 = vld [vmem:[#allocation3 + $0x234] sm:$0xff]
        %v3803 = vld [vmem:[#allocation3 + $0x23c] sm:$0xf]
        %v3804 = vld [vmem:[#allocation3 + $0x240] sm:$0xff]
        %v3805 = vld [vmem:[#allocation3 + $0x248] sm:$0xff]
        %v3806 = vld [vmem:[#allocation3 + $0x250] sm:$0xff]
        %v3807 = vld [vmem:[#allocation3 + $0x258] sm:$0xff]
        %v3808 = vld [vmem:[#allocation3 + $0x260] sm:$0xf]
        %v3809 = vld [vmem:[#allocation3 + $0x264] sm:$0xff]
        %v3810 = vld [vmem:[#allocation3 + $0x26c] sm:$0xff]
        %v3811 = vld [vmem:[#allocation3 + $0x274] sm:$0xff]
        %v3812 = vld [vmem:[#allocation3 + $0x27c] sm:$0xff]
        %v3813 = vld [vmem:[#allocation3 + $0x284] sm:$0xf]
        %v3814 = vld [vmem:[#allocation3 + $0x288] sm:$0xff]
        %v3815 = vld [vmem:[#allocation3 + $0x290] sm:$0xff]
        %v3816 = vld [vmem:[#allocation3 + $0x298] sm:$0xff]
        %v3817 = vld [vmem:[#allocation3 + $0x2a0] sm:$0xff]
        %v3818 = vld [vmem:[#allocation3 + $0x2a8] sm:$0xf]
        %v3819 = vld [vmem:[#allocation3 + $0x2ac] sm:$0xff]
        %v3820 = vld [vmem:[#allocation3 + $0x2b4] sm:$0xff]
        %v3821 = vld [vmem:[#allocation3 + $0x2bc] sm:$0xff]
        %v3822 = vld [vmem:[#allocation3 + $0x2c4] sm:$0xff]
        %v3823 = vld [vmem:[#allocation3 + $0x2cc] sm:$0xf]
        %v3824 = vld [vmem:[#allocation3 + $0x2d0] sm:$0xff]
        %v3825 = vld [vmem:[#allocation3 + $0x2d8] sm:$0xff]
        %v3826 = vld [vmem:[#allocation3 + $0x2e0] sm:$0xff]
        %v3827 = vld [vmem:[#allocation3 + $0x2e8] sm:$0xff]
        %v3828 = vld [vmem:[#allocation3 + $0x2f0] sm:$0xf]
        %v3829 = vld [vmem:[#allocation3 + $0x2f4] sm:$0xff]
        %v3830 = vld [vmem:[#allocation3 + $0x2fc] sm:$0xff]
        %v3831 = vld [vmem:[#allocation3 + $0x304] sm:$0xff]
        %v3832 = vld [vmem:[#allocation3 + $0x30c] sm:$0xff]
        %v3833 = vld [vmem:[#allocation3 + $0x314] sm:$0xf]
        %v3834 = vld [vmem:[#allocation3 + $0x318] sm:$0xff]
        %v3835 = vld [vmem:[#allocation3 + $0x320] sm:$0xff]
        %v3836 = vld [vmem:[#allocation3 + $0x328] sm:$0xff]
        %v3837 = vld [vmem:[#allocation3 + $0x330] sm:$0xff]
        %v3838 = vld [vmem:[#allocation3 + $0x338] sm:$0xf]
        %v3839 = vld [vmem:[#allocation3 + $0x33c] sm:$0xff]
        %v3840 = vld [vmem:[#allocation3 + $0x344] sm:$0xff]
        %v3841 = vld [vmem:[#allocation3 + $0x34c] sm:$0xff]
        %v3842 = vld [vmem:[#allocation3 + $0x354] sm:$0xff]
        %v3843 = vld [vmem:[#allocation3 + $0x35c] sm:$0xf]
        %v3844 = vld [vmem:[#allocation3 + $0x360] sm:$0xff]
        %v3845 = vld [vmem:[#allocation3 + $0x368] sm:$0xff]
        %v3846 = vld [vmem:[#allocation3 + $0x370] sm:$0xff]
        %v3847 = vld [vmem:[#allocation3 + $0x378] sm:$0xff]
        %v3848 = vld [vmem:[#allocation3 + $0x380] sm:$0xf]
        %v3849 = vld [vmem:[#allocation3 + $0x384] sm:$0xff]
        %v3850 = vld [vmem:[#allocation3 + $0x38c] sm:$0xff]
        %v3851 = vld [vmem:[#allocation3 + $0x394] sm:$0xff]
        %v3852 = vld [vmem:[#allocation3 + $0x39c] sm:$0xff]
        %v3853 = vld [vmem:[#allocation3 + $0x3a4] sm:$0xf]
        %v3854 = vld [vmem:[#allocation3 + $0x3a8] sm:$0xff]
        %v3855 = vld [vmem:[#allocation3 + $0x3b0] sm:$0xff]
        %v3856 = vld [vmem:[#allocation3 + $0x3b8] sm:$0xff]
        %v3857 = vld [vmem:[#allocation3 + $0x3c0] sm:$0xff]
        %v3858 = vld [vmem:[#allocation3 + $0x3c8] sm:$0xf]
        %v3859 = vld [vmem:[#allocation3 + $0x3cc] sm:$0xff]
        %v3860 = vld [vmem:[#allocation3 + $0x3d4] sm:$0xff]
        %v3861 = vld [vmem:[#allocation3 + $0x3dc] sm:$0xff]
        %v3862 = vld [vmem:[#allocation3 + $0x3e4] sm:$0xff]
        %v3863 = vld [vmem:[#allocation3 + $0x3ec] sm:$0xf]
        %v3864 = vld [vmem:[#allocation3 + $0x3f0] sm:$0xff]
        %v3865 = vld [vmem:[#allocation3 + $0x3f8] sm:$0xff]
        %v3866 = vld [vmem:[#allocation3 + $0x400] sm:$0xff]
        %v3867 = vld [vmem:[#allocation3 + $0x408] sm:$0xff]
        %v3868 = vld [vmem:[#allocation3 + $0x410] sm:$0xf]
        %v3869 = vld [vmem:[#allocation3 + $0x414] sm:$0xff]
        %v3870 = vld [vmem:[#allocation3 + $0x41c] sm:$0xff]
        %v3871 = vld [vmem:[#allocation3 + $0x424] sm:$0xff]
        %v3872 = vld [vmem:[#allocation3 + $0x42c] sm:$0xff]
        %v3873 = vld [vmem:[#allocation3 + $0x434] sm:$0xf]
        %v3874 = vld [vmem:[#allocation3 + $0x438] sm:$0xff]
        %v3875 = vld [vmem:[#allocation3 + $0x440] sm:$0xff]
        %v3876 = vld [vmem:[#allocation3 + $0x448] sm:$0xff]
        %v3877 = vld [vmem:[#allocation3 + $0x450] sm:$0xff]
        %v3878 = vld [vmem:[#allocation3 + $0x458] sm:$0xf]
        %v3879 = vld [vmem:[#allocation3 + $0x45c] sm:$0xff]
        %v3880 = vld [vmem:[#allocation3 + $0x464] sm:$0xff]
        %v3881 = vld [vmem:[#allocation3 + $0x46c] sm:$0xff]
        %v3882 = vld [vmem:[#allocation3 + $0x474] sm:$0xff]
        %v3883 = vld [vmem:[#allocation3 + $0x47c] sm:$0xf]
        %v3884 = vld [vmem:[#allocation4] sm:$0xf]
        %v3885 = vld [vmem:[#allocation4 + $0x4] sm:$0xf]
        %v3886 = vld [vmem:[#allocation4 + $0x8] sm:$0xf]
        %v3887 = vld [vmem:[#allocation4 + $0xc] sm:$0xf]
        %v3888 = vld [vmem:[#allocation4 + $0x10] sm:$0xf]
        %v3889 = vld [vmem:[#allocation4 + $0x14] sm:$0xf]
        %v3890 = vld [vmem:[#allocation4 + $0x18] sm:$0xf]
        %v3891 = vld [vmem:[#allocation4 + $0x1c] sm:$0xf]
        %v3892 = vld [vmem:[#allocation4 + $0x20] sm:$0xf]
        %v3893 = vld [vmem:[#allocation4 + $0x24] sm:$0xf]
        %v3894 = vld [vmem:[#allocation4 + $0x28] sm:$0xf]
        %v3895 = vld [vmem:[#allocation4 + $0x2c] sm:$0xf]
        %v3896 = vld [vmem:[#allocation4 + $0x30] sm:$0xf]
        %v3897 = vld [vmem:[#allocation4 + $0x34] sm:$0xf]
        %v3898 = vld [vmem:[#allocation4 + $0x38] sm:$0xf]
        %v3899 = vld [vmem:[#allocation4 + $0x3c] sm:$0xf]
        %v3900 = vld [vmem:[#allocation4 + $0x40] sm:$0xf]
        %v3901 = vld [vmem:[#allocation4 + $0x44] sm:$0xf]
        %v3902 = vld [vmem:[#allocation4 + $0x48] sm:$0xf]
        %v3903 = vld [vmem:[#allocation4 + $0x4c] sm:$0xf]
        %v3904 = vld [vmem:[#allocation4 + $0x50] sm:$0xf]
        %v3905 = vld [vmem:[#allocation4 + $0x54] sm:$0xf]
        %v3906 = vld [vmem:[#allocation4 + $0x58] sm:$0xf]
        %v3907 = vld [vmem:[#allocation4 + $0x5c] sm:$0xf]
        %v3908 = vld [vmem:[#allocation4 + $0x60] sm:$0xf]
        %v3909 = vld [vmem:[#allocation4 + $0x64] sm:$0xf]
        %v3910 = vld [vmem:[#allocation4 + $0x68] sm:$0xf]
        %v3911 = vld [vmem:[#allocation4 + $0x6c] sm:$0xf]
        %v3912 = vld [vmem:[#allocation4 + $0x70] sm:$0xf]
        %v3913 = vld [vmem:[#allocation4 + $0x74] sm:$0xf]
        %v3914 = vld [vmem:[#allocation4 + $0x78] sm:$0xf]
        %v3915 = vld [vmem:[#allocation4 + $0x7c] sm:$0xf]
        %v3916 = vld [vmem:[#allocation4 + $0x80] sm:$0xf]
        %v3917 = vld [vmem:[#allocation4 + $0x84] sm:$0xf]
        %v3918 = vld [vmem:[#allocation4 + $0x88] sm:$0xf]
        %v3919 = vld [vmem:[#allocation4 + $0x8c] sm:$0xf]
        %v3920 = vld [vmem:[#allocation4 + $0x90] sm:$0xf]
        %v3921 = vld [vmem:[#allocation4 + $0x94] sm:$0xf]
        %v3922 = vld [vmem:[#allocation4 + $0x98] sm:$0xf]
        %v3923 = vld [vmem:[#allocation4 + $0x9c] sm:$0xf]
        %v3924 = vld [vmem:[#allocation4 + $0xa0] sm:$0xf]
        %v3925 = vld [vmem:[#allocation4 + $0xa4] sm:$0xf]
        %v3926 = vld [vmem:[#allocation4 + $0xa8] sm:$0xf]
        %v3927 = vld [vmem:[#allocation4 + $0xac] sm:$0xf]
        %v3928 = vld [vmem:[#allocation4 + $0xb0] sm:$0xf]
        %v3929 = vld [vmem:[#allocation4 + $0xb4] sm:$0xf]
        %v3930 = vld [vmem:[#allocation4 + $0xb8] sm:$0xf]
        %v3931 = vld [vmem:[#allocation4 + $0xbc] sm:$0xf]
        %v3932 = vld [vmem:[#allocation4 + $0xc0] sm:$0xf]
        %v3933 = vld [vmem:[#allocation4 + $0xc4] sm:$0xf]
        %v3934 = vld [vmem:[#allocation4 + $0xc8] sm:$0xf]
        %v3935 = vld [vmem:[#allocation4 + $0xcc] sm:$0xf]
        %v3936 = vld [vmem:[#allocation4 + $0xd0] sm:$0xf]
        %v3937 = vld [vmem:[#allocation4 + $0xd4] sm:$0xf]
        %v3938 = vld [vmem:[#allocation4 + $0xd8] sm:$0xf]
        %v3939 = vld [vmem:[#allocation4 + $0xdc] sm:$0xf]
        %v3940 = vld [vmem:[#allocation4 + $0xe0] sm:$0xf]
        %v3941 = vld [vmem:[#allocation4 + $0xe4] sm:$0xf]
        %v3942 = vld [vmem:[#allocation4 + $0xe8] sm:$0xf]
        %v3943 = vld [vmem:[#allocation4 + $0xec] sm:$0xf]
        %v3944 = vld [vmem:[#allocation4 + $0xf0] sm:$0xf]
        %v3945 = vld [vmem:[#allocation4 + $0xf4] sm:$0xf]
        %v3946 = vld [vmem:[#allocation4 + $0xf8] sm:$0xf]
        %v3947 = vld [vmem:[#allocation4 + $0xfc] sm:$0xf]
        %v3948 = vld [vmem:[#allocation4 + $0x100] sm:$0xf]
        %v3949 = vld [vmem:[#allocation4 + $0x104] sm:$0xf]
        %v3950 = vld [vmem:[#allocation4 + $0x108] sm:$0xf]
        %v3951 = vld [vmem:[#allocation4 + $0x10c] sm:$0xf]
        %v3952 = vld [vmem:[#allocation4 + $0x110] sm:$0xf]
        %v3953 = vld [vmem:[#allocation4 + $0x114] sm:$0xf]
        %v3954 = vld [vmem:[#allocation4 + $0x118] sm:$0xf]
        %v3955 = vld [vmem:[#allocation4 + $0x11c] sm:$0xf]
        %v3956 = vld [vmem:[#allocation4 + $0x120] sm:$0xf]
        %v3957 = vld [vmem:[#allocation4 + $0x124] sm:$0xf]
        %v3958 = vld [vmem:[#allocation4 + $0x128] sm:$0xf]
        %v3959 = vld [vmem:[#allocation4 + $0x12c] sm:$0xf]
        %v3960 = vld [vmem:[#allocation4 + $0x130] sm:$0xf]
        %v3961 = vld [vmem:[#allocation4 + $0x134] sm:$0xf]
        %v3962 = vld [vmem:[#allocation4 + $0x138] sm:$0xf]
        %v3963 = vld [vmem:[#allocation4 + $0x13c] sm:$0xf]
        %v3964 = vld [vmem:[#allocation4 + $0x140] sm:$0xf]
        %v3965 = vld [vmem:[#allocation4 + $0x144] sm:$0xf]
        %v3966 = vld [vmem:[#allocation4 + $0x148] sm:$0xf]
        %v3967 = vld [vmem:[#allocation4 + $0x14c] sm:$0xf]
        %v3968 = vld [vmem:[#allocation4 + $0x150] sm:$0xf]
        %v3969 = vld [vmem:[#allocation4 + $0x154] sm:$0xf]
        %v3970 = vld [vmem:[#allocation4 + $0x158] sm:$0xf]
        %v3971 = vld [vmem:[#allocation4 + $0x15c] sm:$0xf]
        %v3972 = vld [vmem:[#allocation4 + $0x160] sm:$0xf]
        %v3973 = vld [vmem:[#allocation4 + $0x164] sm:$0xf]
        %v3974 = vld [vmem:[#allocation4 + $0x168] sm:$0xf]
        %v3975 = vld [vmem:[#allocation4 + $0x16c] sm:$0xf]
        %v3976 = vld [vmem:[#allocation4 + $0x170] sm:$0xf]
        %v3977 = vld [vmem:[#allocation4 + $0x174] sm:$0xf]
        %v3978 = vld [vmem:[#allocation4 + $0x178] sm:$0xf]
        %v3979 = vld [vmem:[#allocation4 + $0x17c] sm:$0xf]
        %v3980 = vld [vmem:[#allocation4 + $0x180] sm:$0xf]
        %v3981 = vld [vmem:[#allocation4 + $0x184] sm:$0xf]
        %v3982 = vld [vmem:[#allocation4 + $0x188] sm:$0xf]
        %v3983 = vld [vmem:[#allocation4 + $0x18c] sm:$0xf]
        %v3984 = vld [vmem:[#allocation4 + $0x190] sm:$0xf]
        %v3985 = vld [vmem:[#allocation4 + $0x194] sm:$0xf]
        %v3986 = vld [vmem:[#allocation4 + $0x198] sm:$0xf]
        %v3987 = vld [vmem:[#allocation4 + $0x19c] sm:$0xf]
        %v3988 = vld [vmem:[#allocation4 + $0x1a0] sm:$0xf]
        %v3989 = vld [vmem:[#allocation4 + $0x1a4] sm:$0xf]
        %v3990 = vld [vmem:[#allocation4 + $0x1a8] sm:$0xf]
        %v3991 = vld [vmem:[#allocation4 + $0x1ac] sm:$0xf]
        %v3992 = vld [vmem:[#allocation4 + $0x1b0] sm:$0xf]
        %v3993 = vld [vmem:[#allocation4 + $0x1b4] sm:$0xf]
        %v3994 = vld [vmem:[#allocation4 + $0x1b8] sm:$0xf]
        %v3995 = vld [vmem:[#allocation4 + $0x1bc] sm:$0xf]
        %v3996 = vld [vmem:[#allocation4 + $0x1c0] sm:$0xf]
        %v3997 = vld [vmem:[#allocation4 + $0x1c4] sm:$0xf]
        %v3998 = vld [vmem:[#allocation4 + $0x1c8] sm:$0xf]
        %v3999 = vld [vmem:[#allocation4 + $0x1cc] sm:$0xf]
        %v4000 = vld [vmem:[#allocation4 + $0x1d0] sm:$0xf]
        %v4001 = vld [vmem:[#allocation4 + $0x1d4] sm:$0xf]
        %v4002 = vld [vmem:[#allocation4 + $0x1d8] sm:$0xf]
        %v4003 = vld [vmem:[#allocation4 + $0x1dc] sm:$0xf]
        %v4004 = vld [vmem:[#allocation4 + $0x1e0] sm:$0xf]
        %v4005 = vld [vmem:[#allocation4 + $0x1e4] sm:$0xf]
        %v4006 = vld [vmem:[#allocation4 + $0x1e8] sm:$0xf]
        %v4007 = vld [vmem:[#allocation4 + $0x1ec] sm:$0xf]
        %v4008 = vld [vmem:[#allocation4 + $0x1f0] sm:$0xf]
        %v4009 = vld [vmem:[#allocation4 + $0x1f4] sm:$0xf]
        %v4010 = vld [vmem:[#allocation4 + $0x1f8] sm:$0xf]
        %v4011 = vld [vmem:[#allocation4 + $0x1fc] sm:$0xf]
        %v4012 = vld [vmem:[#allocation4 + $0x200] sm:$0xf]
        %v4013 = vld [vmem:[#allocation4 + $0x204] sm:$0xf]
        %v4014 = vld [vmem:[#allocation4 + $0x208] sm:$0xf]
        %v4015 = vld [vmem:[#allocation4 + $0x20c] sm:$0xf]
        %v4016 = vld [vmem:[#allocation4 + $0x210] sm:$0xf]
        %v4017 = vld [vmem:[#allocation4 + $0x214] sm:$0xf]
        %v4018 = vld [vmem:[#allocation4 + $0x218] sm:$0xf]
        %v4019 = vld [vmem:[#allocation4 + $0x21c] sm:$0xf]
        %v4020 = vld [vmem:[#allocation4 + $0x220] sm:$0xf]
        %v4021 = vld [vmem:[#allocation4 + $0x224] sm:$0xf]
        %v4022 = vld [vmem:[#allocation4 + $0x228] sm:$0xf]
        %v4023 = vld [vmem:[#allocation4 + $0x22c] sm:$0xf]
        %v4024 = vld [vmem:[#allocation4 + $0x230] sm:$0xf]
        %v4025 = vld [vmem:[#allocation4 + $0x234] sm:$0xf]
        %v4026 = vld [vmem:[#allocation4 + $0x238] sm:$0xf]
        %v4027 = vld [vmem:[#allocation4 + $0x23c] sm:$0xf]
        %v4028 = vld [vmem:[%s4] sm:$0x1]
        %v4030 = vperm.slane %v4028, 0
        %v4192 = vunpack.c.l.b16 %v3724
        %v4193 = vunpack.c.h.b16 %v3724
        %v4194 = vunpack.c.l.b16 %v3725
        %v4195 = vunpack.c.h.b16 %v3725
        %v4196 = vunpack.c.l.b16 %v3726
        %v4197 = vunpack.c.h.b16 %v3726
        %v4198 = vunpack.c.l.b16 %v3727
        %v4199 = vunpack.c.h.b16 %v3727
        %v4200 = vunpack.c.l.b16 %v3728
        %v4201 = vunpack.c.l.b16 %v3729
        %v4202 = vunpack.c.h.b16 %v3729
        %v4203 = vunpack.c.l.b16 %v3730
        %v4204 = vunpack.c.h.b16 %v3730
        %v4205 = vunpack.c.l.b16 %v3731
        %v4206 = vunpack.c.h.b16 %v3731
        %v4207 = vunpack.c.l.b16 %v3732
        %v4208 = vunpack.c.h.b16 %v3732
        %v4209 = vunpack.c.l.b16 %v3733
        %v4210 = vunpack.c.l.b16 %v3734
        %v4211 = vunpack.c.h.b16 %v3734
        %v4212 = vunpack.c.l.b16 %v3735
        %v4213 = vunpack.c.h.b16 %v3735
        %v4214 = vunpack.c.l.b16 %v3736
        %v4215 = vunpack.c.h.b16 %v3736
        %v4216 = vunpack.c.l.b16 %v3737
        %v4217 = vunpack.c.h.b16 %v3737
        %v4218 = vunpack.c.l.b16 %v3738
        %v4219 = vunpack.c.l.b16 %v3739
        %v4220 = vunpack.c.h.b16 %v3739
        %v4221 = vunpack.c.l.b16 %v3740
        %v4222 = vunpack.c.h.b16 %v3740
        %v4223 = vunpack.c.l.b16 %v3741
        %v4224 = vunpack.c.h.b16 %v3741
        %v4225 = vunpack.c.l.b16 %v3742
        %v4226 = vunpack.c.h.b16 %v3742
        %v4227 = vunpack.c.l.b16 %v3743
        %v4228 = vunpack.c.l.b16 %v3744
        %v4229 = vunpack.c.h.b16 %v3744
        %v4230 = vunpack.c.l.b16 %v3745
        %v4231 = vunpack.c.h.b16 %v3745
        %v4232 = vunpack.c.l.b16 %v3746
        %v4233 = vunpack.c.h.b16 %v3746
        %v4234 = vunpack.c.l.b16 %v3747
        %v4235 = vunpack.c.h.b16 %v3747
        %v4236 = vunpack.c.l.b16 %v3748
        %v4237 = vunpack.c.l.b16 %v3749
        %v4238 = vunpack.c.h.b16 %v3749
        %v4239 = vunpack.c.l.b16 %v3750
        %v4240 = vunpack.c.h.b16 %v3750
        %v4241 = vunpack.c.l.b16 %v3751
        %v4242 = vunpack.c.h.b16 %v3751
        %v4243 = vunpack.c.l.b16 %v3752
        %v4244 = vunpack.c.h.b16 %v3752
        %v4245 = vunpack.c.l.b16 %v3753
        %v4246 = vunpack.c.l.b16 %v3754
        %v4247 = vunpack.c.h.b16 %v3754
        %v4248 = vunpack.c.l.b16 %v3755
        %v4249 = vunpack.c.h.b16 %v3755
        %v4250 = vunpack.c.l.b16 %v3756
        %v4251 = vunpack.c.h.b16 %v3756
        %v4252 = vunpack.c.l.b16 %v3757
        %v4253 = vunpack.c.h.b16 %v3757
        %v4254 = vunpack.c.l.b16 %v3758
        %v4255 = vunpack.c.l.b16 %v3759
        %v4256 = vunpack.c.h.b16 %v3759
        %v4257 = vunpack.c.l.b16 %v3760
        %v4258 = vunpack.c.h.b16 %v3760
        %v4259 = vunpack.c.l.b16 %v3761
        %v4260 = vunpack.c.h.b16 %v3761
        %v4261 = vunpack.c.l.b16 %v3762
        %v4262 = vunpack.c.h.b16 %v3762
        %v4263 = vunpack.c.l.b16 %v3763
        %v4264 = vunpack.c.l.b16 %v3764
        %v4265 = vunpack.c.h.b16 %v3764
        %v4266 = vunpack.c.l.b16 %v3765
        %v4267 = vunpack.c.h.b16 %v3765
        %v4268 = vunpack.c.l.b16 %v3766
        %v4269 = vunpack.c.h.b16 %v3766
        %v4270 = vunpack.c.l.b16 %v3767
        %v4271 = vunpack.c.h.b16 %v3767
        %v4272 = vunpack.c.l.b16 %v3768
        %v4273 = vunpack.c.l.b16 %v3769
        %v4274 = vunpack.c.h.b16 %v3769
        %v4275 = vunpack.c.l.b16 %v3770
        %v4276 = vunpack.c.h.b16 %v3770
        %v4277 = vunpack.c.l.b16 %v3771
        %v4278 = vunpack.c.h.b16 %v3771
        %v4279 = vunpack.c.l.b16 %v3772
        %v4280 = vunpack.c.h.b16 %v3772
        %v4281 = vunpack.c.l.b16 %v3773
        %v4282 = vunpack.c.l.b16 %v3774
        %v4283 = vunpack.c.h.b16 %v3774
        %v4284 = vunpack.c.l.b16 %v3775
        %v4285 = vunpack.c.h.b16 %v3775
        %v4286 = vunpack.c.l.b16 %v3776
        %v4287 = vunpack.c.h.b16 %v3776
        %v4288 = vunpack.c.l.b16 %v3777
        %v4289 = vunpack.c.h.b16 %v3777
        %v4290 = vunpack.c.l.b16 %v3778
        %v4291 = vunpack.c.l.b16 %v3779
        %v4292 = vunpack.c.h.b16 %v3779
        %v4293 = vunpack.c.l.b16 %v3780
        %v4294 = vunpack.c.h.b16 %v3780
        %v4295 = vunpack.c.l.b16 %v3781
        %v4296 = vunpack.c.h.b16 %v3781
        %v4297 = vunpack.c.l.b16 %v3782
        %v4298 = vunpack.c.h.b16 %v3782
        %v4299 = vunpack.c.l.b16 %v3783
        %v4300 = vunpack.c.l.b16 %v3784
        %v4301 = vunpack.c.h.b16 %v3784
        %v4302 = vunpack.c.l.b16 %v3785
        %v4303 = vunpack.c.h.b16 %v3785
        %v4304 = vunpack.c.l.b16 %v3786
        %v4305 = vunpack.c.h.b16 %v3786
        %v4306 = vunpack.c.l.b16 %v3787
        %v4307 = vunpack.c.h.b16 %v3787
        %v4308 = vunpack.c.l.b16 %v3788
        %v4309 = vunpack.c.l.b16 %v3789
        %v4310 = vunpack.c.h.b16 %v3789
        %v4311 = vunpack.c.l.b16 %v3790
        %v4312 = vunpack.c.h.b16 %v3790
        %v4313 = vunpack.c.l.b16 %v3791
        %v4314 = vunpack.c.h.b16 %v3791
        %v4315 = vunpack.c.l.b16 %v3792
        %v4316 = vunpack.c.h.b16 %v3792
        %v4317 = vunpack.c.l.b16 %v3793
        %v4318 = vunpack.c.l.b16 %v3794
        %v4319 = vunpack.c.h.b16 %v3794
        %v4320 = vunpack.c.l.b16 %v3795
        %v4321 = vunpack.c.h.b16 %v3795
        %v4322 = vunpack.c.l.b16 %v3796
        %v4323 = vunpack.c.h.b16 %v3796
        %v4324 = vunpack.c.l.b16 %v3797
        %v4325 = vunpack.c.h.b16 %v3797
        %v4326 = vunpack.c.l.b16 %v3798
        %v4327 = vunpack.c.l.b16 %v3799
        %v4328 = vunpack.c.h.b16 %v3799
        %v4329 = vunpack.c.l.b16 %v3800
        %v4330 = vunpack.c.h.b16 %v3800
        %v4331 = vunpack.c.l.b16 %v3801
        %v4332 = vunpack.c.h.b16 %v3801
        %v4333 = vunpack.c.l.b16 %v3802
        %v4334 = vunpack.c.h.b16 %v3802
        %v4335 = vunpack.c.l.b16 %v3803
        %v4336 = vunpack.c.l.b16 %v3804
        %v4337 = vunpack.c.h.b16 %v3804
        %v4338 = vunpack.c.l.b16 %v3805
        %v4339 = vunpack.c.h.b16 %v3805
        %v4340 = vunpack.c.l.b16 %v3806
        %v4341 = vunpack.c.h.b16 %v3806
        %v4342 = vunpack.c.l.b16 %v3807
        %v4343 = vunpack.c.h.b16 %v3807
        %v4344 = vunpack.c.l.b16 %v3808
        %v4345 = vunpack.c.l.b16 %v3809
        %v4346 = vunpack.c.h.b16 %v3809
        %v4347 = vunpack.c.l.b16 %v3810
        %v4348 = vunpack.c.h.b16 %v3810
        %v4349 = vunpack.c.l.b16 %v3811
        %v4350 = vunpack.c.h.b16 %v3811
        %v4351 = vunpack.c.l.b16 %v3812
        %v4352 = vunpack.c.h.b16 %v3812
        %v4353 = vunpack.c.l.b16 %v3813
        %v4354 = vunpack.c.l.b16 %v3814
        %v4355 = vunpack.c.h.b16 %v3814
        %v4356 = vunpack.c.l.b16 %v3815
        %v4357 = vunpack.c.h.b16 %v3815
        %v4358 = vunpack.c.l.b16 %v3816
        %v4359 = vunpack.c.h.b16 %v3816
        %v4360 = vunpack.c.l.b16 %v3817
        %v4361 = vunpack.c.h.b16 %v3817
        %v4362 = vunpack.c.l.b16 %v3818
        %v4363 = vunpack.c.l.b16 %v3819
        %v4364 = vunpack.c.h.b16 %v3819
        %v4365 = vunpack.c.l.b16 %v3820
        %v4366 = vunpack.c.h.b16 %v3820
        %v4367 = vunpack.c.l.b16 %v3821
        %v4368 = vunpack.c.h.b16 %v3821
        %v4369 = vunpack.c.l.b16 %v3822
        %v4370 = vunpack.c.h.b16 %v3822
        %v4371 = vunpack.c.l.b16 %v3823
        %v4372 = vunpack.c.l.b16 %v3824
        %v4373 = vunpack.c.h.b16 %v3824
        %v4374 = vunpack.c.l.b16 %v3825
        %v4375 = vunpack.c.h.b16 %v3825
        %v4376 = vunpack.c.l.b16 %v3826
        %v4377 = vunpack.c.h.b16 %v3826
        %v4378 = vunpack.c.l.b16 %v3827
        %v4379 = vunpack.c.h.b16 %v3827
        %v4380 = vunpack.c.l.b16 %v3828
        %v4381 = vunpack.c.l.b16 %v3829
        %v4382 = vunpack.c.h.b16 %v3829
        %v4383 = vunpack.c.l.b16 %v3830
        %v4384 = vunpack.c.h.b16 %v3830
        %v4385 = vunpack.c.l.b16 %v3831
        %v4386 = vunpack.c.h.b16 %v3831
        %v4387 = vunpack.c.l.b16 %v3832
        %v4388 = vunpack.c.h.b16 %v3832
        %v4389 = vunpack.c.l.b16 %v3833
        %v4390 = vunpack.c.l.b16 %v3834
        %v4391 = vunpack.c.h.b16 %v3834
        %v4392 = vunpack.c.l.b16 %v3835
        %v4393 = vunpack.c.h.b16 %v3835
        %v4394 = vunpack.c.l.b16 %v3836
        %v4395 = vunpack.c.h.b16 %v3836
        %v4396 = vunpack.c.l.b16 %v3837
        %v4397 = vunpack.c.h.b16 %v3837
        %v4398 = vunpack.c.l.b16 %v3838
        %v4399 = vunpack.c.l.b16 %v3839
        %v4400 = vunpack.c.h.b16 %v3839
        %v4401 = vunpack.c.l.b16 %v3840
        %v4402 = vunpack.c.h.b16 %v3840
        %v4403 = vunpack.c.l.b16 %v3841
        %v4404 = vunpack.c.h.b16 %v3841
        %v4405 = vunpack.c.l.b16 %v3842
        %v4406 = vunpack.c.h.b16 %v3842
        %v4407 = vunpack.c.l.b16 %v3843
        %v4408 = vunpack.c.l.b16 %v3844
        %v4409 = vunpack.c.h.b16 %v3844
        %v4410 = vunpack.c.l.b16 %v3845
        %v4411 = vunpack.c.h.b16 %v3845
        %v4412 = vunpack.c.l.b16 %v3846
        %v4413 = vunpack.c.h.b16 %v3846
        %v4414 = vunpack.c.l.b16 %v3847
        %v4415 = vunpack.c.h.b16 %v3847
        %v4416 = vunpack.c.l.b16 %v3848
        %v4417 = vunpack.c.l.b16 %v3849
        %v4418 = vunpack.c.h.b16 %v3849
        %v4419 = vunpack.c.l.b16 %v3850
        %v4420 = vunpack.c.h.b16 %v3850
        %v4421 = vunpack.c.l.b16 %v3851
        %v4422 = vunpack.c.h.b16 %v3851
        %v4423 = vunpack.c.l.b16 %v3852
        %v4424 = vunpack.c.h.b16 %v3852
        %v4425 = vunpack.c.l.b16 %v3853
        %v4426 = vunpack.c.l.b16 %v3854
        %v4427 = vunpack.c.h.b16 %v3854
        %v4428 = vunpack.c.l.b16 %v3855
        %v4429 = vunpack.c.h.b16 %v3855
        %v4430 = vunpack.c.l.b16 %v3856
        %v4431 = vunpack.c.h.b16 %v3856
        %v4432 = vunpack.c.l.b16 %v3857
        %v4433 = vunpack.c.h.b16 %v3857
        %v4434 = vunpack.c.l.b16 %v3858
        %v4435 = vunpack.c.l.b16 %v3859
        %v4436 = vunpack.c.h.b16 %v3859
        %v4437 = vunpack.c.l.b16 %v3860
        %v4438 = vunpack.c.h.b16 %v3860
        %v4439 = vunpack.c.l.b16 %v3861
        %v4440 = vunpack.c.h.b16 %v3861
        %v4441 = vunpack.c.l.b16 %v3862
        %v4442 = vunpack.c.h.b16 %v3862
        %v4443 = vunpack.c.l.b16 %v3863
        %v4444 = vunpack.c.l.b16 %v3864
        %v4445 = vunpack.c.h.b16 %v3864
        %v4446 = vunpack.c.l.b16 %v3865
        %v4447 = vunpack.c.h.b16 %v3865
        %v4448 = vunpack.c.l.b16 %v3866
        %v4449 = vunpack.c.h.b16 %v3866
        %v4450 = vunpack.c.l.b16 %v3867
        %v4451 = vunpack.c.h.b16 %v3867
        %v4452 = vunpack.c.l.b16 %v3868
        %v4453 = vunpack.c.l.b16 %v3869
        %v4454 = vunpack.c.h.b16 %v3869
        %v4455 = vunpack.c.l.b16 %v3870
        %v4456 = vunpack.c.h.b16 %v3870
        %v4457 = vunpack.c.l.b16 %v3871
        %v4458 = vunpack.c.h.b16 %v3871
        %v4459 = vunpack.c.l.b16 %v3872
        %v4460 = vunpack.c.h.b16 %v3872
        %v4461 = vunpack.c.l.b16 %v3873
        %v4462 = vunpack.c.l.b16 %v3874
        %v4463 = vunpack.c.h.b16 %v3874
        %v4464 = vunpack.c.l.b16 %v3875
        %v4465 = vunpack.c.h.b16 %v3875
        %v4466 = vunpack.c.l.b16 %v3876
        %v4467 = vunpack.c.h.b16 %v3876
        %v4468 = vunpack.c.l.b16 %v3877
        %v4469 = vunpack.c.h.b16 %v3877
        %v4470 = vunpack.c.l.b16 %v3878
        %v4471 = vunpack.c.l.b16 %v3879
        %v4472 = vunpack.c.h.b16 %v3879
        %v4473 = vunpack.c.l.b16 %v3880
        %v4474 = vunpack.c.h.b16 %v3880
        %v4475 = vunpack.c.l.b16 %v3881
        %v4476 = vunpack.c.h.b16 %v3881
        %v4477 = vunpack.c.l.b16 %v3882
        %v4478 = vunpack.c.h.b16 %v3882
        %v4479 = vunpack.c.l.b16 %v3883
        %v4480 = vpack.c.b16 %v4201, %v4192
        %v4481 = vpack.c.b16 %v4202, %v4193
        %v4482 = vpack.c.b16 %v4203, %v4194
        %v4483 = vpack.c.b16 %v4204, %v4195
        %v4484 = vpack.c.b16 %v4205, %v4196
        %v4485 = vpack.c.b16 %v4206, %v4197
        %v4486 = vpack.c.b16 %v4207, %v4198
        %v4487 = vpack.c.b16 %v4208, %v4199
        %v4488 = vpack.c.b16 %v4209, %v4200
        %v4489 = vpack.c.b16 %v4219, %v4210
        %v4490 = vpack.c.b16 %v4220, %v4211
        %v4491 = vpack.c.b16 %v4221, %v4212
        %v4492 = vpack.c.b16 %v4222, %v4213
        %v4493 = vpack.c.b16 %v4223, %v4214
        %v4494 = vpack.c.b16 %v4224, %v4215
        %v4495 = vpack.c.b16 %v4225, %v4216
        %v4496 = vpack.c.b16 %v4226, %v4217
        %v4497 = vpack.c.b16 %v4227, %v4218
        %v4498 = vpack.c.b16 %v4237, %v4228
        %v4499 = vpack.c.b16 %v4238, %v4229
        %v4500 = vpack.c.b16 %v4239, %v4230
        %v4501 = vpack.c.b16 %v4240, %v4231
        %v4502 = vpack.c.b16 %v4241, %v4232
        %v4503 = vpack.c.b16 %v4242, %v4233
        %v4504 = vpack.c.b16 %v4243, %v4234
        %v4505 = vpack.c.b16 %v4244, %v4235
        %v4506 = vpack.c.b16 %v4245, %v4236
        %v4507 = vpack.c.b16 %v4255, %v4246
        %v4508 = vpack.c.b16 %v4256, %v4247
        %v4509 = vpack.c.b16 %v4257, %v4248
        %v4510 = vpack.c.b16 %v4258, %v4249
        %v4511 = vpack.c.b16 %v4259, %v4250
        %v4512 = vpack.c.b16 %v4260, %v4251
        %v4513 = vpack.c.b16 %v4261, %v4252
        %v4514 = vpack.c.b16 %v4262, %v4253
        %v4515 = vpack.c.b16 %v4263, %v4254
        %v4516 = vpack.c.b16 %v4273, %v4264
        %v4517 = vpack.c.b16 %v4274, %v4265
        %v4518 = vpack.c.b16 %v4275, %v4266
        %v4519 = vpack.c.b16 %v4276, %v4267
        %v4520 = vpack.c.b16 %v4277, %v4268
        %v4521 = vpack.c.b16 %v4278, %v4269
        %v4522 = vpack.c.b16 %v4279, %v4270
        %v4523 = vpack.c.b16 %v4280, %v4271
        %v4524 = vpack.c.b16 %v4281, %v4272
        %v4525 = vpack.c.b16 %v4291, %v4282
        %v4526 = vpack.c.b16 %v4292, %v4283
        %v4527 = vpack.c.b16 %v4293, %v4284
        %v4528 = vpack.c.b16 %v4294, %v4285
        %v4529 = vpack.c.b16 %v4295, %v4286
        %v4530 = vpack.c.b16 %v4296, %v4287
        %v4531 = vpack.c.b16 %v4297, %v4288
        %v4532 = vpack.c.b16 %v4298, %v4289
        %v4533 = vpack.c.b16 %v4299, %v4290
        %v4534 = vpack.c.b16 %v4309, %v4300
        %v4535 = vpack.c.b16 %v4310, %v4301
        %v4536 = vpack.c.b16 %v4311, %v4302
        %v4537 = vpack.c.b16 %v4312, %v4303
        %v4538 = vpack.c.b16 %v4313, %v4304
        %v4539 = vpack.c.b16 %v4314, %v4305
        %v4540 = vpack.c.b16 %v4315, %v4306
        %v4541 = vpack.c.b16 %v4316, %v4307
        %v4542 = vpack.c.b16 %v4317, %v4308
        %v4543 = vpack.c.b16 %v4327, %v4318
        %v4544 = vpack.c.b16 %v4328, %v4319
        %v4545 = vpack.c.b16 %v4329, %v4320
        %v4546 = vpack.c.b16 %v4330, %v4321
        %v4547 = vpack.c.b16 %v4331, %v4322
        %v4548 = vpack.c.b16 %v4332, %v4323
        %v4549 = vpack.c.b16 %v4333, %v4324
        %v4550 = vpack.c.b16 %v4334, %v4325
        %v4551 = vpack.c.b16 %v4335, %v4326
        %v4552 = vpack.c.b16 %v4345, %v4336
        %v4553 = vpack.c.b16 %v4346, %v4337
        %v4554 = vpack.c.b16 %v4347, %v4338
        %v4555 = vpack.c.b16 %v4348, %v4339
        %v4556 = vpack.c.b16 %v4349, %v4340
        %v4557 = vpack.c.b16 %v4350, %v4341
        %v4558 = vpack.c.b16 %v4351, %v4342
        %v4559 = vpack.c.b16 %v4352, %v4343
        %v4560 = vpack.c.b16 %v4353, %v4344
        %v4561 = vpack.c.b16 %v4363, %v4354
        %v4562 = vpack.c.b16 %v4364, %v4355
        %v4563 = vpack.c.b16 %v4365, %v4356
        %v4564 = vpack.c.b16 %v4366, %v4357
        %v4565 = vpack.c.b16 %v4367, %v4358
        %v4566 = vpack.c.b16 %v4368, %v4359
        %v4567 = vpack.c.b16 %v4369, %v4360
        %v4568 = vpack.c.b16 %v4370, %v4361
        %v4569 = vpack.c.b16 %v4371, %v4362
        %v4570 = vpack.c.b16 %v4381, %v4372
        %v4571 = vpack.c.b16 %v4382, %v4373
        %v4572 = vpack.c.b16 %v4383, %v4374
        %v4573 = vpack.c.b16 %v4384, %v4375
        %v4574 = vpack.c.b16 %v4385, %v4376
        %v4575 = vpack.c.b16 %v4386, %v4377
        %v4576 = vpack.c.b16 %v4387, %v4378
        %v4577 = vpack.c.b16 %v4388, %v4379
        %v4578 = vpack.c.b16 %v4389, %v4380
        %v4579 = vpack.c.b16 %v4399, %v4390
        %v4580 = vpack.c.b16 %v4400, %v4391
        %v4581 = vpack.c.b16 %v4401, %v4392
        %v4582 = vpack.c.b16 %v4402, %v4393
        %v4583 = vpack.c.b16 %v4403, %v4394
        %v4584 = vpack.c.b16 %v4404, %v4395
        %v4585 = vpack.c.b16 %v4405, %v4396
        %v4586 = vpack.c.b16 %v4406, %v4397
        %v4587 = vpack.c.b16 %v4407, %v4398
        %v4588 = vpack.c.b16 %v4417, %v4408
        %v4589 = vpack.c.b16 %v4418, %v4409
        %v4590 = vpack.c.b16 %v4419, %v4410
        %v4591 = vpack.c.b16 %v4420, %v4411
        %v4592 = vpack.c.b16 %v4421, %v4412
        %v4593 = vpack.c.b16 %v4422, %v4413
        %v4594 = vpack.c.b16 %v4423, %v4414
        %v4595 = vpack.c.b16 %v4424, %v4415
        %v4596 = vpack.c.b16 %v4425, %v4416
        %v4597 = vpack.c.b16 %v4435, %v4426
        %v4598 = vpack.c.b16 %v4436, %v4427
        %v4599 = vpack.c.b16 %v4437, %v4428
        %v4600 = vpack.c.b16 %v4438, %v4429
        %v4601 = vpack.c.b16 %v4439, %v4430
        %v4602 = vpack.c.b16 %v4440, %v4431
        %v4603 = vpack.c.b16 %v4441, %v4432
        %v4604 = vpack.c.b16 %v4442, %v4433
        %v4605 = vpack.c.b16 %v4443, %v4434
        %v4606 = vpack.c.b16 %v4453, %v4444
        %v4607 = vpack.c.b16 %v4454, %v4445
        %v4608 = vpack.c.b16 %v4455, %v4446
        %v4609 = vpack.c.b16 %v4456, %v4447
        %v4610 = vpack.c.b16 %v4457, %v4448
        %v4611 = vpack.c.b16 %v4458, %v4449
        %v4612 = vpack.c.b16 %v4459, %v4450
        %v4613 = vpack.c.b16 %v4460, %v4451
        %v4614 = vpack.c.b16 %v4461, %v4452
        %v4615 = vpack.c.b16 %v4471, %v4462
        %v4616 = vpack.c.b16 %v4472, %v4463
        %v4617 = vpack.c.b16 %v4473, %v4464
        %v4618 = vpack.c.b16 %v4474, %v4465
        %v4619 = vpack.c.b16 %v4475, %v4466
        %v4620 = vpack.c.b16 %v4476, %v4467
        %v4621 = vpack.c.b16 %v4477, %v4468
        %v4622 = vpack.c.b16 %v4478, %v4469
        %v4623 = vpack.c.b16 %v4479, %v4470
        %v4912 = vunpack.c.l.b16 %v3884
        %v4913 = vunpack.c.l.b16 %v3885
        %v4914 = vunpack.c.l.b16 %v3886
        %v4915 = vunpack.c.l.b16 %v3887
        %v4916 = vunpack.c.l.b16 %v3888
        %v4917 = vunpack.c.l.b16 %v3889
        %v4918 = vunpack.c.l.b16 %v3890
        %v4919 = vunpack.c.l.b16 %v3891
        %v4920 = vunpack.c.l.b16 %v3892
        %v4921 = vunpack.c.l.b16 %v3893
        %v4922 = vunpack.c.l.b16 %v3894
        %v4923 = vunpack.c.l.b16 %v3895
        %v4924 = vunpack.c.l.b16 %v3896
        %v4925 = vunpack.c.l.b16 %v3897
        %v4926 = vunpack.c.l.b16 %v3898
        %v4927 = vunpack.c.l.b16 %v3899
        %v4928 = vunpack.c.l.b16 %v3900
        %v4929 = vunpack.c.l.b16 %v3901
        %v4930 = vunpack.c.l.b16 %v3902
        %v4931 = vunpack.c.l.b16 %v3903
        %v4932 = vunpack.c.l.b16 %v3904
        %v4933 = vunpack.c.l.b16 %v3905
        %v4934 = vunpack.c.l.b16 %v3906
        %v4935 = vunpack.c.l.b16 %v3907
        %v4936 = vunpack.c.l.b16 %v3908
        %v4937 = vunpack.c.l.b16 %v3909
        %v4938 = vunpack.c.l.b16 %v3910
        %v4939 = vunpack.c.l.b16 %v3911
        %v4940 = vunpack.c.l.b16 %v3912
        %v4941 = vunpack.c.l.b16 %v3913
        %v4942 = vunpack.c.l.b16 %v3914
        %v4943 = vunpack.c.l.b16 %v3915
        %v4944 = vunpack.c.l.b16 %v3916
        %v4945 = vunpack.c.l.b16 %v3917
        %v4946 = vunpack.c.l.b16 %v3918
        %v4947 = vunpack.c.l.b16 %v3919
        %v4948 = vunpack.c.l.b16 %v3920
        %v4949 = vunpack.c.l.b16 %v3921
        %v4950 = vunpack.c.l.b16 %v3922
        %v4951 = vunpack.c.l.b16 %v3923
        %v4952 = vunpack.c.l.b16 %v3924
        %v4953 = vunpack.c.l.b16 %v3925
        %v4954 = vunpack.c.l.b16 %v3926
        %v4955 = vunpack.c.l.b16 %v3927
        %v4956 = vunpack.c.l.b16 %v3928
        %v4957 = vunpack.c.l.b16 %v3929
        %v4958 = vunpack.c.l.b16 %v3930
        %v4959 = vunpack.c.l.b16 %v3931
        %v4960 = vunpack.c.l.b16 %v3932
        %v4961 = vunpack.c.l.b16 %v3933
        %v4962 = vunpack.c.l.b16 %v3934
        %v4963 = vunpack.c.l.b16 %v3935
        %v4964 = vunpack.c.l.b16 %v3936
        %v4965 = vunpack.c.l.b16 %v3937
        %v4966 = vunpack.c.l.b16 %v3938
        %v4967 = vunpack.c.l.b16 %v3939
        %v4968 = vunpack.c.l.b16 %v3940
        %v4969 = vunpack.c.l.b16 %v3941
        %v4970 = vunpack.c.l.b16 %v3942
        %v4971 = vunpack.c.l.b16 %v3943
        %v4972 = vunpack.c.l.b16 %v3944
        %v4973 = vunpack.c.l.b16 %v3945
        %v4974 = vunpack.c.l.b16 %v3946
        %v4975 = vunpack.c.l.b16 %v3947
        %v4976 = vunpack.c.l.b16 %v3948
        %v4977 = vunpack.c.l.b16 %v3949
        %v4978 = vunpack.c.l.b16 %v3950
        %v4979 = vunpack.c.l.b16 %v3951
        %v4980 = vunpack.c.l.b16 %v3952
        %v4981 = vunpack.c.l.b16 %v3953
        %v4982 = vunpack.c.l.b16 %v3954
        %v4983 = vunpack.c.l.b16 %v3955
        %v4984 = vunpack.c.l.b16 %v3956
        %v4985 = vunpack.c.l.b16 %v3957
        %v4986 = vunpack.c.l.b16 %v3958
        %v4987 = vunpack.c.l.b16 %v3959
        %v4988 = vunpack.c.l.b16 %v3960
        %v4989 = vunpack.c.l.b16 %v3961
        %v4990 = vunpack.c.l.b16 %v3962
        %v4991 = vunpack.c.l.b16 %v3963
        %v4992 = vunpack.c.l.b16 %v3964
        %v4993 = vunpack.c.l.b16 %v3965
        %v4994 = vunpack.c.l.b16 %v3966
        %v4995 = vunpack.c.l.b16 %v3967
        %v4996 = vunpack.c.l.b16 %v3968
        %v4997 = vunpack.c.l.b16 %v3969
        %v4998 = vunpack.c.l.b16 %v3970
        %v4999 = vunpack.c.l.b16 %v3971
        %v5000 = vunpack.c.l.b16 %v3972
        %v5001 = vunpack.c.l.b16 %v3973
        %v5002 = vunpack.c.l.b16 %v3974
        %v5003 = vunpack.c.l.b16 %v3975
        %v5004 = vunpack.c.l.b16 %v3976
        %v5005 = vunpack.c.l.b16 %v3977
        %v5006 = vunpack.c.l.b16 %v3978
        %v5007 = vunpack.c.l.b16 %v3979
        %v5008 = vunpack.c.l.b16 %v3980
        %v5009 = vunpack.c.l.b16 %v3981
        %v5010 = vunpack.c.l.b16 %v3982
        %v5011 = vunpack.c.l.b16 %v3983
        %v5012 = vunpack.c.l.b16 %v3984
        %v5013 = vunpack.c.l.b16 %v3985
        %v5014 = vunpack.c.l.b16 %v3986
        %v5015 = vunpack.c.l.b16 %v3987
        %v5016 = vunpack.c.l.b16 %v3988
        %v5017 = vunpack.c.l.b16 %v3989
        %v5018 = vunpack.c.l.b16 %v3990
        %v5019 = vunpack.c.l.b16 %v3991
        %v5020 = vunpack.c.l.b16 %v3992
        %v5021 = vunpack.c.l.b16 %v3993
        %v5022 = vunpack.c.l.b16 %v3994
        %v5023 = vunpack.c.l.b16 %v3995
        %v5024 = vunpack.c.l.b16 %v3996
        %v5025 = vunpack.c.l.b16 %v3997
        %v5026 = vunpack.c.l.b16 %v3998
        %v5027 = vunpack.c.l.b16 %v3999
        %v5028 = vunpack.c.l.b16 %v4000
        %v5029 = vunpack.c.l.b16 %v4001
        %v5030 = vunpack.c.l.b16 %v4002
        %v5031 = vunpack.c.l.b16 %v4003
        %v5032 = vunpack.c.l.b16 %v4004
        %v5033 = vunpack.c.l.b16 %v4005
        %v5034 = vunpack.c.l.b16 %v4006
        %v5035 = vunpack.c.l.b16 %v4007
        %v5036 = vunpack.c.l.b16 %v4008
        %v5037 = vunpack.c.l.b16 %v4009
        %v5038 = vunpack.c.l.b16 %v4010
        %v5039 = vunpack.c.l.b16 %v4011
        %v5040 = vunpack.c.l.b16 %v4012
        %v5041 = vunpack.c.l.b16 %v4013
        %v5042 = vunpack.c.l.b16 %v4014
        %v5043 = vunpack.c.l.b16 %v4015
        %v5044 = vunpack.c.l.b16 %v4016
        %v5045 = vunpack.c.l.b16 %v4017
        %v5046 = vunpack.c.l.b16 %v4018
        %v5047 = vunpack.c.l.b16 %v4019
        %v5048 = vunpack.c.l.b16 %v4020
        %v5049 = vunpack.c.l.b16 %v4021
        %v5050 = vunpack.c.l.b16 %v4022
        %v5051 = vunpack.c.l.b16 %v4023
        %v5052 = vunpack.c.l.b16 %v4024
        %v5053 = vunpack.c.l.b16 %v4025
        %v5054 = vunpack.c.l.b16 %v4026
        %v5055 = vunpack.c.l.b16 %v4027
        %v5056 = vpack.c.b16 %v4913, %v4912
        %v5057 = vpack.c.b16 %v4915, %v4914
        %v5058 = vpack.c.b16 %v4917, %v4916
        %v5059 = vpack.c.b16 %v4919, %v4918
        %v5060 = vpack.c.b16 %v4921, %v4920
        %v5061 = vpack.c.b16 %v4923, %v4922
        %v5062 = vpack.c.b16 %v4925, %v4924
        %v5063 = vpack.c.b16 %v4927, %v4926
        %v5064 = vpack.c.b16 %v4929, %v4928
        %v5065 = vpack.c.b16 %v4931, %v4930
        %v5066 = vpack.c.b16 %v4933, %v4932
        %v5067 = vpack.c.b16 %v4935, %v4934
        %v5068 = vpack.c.b16 %v4937, %v4936
        %v5069 = vpack.c.b16 %v4939, %v4938
        %v5070 = vpack.c.b16 %v4941, %v4940
        %v5071 = vpack.c.b16 %v4943, %v4942
        %v5072 = vpack.c.b16 %v4945, %v4944
        %v5073 = vpack.c.b16 %v4947, %v4946
        %v5074 = vpack.c.b16 %v4949, %v4948
        %v5075 = vpack.c.b16 %v4951, %v4950
        %v5076 = vpack.c.b16 %v4953, %v4952
        %v5077 = vpack.c.b16 %v4955, %v4954
        %v5078 = vpack.c.b16 %v4957, %v4956
        %v5079 = vpack.c.b16 %v4959, %v4958
        %v5080 = vpack.c.b16 %v4961, %v4960
        %v5081 = vpack.c.b16 %v4963, %v4962
        %v5082 = vpack.c.b16 %v4965, %v4964
        %v5083 = vpack.c.b16 %v4967, %v4966
        %v5084 = vpack.c.b16 %v4969, %v4968
        %v5085 = vpack.c.b16 %v4971, %v4970
        %v5086 = vpack.c.b16 %v4973, %v4972
        %v5087 = vpack.c.b16 %v4975, %v4974
        %v5088 = vpack.c.b16 %v4977, %v4976
        %v5089 = vpack.c.b16 %v4979, %v4978
        %v5090 = vpack.c.b16 %v4981, %v4980
        %v5091 = vpack.c.b16 %v4983, %v4982
        %v5092 = vpack.c.b16 %v4985, %v4984
        %v5093 = vpack.c.b16 %v4987, %v4986
        %v5094 = vpack.c.b16 %v4989, %v4988
        %v5095 = vpack.c.b16 %v4991, %v4990
        %v5096 = vpack.c.b16 %v4993, %v4992
        %v5097 = vpack.c.b16 %v4995, %v4994
        %v5098 = vpack.c.b16 %v4997, %v4996
        %v5099 = vpack.c.b16 %v4999, %v4998
        %v5100 = vpack.c.b16 %v5001, %v5000
        %v5101 = vpack.c.b16 %v5003, %v5002
        %v5102 = vpack.c.b16 %v5005, %v5004
        %v5103 = vpack.c.b16 %v5007, %v5006
        %v5104 = vpack.c.b16 %v5009, %v5008
        %v5105 = vpack.c.b16 %v5011, %v5010
        %v5106 = vpack.c.b16 %v5013, %v5012
        %v5107 = vpack.c.b16 %v5015, %v5014
        %v5108 = vpack.c.b16 %v5017, %v5016
        %v5109 = vpack.c.b16 %v5019, %v5018
        %v5110 = vpack.c.b16 %v5021, %v5020
        %v5111 = vpack.c.b16 %v5023, %v5022
        %v5112 = vpack.c.b16 %v5025, %v5024
        %v5113 = vpack.c.b16 %v5027, %v5026
        %v5114 = vpack.c.b16 %v5029, %v5028
        %v5115 = vpack.c.b16 %v5031, %v5030
        %v5116 = vpack.c.b16 %v5033, %v5032
        %v5117 = vpack.c.b16 %v5035, %v5034
        %v5118 = vpack.c.b16 %v5037, %v5036
        %v5119 = vpack.c.b16 %v5039, %v5038
        %v5120 = vpack.c.b16 %v5041, %v5040
        %v5121 = vpack.c.b16 %v5043, %v5042
        %v5122 = vpack.c.b16 %v5045, %v5044
        %v5123 = vpack.c.b16 %v5047, %v5046
        %v5124 = vpack.c.b16 %v5049, %v5048
        %v5125 = vpack.c.b16 %v5051, %v5050
        %v5126 = vpack.c.b16 %v5053, %v5052
        %v5127 = vpack.c.b16 %v5055, %v5054
        %5200 = vmatpush.bf16.msra.mxu0 %v5063
        %5201 = vmatpush.bf16.msra.mxu0 %v5062
        %5202 = vmatpush.bf16.msra.mxu0 %v5061
        %5203 = vmatpush.bf16.msra.mxu0 %v5060
        %5204 = vmatpush.bf16.msra.mxu0 %v5059
        %5205 = vmatpush.bf16.msra.mxu0 %v5058
        %5206 = vmatpush.bf16.msra.mxu0 %v5057
        %5207 = vmatpush.bf16.msra.mxu0 %v5056
        %5208 = vmatmul.bf16.gmra.mxu0 %v4480
        %v5209 = vpop.f32.mrf.mxu0
        %v5210 = vadd.f32 %v4030, %v5209
        %v5211 = vpop.f32.mrf.mxu0
        %v5212 = vadd.f32 %v4030, %v5211
        %5213 = vmatmul.bf16.gmra.mxu0 %v4489
        %v5214 = vpop.f32.mrf.mxu0
        %v5215 = vadd.f32 %v4030, %v5214
        %v5216 = vpop.f32.mrf.mxu0
        %v5217 = vadd.f32 %v4030, %v5216
        %5218 = vmatmul.bf16.gmra.mxu0 %v4498
        %v5219 = vpop.f32.mrf.mxu0
        %v5220 = vadd.f32 %v4030, %v5219
        %v5221 = vpop.f32.mrf.mxu0
        %v5222 = vadd.f32 %v4030, %v5221
        %5223 = vmatmul.bf16.gmra.mxu0 %v4507
        %v5224 = vpop.f32.mrf.mxu0
        %v5225 = vadd.f32 %v4030, %v5224
        %v5226 = vpop.f32.mrf.mxu0
        %v5227 = vadd.f32 %v4030, %v5226
        %5228 = vmatmul.bf16.gmra.mxu0 %v4516
        %v5229 = vpop.f32.mrf.mxu0
        %v5230 = vadd.f32 %v4030, %v5229
        %v5231 = vpop.f32.mrf.mxu0
        %v5232 = vadd.f32 %v4030, %v5231
        %5233 = vmatmul.bf16.gmra.mxu0 %v4525
        %v5234 = vpop.f32.mrf.mxu0
        %v5235 = vadd.f32 %v4030, %v5234
        %v5236 = vpop.f32.mrf.mxu0
        %v5237 = vadd.f32 %v4030, %v5236
        %5238 = vmatmul.bf16.gmra.mxu0 %v4534
        %v5239 = vpop.f32.mrf.mxu0
        %v5240 = vadd.f32 %v4030, %v5239
        %v5241 = vpop.f32.mrf.mxu0
        %v5242 = vadd.f32 %v4030, %v5241
        %5243 = vmatmul.bf16.gmra.mxu0 %v4543
        %v5244 = vpop.f32.mrf.mxu0
        %v5245 = vadd.f32 %v4030, %v5244
        %v5246 = vpop.f32.mrf.mxu0
        %v5247 = vadd.f32 %v4030, %v5246
        %5248 = vmatmul.bf16.gmra.mxu0 %v4552
        %v5249 = vpop.f32.mrf.mxu0
        %v5250 = vadd.f32 %v4030, %v5249
        %v5251 = vpop.f32.mrf.mxu0
        %v5252 = vadd.f32 %v4030, %v5251
        %5253 = vmatmul.bf16.gmra.mxu0 %v4561
        %v5254 = vpop.f32.mrf.mxu0
        %v5255 = vadd.f32 %v4030, %v5254
        %v5256 = vpop.f32.mrf.mxu0
        %v5257 = vadd.f32 %v4030, %v5256
        %5258 = vmatmul.bf16.gmra.mxu0 %v4570
        %v5259 = vpop.f32.mrf.mxu0
        %v5260 = vadd.f32 %v4030, %v5259
        %v5261 = vpop.f32.mrf.mxu0
        %v5262 = vadd.f32 %v4030, %v5261
        %5263 = vmatmul.bf16.gmra.mxu0 %v4579
        %v5264 = vpop.f32.mrf.mxu0
        %v5265 = vadd.f32 %v4030, %v5264
        %v5266 = vpop.f32.mrf.mxu0
        %v5267 = vadd.f32 %v4030, %v5266
        %5268 = vmatmul.bf16.gmra.mxu0 %v4588
        %v5269 = vpop.f32.mrf.mxu0
        %v5270 = vadd.f32 %v4030, %v5269
        %v5271 = vpop.f32.mrf.mxu0
        %v5272 = vadd.f32 %v4030, %v5271
        %5273 = vmatmul.bf16.gmra.mxu0 %v4597
        %v5274 = vpop.f32.mrf.mxu0
        %v5275 = vadd.f32 %v4030, %v5274
        %v5276 = vpop.f32.mrf.mxu0
        %v5277 = vadd.f32 %v4030, %v5276
        %5278 = vmatmul.bf16.gmra.mxu0 %v4606
        %v5279 = vpop.f32.mrf.mxu0
        %v5280 = vadd.f32 %v4030, %v5279
        %v5281 = vpop.f32.mrf.mxu0
        %v5282 = vadd.f32 %v4030, %v5281
        %5283 = vmatmul.bf16.gmra.mxu0 %v4615
        %v5284 = vpop.f32.mrf.mxu0
        %v5285 = vadd.f32 %v4030, %v5284
        %v5286 = vpop.f32.mrf.mxu0
        %v5287 = vadd.f32 %v4030, %v5286
        %5288 = vdwg.mxu0
        %5289 = vmatpush.bf16.msra.mxu0 %v5071
        %5290 = vmatpush.bf16.msra.mxu0 %v5070
        %5291 = vmatpush.bf16.msra.mxu0 %v5069
        %5292 = vmatpush.bf16.msra.mxu0 %v5068
        %5293 = vmatpush.bf16.msra.mxu0 %v5067
        %5294 = vmatpush.bf16.msra.mxu0 %v5066
        %5295 = vmatpush.bf16.msra.mxu0 %v5065
        %5296 = vmatpush.bf16.msra.mxu0 %v5064
        %5297 = vmatmul.bf16.gmra.mxu0 %v4481
        %v5298 = vpop.f32.mrf.mxu0
        %v5299 = vadd.f32 %v5210, %v5298
        %v5300 = vpop.f32.mrf.mxu0
        %v5301 = vadd.f32 %v5212, %v5300
        %5302 = vmatmul.bf16.gmra.mxu0 %v4490
        %v5303 = vpop.f32.mrf.mxu0
        %v5304 = vadd.f32 %v5215, %v5303
        %v5305 = vpop.f32.mrf.mxu0
        %v5306 = vadd.f32 %v5217, %v5305
        %5307 = vmatmul.bf16.gmra.mxu0 %v4499
        %v5308 = vpop.f32.mrf.mxu0
        %v5309 = vadd.f32 %v5220, %v5308
        %v5310 = vpop.f32.mrf.mxu0
        %v5311 = vadd.f32 %v5222, %v5310
        %5312 = vmatmul.bf16.gmra.mxu0 %v4508
        %v5313 = vpop.f32.mrf.mxu0
        %v5314 = vadd.f32 %v5225, %v5313
        %v5315 = vpop.f32.mrf.mxu0
        %v5316 = vadd.f32 %v5227, %v5315
        %5317 = vmatmul.bf16.gmra.mxu0 %v4517
        %v5318 = vpop.f32.mrf.mxu0
        %v5319 = vadd.f32 %v5230, %v5318
        %v5320 = vpop.f32.mrf.mxu0
        %v5321 = vadd.f32 %v5232, %v5320
        %5322 = vmatmul.bf16.gmra.mxu0 %v4526
        %v5323 = vpop.f32.mrf.mxu0
        %v5324 = vadd.f32 %v5235, %v5323
        %v5325 = vpop.f32.mrf.mxu0
        %v5326 = vadd.f32 %v5237, %v5325
        %5327 = vmatmul.bf16.gmra.mxu0 %v4535
        %v5328 = vpop.f32.mrf.mxu0
        %v5329 = vadd.f32 %v5240, %v5328
        %v5330 = vpop.f32.mrf.mxu0
        %v5331 = vadd.f32 %v5242, %v5330
        %5332 = vmatmul.bf16.gmra.mxu0 %v4544
        %v5333 = vpop.f32.mrf.mxu0
        %v5334 = vadd.f32 %v5245, %v5333
        %v5335 = vpop.f32.mrf.mxu0
        %v5336 = vadd.f32 %v5247, %v5335
        %5337 = vmatmul.bf16.gmra.mxu0 %v4553
        %v5338 = vpop.f32.mrf.mxu0
        %v5339 = vadd.f32 %v5250, %v5338
        %v5340 = vpop.f32.mrf.mxu0
        %v5341 = vadd.f32 %v5252, %v5340
        %5342 = vmatmul.bf16.gmra.mxu0 %v4562
        %v5343 = vpop.f32.mrf.mxu0
        %v5344 = vadd.f32 %v5255, %v5343
        %v5345 = vpop.f32.mrf.mxu0
        %v5346 = vadd.f32 %v5257, %v5345
        %5347 = vmatmul.bf16.gmra.mxu0 %v4571
        %v5348 = vpop.f32.mrf.mxu0
        %v5349 = vadd.f32 %v5260, %v5348
        %v5350 = vpop.f32.mrf.mxu0
        %v5351 = vadd.f32 %v5262, %v5350
        %5352 = vmatmul.bf16.gmra.mxu0 %v4580
        %v5353 = vpop.f32.mrf.mxu0
        %v5354 = vadd.f32 %v5265, %v5353
        %v5355 = vpop.f32.mrf.mxu0
        %v5356 = vadd.f32 %v5267, %v5355
        %5357 = vmatmul.bf16.gmra.mxu0 %v4589
        %v5358 = vpop.f32.mrf.mxu0
        %v5359 = vadd.f32 %v5270, %v5358
        %v5360 = vpop.f32.mrf.mxu0
        %v5361 = vadd.f32 %v5272, %v5360
        %5362 = vmatmul.bf16.gmra.mxu0 %v4598
        %v5363 = vpop.f32.mrf.mxu0
        %v5364 = vadd.f32 %v5275, %v5363
        %v5365 = vpop.f32.mrf.mxu0
        %v5366 = vadd.f32 %v5277, %v5365
        %5367 = vmatmul.bf16.gmra.mxu0 %v4607
        %v5368 = vpop.f32.mrf.mxu0
        %v5369 = vadd.f32 %v5280, %v5368
        %v5370 = vpop.f32.mrf.mxu0
        %v5371 = vadd.f32 %v5282, %v5370
        %5372 = vmatmul.bf16.gmra.mxu0 %v4616
        %v5373 = vpop.f32.mrf.mxu0
        %v5374 = vadd.f32 %v5285, %v5373
        %v5375 = vpop.f32.mrf.mxu0
        %v5376 = vadd.f32 %v5287, %v5375
        %5377 = vdwg.mxu0
        %5378 = vmatpush.bf16.msra.mxu0 %v5079
        %5379 = vmatpush.bf16.msra.mxu0 %v5078
        %5380 = vmatpush.bf16.msra.mxu0 %v5077
        %5381 = vmatpush.bf16.msra.mxu0 %v5076
        %5382 = vmatpush.bf16.msra.mxu0 %v5075
        %5383 = vmatpush.bf16.msra.mxu0 %v5074
        %5384 = vmatpush.bf16.msra.mxu0 %v5073
        %5385 = vmatpush.bf16.msra.mxu0 %v5072
        %5386 = vmatmul.bf16.gmra.mxu0 %v4482
        %v5387 = vpop.f32.mrf.mxu0
        %v5388 = vadd.f32 %v5299, %v5387
        %v5389 = vpop.f32.mrf.mxu0
        %v5390 = vadd.f32 %v5301, %v5389
        %5391 = vmatmul.bf16.gmra.mxu0 %v4491
        %v5392 = vpop.f32.mrf.mxu0
        %v5393 = vadd.f32 %v5304, %v5392
        %v5394 = vpop.f32.mrf.mxu0
        %v5395 = vadd.f32 %v5306, %v5394
        %5396 = vmatmul.bf16.gmra.mxu0 %v4500
        %v5397 = vpop.f32.mrf.mxu0
        %v5398 = vadd.f32 %v5309, %v5397
        %v5399 = vpop.f32.mrf.mxu0
        %v5400 = vadd.f32 %v5311, %v5399
        %5401 = vmatmul.bf16.gmra.mxu0 %v4509
        %v5402 = vpop.f32.mrf.mxu0
        %v5403 = vadd.f32 %v5314, %v5402
        %v5404 = vpop.f32.mrf.mxu0
        %v5405 = vadd.f32 %v5316, %v5404
        %5406 = vmatmul.bf16.gmra.mxu0 %v4518
        %v5407 = vpop.f32.mrf.mxu0
        %v5408 = vadd.f32 %v5319, %v5407
        %v5409 = vpop.f32.mrf.mxu0
        %v5410 = vadd.f32 %v5321, %v5409
        %5411 = vmatmul.bf16.gmra.mxu0 %v4527
        %v5412 = vpop.f32.mrf.mxu0
        %v5413 = vadd.f32 %v5324, %v5412
        %v5414 = vpop.f32.mrf.mxu0
        %v5415 = vadd.f32 %v5326, %v5414
        %5416 = vmatmul.bf16.gmra.mxu0 %v4536
        %v5417 = vpop.f32.mrf.mxu0
        %v5418 = vadd.f32 %v5329, %v5417
        %v5419 = vpop.f32.mrf.mxu0
        %v5420 = vadd.f32 %v5331, %v5419
        %5421 = vmatmul.bf16.gmra.mxu0 %v4545
        %v5422 = vpop.f32.mrf.mxu0
        %v5423 = vadd.f32 %v5334, %v5422
        %v5424 = vpop.f32.mrf.mxu0
        %v5425 = vadd.f32 %v5336, %v5424
        %5426 = vmatmul.bf16.gmra.mxu0 %v4554
        %v5427 = vpop.f32.mrf.mxu0
        %v5428 = vadd.f32 %v5339, %v5427
        %v5429 = vpop.f32.mrf.mxu0
        %v5430 = vadd.f32 %v5341, %v5429
        %5431 = vmatmul.bf16.gmra.mxu0 %v4563
        %v5432 = vpop.f32.mrf.mxu0
        %v5433 = vadd.f32 %v5344, %v5432
        %v5434 = vpop.f32.mrf.mxu0
        %v5435 = vadd.f32 %v5346, %v5434
        %5436 = vmatmul.bf16.gmra.mxu0 %v4572
        %v5437 = vpop.f32.mrf.mxu0
        %v5438 = vadd.f32 %v5349, %v5437
        %v5439 = vpop.f32.mrf.mxu0
        %v5440 = vadd.f32 %v5351, %v5439
        %5441 = vmatmul.bf16.gmra.mxu0 %v4581
        %v5442 = vpop.f32.mrf.mxu0
        %v5443 = vadd.f32 %v5354, %v5442
        %v5444 = vpop.f32.mrf.mxu0
        %v5445 = vadd.f32 %v5356, %v5444
        %5446 = vmatmul.bf16.gmra.mxu0 %v4590
        %v5447 = vpop.f32.mrf.mxu0
        %v5448 = vadd.f32 %v5359, %v5447
        %v5449 = vpop.f32.mrf.mxu0
        %v5450 = vadd.f32 %v5361, %v5449
        %5451 = vmatmul.bf16.gmra.mxu0 %v4599
        %v5452 = vpop.f32.mrf.mxu0
        %v5453 = vadd.f32 %v5364, %v5452
        %v5454 = vpop.f32.mrf.mxu0
        %v5455 = vadd.f32 %v5366, %v5454
        %5456 = vmatmul.bf16.gmra.mxu0 %v4608
        %v5457 = vpop.f32.mrf.mxu0
        %v5458 = vadd.f32 %v5369, %v5457
        %v5459 = vpop.f32.mrf.mxu0
        %v5460 = vadd.f32 %v5371, %v5459
        %5461 = vmatmul.bf16.gmra.mxu0 %v4617
        %v5462 = vpop.f32.mrf.mxu0
        %v5463 = vadd.f32 %v5374, %v5462
        %v5464 = vpop.f32.mrf.mxu0
        %v5465 = vadd.f32 %v5376, %v5464
        %5466 = vdwg.mxu0
        %5467 = vmatpush.bf16.msra.mxu0 %v5087
        %5468 = vmatpush.bf16.msra.mxu0 %v5086
        %5469 = vmatpush.bf16.msra.mxu0 %v5085
        %5470 = vmatpush.bf16.msra.mxu0 %v5084
        %5471 = vmatpush.bf16.msra.mxu0 %v5083
        %5472 = vmatpush.bf16.msra.mxu0 %v5082
        %5473 = vmatpush.bf16.msra.mxu0 %v5081
        %5474 = vmatpush.bf16.msra.mxu0 %v5080
        %5475 = vmatmul.bf16.gmra.mxu0 %v4483
        %v5476 = vpop.f32.mrf.mxu0
        %v5477 = vadd.f32 %v5388, %v5476
        %v5478 = vpop.f32.mrf.mxu0
        %v5479 = vadd.f32 %v5390, %v5478
        %5480 = vmatmul.bf16.gmra.mxu0 %v4492
        %v5481 = vpop.f32.mrf.mxu0
        %v5482 = vadd.f32 %v5393, %v5481
        %v5483 = vpop.f32.mrf.mxu0
        %v5484 = vadd.f32 %v5395, %v5483
        %5485 = vmatmul.bf16.gmra.mxu0 %v4501
        %v5486 = vpop.f32.mrf.mxu0
        %v5487 = vadd.f32 %v5398, %v5486
        %v5488 = vpop.f32.mrf.mxu0
        %v5489 = vadd.f32 %v5400, %v5488
        %5490 = vmatmul.bf16.gmra.mxu0 %v4510
        %v5491 = vpop.f32.mrf.mxu0
        %v5492 = vadd.f32 %v5403, %v5491
        %v5493 = vpop.f32.mrf.mxu0
        %v5494 = vadd.f32 %v5405, %v5493
        %5495 = vmatmul.bf16.gmra.mxu0 %v4519
        %v5496 = vpop.f32.mrf.mxu0
        %v5497 = vadd.f32 %v5408, %v5496
        %v5498 = vpop.f32.mrf.mxu0
        %v5499 = vadd.f32 %v5410, %v5498
        %5500 = vmatmul.bf16.gmra.mxu0 %v4528
        %v5501 = vpop.f32.mrf.mxu0
        %v5502 = vadd.f32 %v5413, %v5501
        %v5503 = vpop.f32.mrf.mxu0
        %v5504 = vadd.f32 %v5415, %v5503
        %5505 = vmatmul.bf16.gmra.mxu0 %v4537
        %v5506 = vpop.f32.mrf.mxu0
        %v5507 = vadd.f32 %v5418, %v5506
        %v5508 = vpop.f32.mrf.mxu0
        %v5509 = vadd.f32 %v5420, %v5508
        %5510 = vmatmul.bf16.gmra.mxu0 %v4546
        %v5511 = vpop.f32.mrf.mxu0
        %v5512 = vadd.f32 %v5423, %v5511
        %v5513 = vpop.f32.mrf.mxu0
        %v5514 = vadd.f32 %v5425, %v5513
        %5515 = vmatmul.bf16.gmra.mxu0 %v4555
        %v5516 = vpop.f32.mrf.mxu0
        %v5517 = vadd.f32 %v5428, %v5516
        %v5518 = vpop.f32.mrf.mxu0
        %v5519 = vadd.f32 %v5430, %v5518
        %5520 = vmatmul.bf16.gmra.mxu0 %v4564
        %v5521 = vpop.f32.mrf.mxu0
        %v5522 = vadd.f32 %v5433, %v5521
        %v5523 = vpop.f32.mrf.mxu0
        %v5524 = vadd.f32 %v5435, %v5523
        %5525 = vmatmul.bf16.gmra.mxu0 %v4573
        %v5526 = vpop.f32.mrf.mxu0
        %v5527 = vadd.f32 %v5438, %v5526
        %v5528 = vpop.f32.mrf.mxu0
        %v5529 = vadd.f32 %v5440, %v5528
        %5530 = vmatmul.bf16.gmra.mxu0 %v4582
        %v5531 = vpop.f32.mrf.mxu0
        %v5532 = vadd.f32 %v5443, %v5531
        %v5533 = vpop.f32.mrf.mxu0
        %v5534 = vadd.f32 %v5445, %v5533
        %5535 = vmatmul.bf16.gmra.mxu0 %v4591
        %v5536 = vpop.f32.mrf.mxu0
        %v5537 = vadd.f32 %v5448, %v5536
        %v5538 = vpop.f32.mrf.mxu0
        %v5539 = vadd.f32 %v5450, %v5538
        %5540 = vmatmul.bf16.gmra.mxu0 %v4600
        %v5541 = vpop.f32.mrf.mxu0
        %v5542 = vadd.f32 %v5453, %v5541
        %v5543 = vpop.f32.mrf.mxu0
        %v5544 = vadd.f32 %v5455, %v5543
        %5545 = vmatmul.bf16.gmra.mxu0 %v4609
        %v5546 = vpop.f32.mrf.mxu0
        %v5547 = vadd.f32 %v5458, %v5546
        %v5548 = vpop.f32.mrf.mxu0
        %v5549 = vadd.f32 %v5460, %v5548
        %5550 = vmatmul.bf16.gmra.mxu0 %v4618
        %v5551 = vpop.f32.mrf.mxu0
        %v5552 = vadd.f32 %v5463, %v5551
        %v5553 = vpop.f32.mrf.mxu0
        %v5554 = vadd.f32 %v5465, %v5553
        %5555 = vdwg.mxu0
        %5556 = vmatpush.bf16.msra.mxu0 %v5095
        %5557 = vmatpush.bf16.msra.mxu0 %v5094
        %5558 = vmatpush.bf16.msra.mxu0 %v5093
        %5559 = vmatpush.bf16.msra.mxu0 %v5092
        %5560 = vmatpush.bf16.msra.mxu0 %v5091
        %5561 = vmatpush.bf16.msra.mxu0 %v5090
        %5562 = vmatpush.bf16.msra.mxu0 %v5089
        %5563 = vmatpush.bf16.msra.mxu0 %v5088
        %5564 = vmatmul.bf16.gmra.mxu0 %v4484
        %v5565 = vpop.f32.mrf.mxu0
        %v5566 = vadd.f32 %v5477, %v5565
        %v5567 = vpop.f32.mrf.mxu0
        %v5568 = vadd.f32 %v5479, %v5567
        %5569 = vmatmul.bf16.gmra.mxu0 %v4493
        %v5570 = vpop.f32.mrf.mxu0
        %v5571 = vadd.f32 %v5482, %v5570
        %v5572 = vpop.f32.mrf.mxu0
        %v5573 = vadd.f32 %v5484, %v5572
        %5574 = vmatmul.bf16.gmra.mxu0 %v4502
        %v5575 = vpop.f32.mrf.mxu0
        %v5576 = vadd.f32 %v5487, %v5575
        %v5577 = vpop.f32.mrf.mxu0
        %v5578 = vadd.f32 %v5489, %v5577
        %5579 = vmatmul.bf16.gmra.mxu0 %v4511
        %v5580 = vpop.f32.mrf.mxu0
        %v5581 = vadd.f32 %v5492, %v5580
        %v5582 = vpop.f32.mrf.mxu0
        %v5583 = vadd.f32 %v5494, %v5582
        %5584 = vmatmul.bf16.gmra.mxu0 %v4520
        %v5585 = vpop.f32.mrf.mxu0
        %v5586 = vadd.f32 %v5497, %v5585
        %v5587 = vpop.f32.mrf.mxu0
        %v5588 = vadd.f32 %v5499, %v5587
        %5589 = vmatmul.bf16.gmra.mxu0 %v4529
        %v5590 = vpop.f32.mrf.mxu0
        %v5591 = vadd.f32 %v5502, %v5590
        %v5592 = vpop.f32.mrf.mxu0
        %v5593 = vadd.f32 %v5504, %v5592
        %5594 = vmatmul.bf16.gmra.mxu0 %v4538
        %v5595 = vpop.f32.mrf.mxu0
        %v5596 = vadd.f32 %v5507, %v5595
        %v5597 = vpop.f32.mrf.mxu0
        %v5598 = vadd.f32 %v5509, %v5597
        %5599 = vmatmul.bf16.gmra.mxu0 %v4547
        %v5600 = vpop.f32.mrf.mxu0
        %v5601 = vadd.f32 %v5512, %v5600
        %v5602 = vpop.f32.mrf.mxu0
        %v5603 = vadd.f32 %v5514, %v5602
        %5604 = vmatmul.bf16.gmra.mxu0 %v4556
        %v5605 = vpop.f32.mrf.mxu0
        %v5606 = vadd.f32 %v5517, %v5605
        %v5607 = vpop.f32.mrf.mxu0
        %v5608 = vadd.f32 %v5519, %v5607
        %5609 = vmatmul.bf16.gmra.mxu0 %v4565
        %v5610 = vpop.f32.mrf.mxu0
        %v5611 = vadd.f32 %v5522, %v5610
        %v5612 = vpop.f32.mrf.mxu0
        %v5613 = vadd.f32 %v5524, %v5612
        %5614 = vmatmul.bf16.gmra.mxu0 %v4574
        %v5615 = vpop.f32.mrf.mxu0
        %v5616 = vadd.f32 %v5527, %v5615
        %v5617 = vpop.f32.mrf.mxu0
        %v5618 = vadd.f32 %v5529, %v5617
        %5619 = vmatmul.bf16.gmra.mxu0 %v4583
        %v5620 = vpop.f32.mrf.mxu0
        %v5621 = vadd.f32 %v5532, %v5620
        %v5622 = vpop.f32.mrf.mxu0
        %v5623 = vadd.f32 %v5534, %v5622
        %5624 = vmatmul.bf16.gmra.mxu0 %v4592
        %v5625 = vpop.f32.mrf.mxu0
        %v5626 = vadd.f32 %v5537, %v5625
        %v5627 = vpop.f32.mrf.mxu0
        %v5628 = vadd.f32 %v5539, %v5627
        %5629 = vmatmul.bf16.gmra.mxu0 %v4601
        %v5630 = vpop.f32.mrf.mxu0
        %v5631 = vadd.f32 %v5542, %v5630
        %v5632 = vpop.f32.mrf.mxu0
        %v5633 = vadd.f32 %v5544, %v5632
        %5634 = vmatmul.bf16.gmra.mxu0 %v4610
        %v5635 = vpop.f32.mrf.mxu0
        %v5636 = vadd.f32 %v5547, %v5635
        %v5637 = vpop.f32.mrf.mxu0
        %v5638 = vadd.f32 %v5549, %v5637
        %5639 = vmatmul.bf16.gmra.mxu0 %v4619
        %v5640 = vpop.f32.mrf.mxu0
        %v5641 = vadd.f32 %v5552, %v5640
        %v5642 = vpop.f32.mrf.mxu0
        %v5643 = vadd.f32 %v5554, %v5642
        %5644 = vdwg.mxu0
        %5645 = vmatpush.bf16.msra.mxu0 %v5103
        %5646 = vmatpush.bf16.msra.mxu0 %v5102
        %5647 = vmatpush.bf16.msra.mxu0 %v5101
        %5648 = vmatpush.bf16.msra.mxu0 %v5100
        %5649 = vmatpush.bf16.msra.mxu0 %v5099
        %5650 = vmatpush.bf16.msra.mxu0 %v5098
        %5651 = vmatpush.bf16.msra.mxu0 %v5097
        %5652 = vmatpush.bf16.msra.mxu0 %v5096
        %5653 = vmatmul.bf16.gmra.mxu0 %v4485
        %v5654 = vpop.f32.mrf.mxu0
        %v5655 = vadd.f32 %v5566, %v5654
        %v5656 = vpop.f32.mrf.mxu0
        %v5657 = vadd.f32 %v5568, %v5656
        %5658 = vmatmul.bf16.gmra.mxu0 %v4494
        %v5659 = vpop.f32.mrf.mxu0
        %v5660 = vadd.f32 %v5571, %v5659
        %v5661 = vpop.f32.mrf.mxu0
        %v5662 = vadd.f32 %v5573, %v5661
        %5663 = vmatmul.bf16.gmra.mxu0 %v4503
        %v5664 = vpop.f32.mrf.mxu0
        %v5665 = vadd.f32 %v5576, %v5664
        %v5666 = vpop.f32.mrf.mxu0
        %v5667 = vadd.f32 %v5578, %v5666
        %5668 = vmatmul.bf16.gmra.mxu0 %v4512
        %v5669 = vpop.f32.mrf.mxu0
        %v5670 = vadd.f32 %v5581, %v5669
        %v5671 = vpop.f32.mrf.mxu0
        %v5672 = vadd.f32 %v5583, %v5671
        %5673 = vmatmul.bf16.gmra.mxu0 %v4521
        %v5674 = vpop.f32.mrf.mxu0
        %v5675 = vadd.f32 %v5586, %v5674
        %v5676 = vpop.f32.mrf.mxu0
        %v5677 = vadd.f32 %v5588, %v5676
        %5678 = vmatmul.bf16.gmra.mxu0 %v4530
        %v5679 = vpop.f32.mrf.mxu0
        %v5680 = vadd.f32 %v5591, %v5679
        %v5681 = vpop.f32.mrf.mxu0
        %v5682 = vadd.f32 %v5593, %v5681
        %5683 = vmatmul.bf16.gmra.mxu0 %v4539
        %v5684 = vpop.f32.mrf.mxu0
        %v5685 = vadd.f32 %v5596, %v5684
        %v5686 = vpop.f32.mrf.mxu0
        %v5687 = vadd.f32 %v5598, %v5686
        %5688 = vmatmul.bf16.gmra.mxu0 %v4548
        %v5689 = vpop.f32.mrf.mxu0
        %v5690 = vadd.f32 %v5601, %v5689
        %v5691 = vpop.f32.mrf.mxu0
        %v5692 = vadd.f32 %v5603, %v5691
        %5693 = vmatmul.bf16.gmra.mxu0 %v4557
        %v5694 = vpop.f32.mrf.mxu0
        %v5695 = vadd.f32 %v5606, %v5694
        %v5696 = vpop.f32.mrf.mxu0
        %v5697 = vadd.f32 %v5608, %v5696
        %5698 = vmatmul.bf16.gmra.mxu0 %v4566
        %v5699 = vpop.f32.mrf.mxu0
        %v5700 = vadd.f32 %v5611, %v5699
        %v5701 = vpop.f32.mrf.mxu0
        %v5702 = vadd.f32 %v5613, %v5701
        %5703 = vmatmul.bf16.gmra.mxu0 %v4575
        %v5704 = vpop.f32.mrf.mxu0
        %v5705 = vadd.f32 %v5616, %v5704
        %v5706 = vpop.f32.mrf.mxu0
        %v5707 = vadd.f32 %v5618, %v5706
        %5708 = vmatmul.bf16.gmra.mxu0 %v4584
        %v5709 = vpop.f32.mrf.mxu0
        %v5710 = vadd.f32 %v5621, %v5709
        %v5711 = vpop.f32.mrf.mxu0
        %v5712 = vadd.f32 %v5623, %v5711
        %5713 = vmatmul.bf16.gmra.mxu0 %v4593
        %v5714 = vpop.f32.mrf.mxu0
        %v5715 = vadd.f32 %v5626, %v5714
        %v5716 = vpop.f32.mrf.mxu0
        %v5717 = vadd.f32 %v5628, %v5716
        %5718 = vmatmul.bf16.gmra.mxu0 %v4602
        %v5719 = vpop.f32.mrf.mxu0
        %v5720 = vadd.f32 %v5631, %v5719
        %v5721 = vpop.f32.mrf.mxu0
        %v5722 = vadd.f32 %v5633, %v5721
        %5723 = vmatmul.bf16.gmra.mxu0 %v4611
        %v5724 = vpop.f32.mrf.mxu0
        %v5725 = vadd.f32 %v5636, %v5724
        %v5726 = vpop.f32.mrf.mxu0
        %v5727 = vadd.f32 %v5638, %v5726
        %5728 = vmatmul.bf16.gmra.mxu0 %v4620
        %v5729 = vpop.f32.mrf.mxu0
        %v5730 = vadd.f32 %v5641, %v5729
        %v5731 = vpop.f32.mrf.mxu0
        %v5732 = vadd.f32 %v5643, %v5731
        %5733 = vdwg.mxu0
        %5734 = vmatpush.bf16.msra.mxu0 %v5111
        %5735 = vmatpush.bf16.msra.mxu0 %v5110
        %5736 = vmatpush.bf16.msra.mxu0 %v5109
        %5737 = vmatpush.bf16.msra.mxu0 %v5108
        %5738 = vmatpush.bf16.msra.mxu0 %v5107
        %5739 = vmatpush.bf16.msra.mxu0 %v5106
        %5740 = vmatpush.bf16.msra.mxu0 %v5105
        %5741 = vmatpush.bf16.msra.mxu0 %v5104
        %5742 = vmatmul.bf16.gmra.mxu0 %v4486
        %v5743 = vpop.f32.mrf.mxu0
        %v5744 = vadd.f32 %v5655, %v5743
        %v5745 = vpop.f32.mrf.mxu0
        %v5746 = vadd.f32 %v5657, %v5745
        %5747 = vmatmul.bf16.gmra.mxu0 %v4495
        %v5748 = vpop.f32.mrf.mxu0
        %v5749 = vadd.f32 %v5660, %v5748
        %v5750 = vpop.f32.mrf.mxu0
        %v5751 = vadd.f32 %v5662, %v5750
        %5752 = vmatmul.bf16.gmra.mxu0 %v4504
        %v5753 = vpop.f32.mrf.mxu0
        %v5754 = vadd.f32 %v5665, %v5753
        %v5755 = vpop.f32.mrf.mxu0
        %v5756 = vadd.f32 %v5667, %v5755
        %5757 = vmatmul.bf16.gmra.mxu0 %v4513
        %v5758 = vpop.f32.mrf.mxu0
        %v5759 = vadd.f32 %v5670, %v5758
        %v5760 = vpop.f32.mrf.mxu0
        %v5761 = vadd.f32 %v5672, %v5760
        %5762 = vmatmul.bf16.gmra.mxu0 %v4522
        %v5763 = vpop.f32.mrf.mxu0
        %v5764 = vadd.f32 %v5675, %v5763
        %v5765 = vpop.f32.mrf.mxu0
        %v5766 = vadd.f32 %v5677, %v5765
        %5767 = vmatmul.bf16.gmra.mxu0 %v4531
        %v5768 = vpop.f32.mrf.mxu0
        %v5769 = vadd.f32 %v5680, %v5768
        %v5770 = vpop.f32.mrf.mxu0
        %v5771 = vadd.f32 %v5682, %v5770
        %5772 = vmatmul.bf16.gmra.mxu0 %v4540
        %v5773 = vpop.f32.mrf.mxu0
        %v5774 = vadd.f32 %v5685, %v5773
        %v5775 = vpop.f32.mrf.mxu0
        %v5776 = vadd.f32 %v5687, %v5775
        %5777 = vmatmul.bf16.gmra.mxu0 %v4549
        %v5778 = vpop.f32.mrf.mxu0
        %v5779 = vadd.f32 %v5690, %v5778
        %v5780 = vpop.f32.mrf.mxu0
        %v5781 = vadd.f32 %v5692, %v5780
        %5782 = vmatmul.bf16.gmra.mxu0 %v4558
        %v5783 = vpop.f32.mrf.mxu0
        %v5784 = vadd.f32 %v5695, %v5783
        %v5785 = vpop.f32.mrf.mxu0
        %v5786 = vadd.f32 %v5697, %v5785
        %5787 = vmatmul.bf16.gmra.mxu0 %v4567
        %v5788 = vpop.f32.mrf.mxu0
        %v5789 = vadd.f32 %v5700, %v5788
        %v5790 = vpop.f32.mrf.mxu0
        %v5791 = vadd.f32 %v5702, %v5790
        %5792 = vmatmul.bf16.gmra.mxu0 %v4576
        %v5793 = vpop.f32.mrf.mxu0
        %v5794 = vadd.f32 %v5705, %v5793
        %v5795 = vpop.f32.mrf.mxu0
        %v5796 = vadd.f32 %v5707, %v5795
        %5797 = vmatmul.bf16.gmra.mxu0 %v4585
        %v5798 = vpop.f32.mrf.mxu0
        %v5799 = vadd.f32 %v5710, %v5798
        %v5800 = vpop.f32.mrf.mxu0
        %v5801 = vadd.f32 %v5712, %v5800
        %5802 = vmatmul.bf16.gmra.mxu0 %v4594
        %v5803 = vpop.f32.mrf.mxu0
        %v5804 = vadd.f32 %v5715, %v5803
        %v5805 = vpop.f32.mrf.mxu0
        %v5806 = vadd.f32 %v5717, %v5805
        %5807 = vmatmul.bf16.gmra.mxu0 %v4603
        %v5808 = vpop.f32.mrf.mxu0
        %v5809 = vadd.f32 %v5720, %v5808
        %v5810 = vpop.f32.mrf.mxu0
        %v5811 = vadd.f32 %v5722, %v5810
        %5812 = vmatmul.bf16.gmra.mxu0 %v4612
        %v5813 = vpop.f32.mrf.mxu0
        %v5814 = vadd.f32 %v5725, %v5813
        %v5815 = vpop.f32.mrf.mxu0
        %v5816 = vadd.f32 %v5727, %v5815
        %5817 = vmatmul.bf16.gmra.mxu0 %v4621
        %v5818 = vpop.f32.mrf.mxu0
        %v5819 = vadd.f32 %v5730, %v5818
        %v5820 = vpop.f32.mrf.mxu0
        %v5821 = vadd.f32 %v5732, %v5820
        %5822 = vdwg.mxu0
        %5823 = vmatpush.bf16.msra.mxu0 %v5119
        %5824 = vmatpush.bf16.msra.mxu0 %v5118
        %5825 = vmatpush.bf16.msra.mxu0 %v5117
        %5826 = vmatpush.bf16.msra.mxu0 %v5116
        %5827 = vmatpush.bf16.msra.mxu0 %v5115
        %5828 = vmatpush.bf16.msra.mxu0 %v5114
        %5829 = vmatpush.bf16.msra.mxu0 %v5113
        %5830 = vmatpush.bf16.msra.mxu0 %v5112
        %5831 = vmatmul.bf16.gmra.mxu0 %v4487
        %v5832 = vpop.f32.mrf.mxu0
        %v5833 = vadd.f32 %v5744, %v5832
        %v5834 = vpop.f32.mrf.mxu0
        %v5835 = vadd.f32 %v5746, %v5834
        %5836 = vmatmul.bf16.gmra.mxu0 %v4496
        %v5837 = vpop.f32.mrf.mxu0
        %v5838 = vadd.f32 %v5749, %v5837
        %v5839 = vpop.f32.mrf.mxu0
        %v5840 = vadd.f32 %v5751, %v5839
        %5841 = vmatmul.bf16.gmra.mxu0 %v4505
        %v5842 = vpop.f32.mrf.mxu0
        %v5843 = vadd.f32 %v5754, %v5842
        %v5844 = vpop.f32.mrf.mxu0
        %v5845 = vadd.f32 %v5756, %v5844
        %5846 = vmatmul.bf16.gmra.mxu0 %v4514
        %v5847 = vpop.f32.mrf.mxu0
        %v5848 = vadd.f32 %v5759, %v5847
        %v5849 = vpop.f32.mrf.mxu0
        %v5850 = vadd.f32 %v5761, %v5849
        %5851 = vmatmul.bf16.gmra.mxu0 %v4523
        %v5852 = vpop.f32.mrf.mxu0
        %v5853 = vadd.f32 %v5764, %v5852
        %v5854 = vpop.f32.mrf.mxu0
        %v5855 = vadd.f32 %v5766, %v5854
        %5856 = vmatmul.bf16.gmra.mxu0 %v4532
        %v5857 = vpop.f32.mrf.mxu0
        %v5858 = vadd.f32 %v5769, %v5857
        %v5859 = vpop.f32.mrf.mxu0
        %v5860 = vadd.f32 %v5771, %v5859
        %5861 = vmatmul.bf16.gmra.mxu0 %v4541
        %v5862 = vpop.f32.mrf.mxu0
        %v5863 = vadd.f32 %v5774, %v5862
        %v5864 = vpop.f32.mrf.mxu0
        %v5865 = vadd.f32 %v5776, %v5864
        %5866 = vmatmul.bf16.gmra.mxu0 %v4550
        %v5867 = vpop.f32.mrf.mxu0
        %v5868 = vadd.f32 %v5779, %v5867
        %v5869 = vpop.f32.mrf.mxu0
        %v5870 = vadd.f32 %v5781, %v5869
        %5871 = vmatmul.bf16.gmra.mxu0 %v4559
        %v5872 = vpop.f32.mrf.mxu0
        %v5873 = vadd.f32 %v5784, %v5872
        %v5874 = vpop.f32.mrf.mxu0
        %v5875 = vadd.f32 %v5786, %v5874
        %5876 = vmatmul.bf16.gmra.mxu0 %v4568
        %v5877 = vpop.f32.mrf.mxu0
        %v5878 = vadd.f32 %v5789, %v5877
        %v5879 = vpop.f32.mrf.mxu0
        %v5880 = vadd.f32 %v5791, %v5879
        %5881 = vmatmul.bf16.gmra.mxu0 %v4577
        %v5882 = vpop.f32.mrf.mxu0
        %v5883 = vadd.f32 %v5794, %v5882
        %v5884 = vpop.f32.mrf.mxu0
        %v5885 = vadd.f32 %v5796, %v5884
        %5886 = vmatmul.bf16.gmra.mxu0 %v4586
        %v5887 = vpop.f32.mrf.mxu0
        %v5888 = vadd.f32 %v5799, %v5887
        %v5889 = vpop.f32.mrf.mxu0
        %v5890 = vadd.f32 %v5801, %v5889
        %5891 = vmatmul.bf16.gmra.mxu0 %v4595
        %v5892 = vpop.f32.mrf.mxu0
        %v5893 = vadd.f32 %v5804, %v5892
        %v5894 = vpop.f32.mrf.mxu0
        %v5895 = vadd.f32 %v5806, %v5894
        %5896 = vmatmul.bf16.gmra.mxu0 %v4604
        %v5897 = vpop.f32.mrf.mxu0
        %v5898 = vadd.f32 %v5809, %v5897
        %v5899 = vpop.f32.mrf.mxu0
        %v5900 = vadd.f32 %v5811, %v5899
        %5901 = vmatmul.bf16.gmra.mxu0 %v4613
        %v5902 = vpop.f32.mrf.mxu0
        %v5903 = vadd.f32 %v5814, %v5902
        %v5904 = vpop.f32.mrf.mxu0
        %v5905 = vadd.f32 %v5816, %v5904
        %5906 = vmatmul.bf16.gmra.mxu0 %v4622
        %v5907 = vpop.f32.mrf.mxu0
        %v5908 = vadd.f32 %v5819, %v5907
        %v5909 = vpop.f32.mrf.mxu0
        %v5910 = vadd.f32 %v5821, %v5909
        %5911 = vdwg.mxu0
        %5912 = vmatpush.bf16.msra.mxu0 %v5127
        %5913 = vmatpush.bf16.msra.mxu0 %v5126
        %5914 = vmatpush.bf16.msra.mxu0 %v5125
        %5915 = vmatpush.bf16.msra.mxu0 %v5124
        %5916 = vmatpush.bf16.msra.mxu0 %v5123
        %5917 = vmatpush.bf16.msra.mxu0 %v5122
        %5918 = vmatpush.bf16.msra.mxu0 %v5121
        %5919 = vmatpush.bf16.msra.mxu0 %v5120
        %5920 = vmatmul.bf16.gmra.mxu0 %v4488
        %v5921 = vpop.f32.mrf.mxu0
        %v5922 = vadd.f32 %v5833, %v5921
        %v5923 = vpop.f32.mrf.mxu0
        %v5924 = vadd.f32 %v5835, %v5923
        %5925 = vmatmul.bf16.gmra.mxu0 %v4497
        %v5926 = vpop.f32.mrf.mxu0
        %v5927 = vadd.f32 %v5838, %v5926
        %v5928 = vpop.f32.mrf.mxu0
        %v5929 = vadd.f32 %v5840, %v5928
        %5930 = vmatmul.bf16.gmra.mxu0 %v4506
        %v5931 = vpop.f32.mrf.mxu0
        %v5932 = vadd.f32 %v5843, %v5931
        %v5933 = vpop.f32.mrf.mxu0
        %v5934 = vadd.f32 %v5845, %v5933
        %5935 = vmatmul.bf16.gmra.mxu0 %v4515
        %v5936 = vpop.f32.mrf.mxu0
        %v5937 = vadd.f32 %v5848, %v5936
        %v5938 = vpop.f32.mrf.mxu0
        %v5939 = vadd.f32 %v5850, %v5938
        %5940 = vmatmul.bf16.gmra.mxu0 %v4524
        %v5941 = vpop.f32.mrf.mxu0
        %v5942 = vadd.f32 %v5853, %v5941
        %v5943 = vpop.f32.mrf.mxu0
        %v5944 = vadd.f32 %v5855, %v5943
        %5945 = vmatmul.bf16.gmra.mxu0 %v4533
        %v5946 = vpop.f32.mrf.mxu0
        %v5947 = vadd.f32 %v5858, %v5946
        %v5948 = vpop.f32.mrf.mxu0
        %v5949 = vadd.f32 %v5860, %v5948
        %5950 = vmatmul.bf16.gmra.mxu0 %v4542
        %v5951 = vpop.f32.mrf.mxu0
        %v5952 = vadd.f32 %v5863, %v5951
        %v5953 = vpop.f32.mrf.mxu0
        %v5954 = vadd.f32 %v5865, %v5953
        %5955 = vmatmul.bf16.gmra.mxu0 %v4551
        %v5956 = vpop.f32.mrf.mxu0
        %v5957 = vadd.f32 %v5868, %v5956
        %v5958 = vpop.f32.mrf.mxu0
        %v5959 = vadd.f32 %v5870, %v5958
        %5960 = vmatmul.bf16.gmra.mxu0 %v4560
        %v5961 = vpop.f32.mrf.mxu0
        %v5962 = vadd.f32 %v5873, %v5961
        %v5963 = vpop.f32.mrf.mxu0
        %v5964 = vadd.f32 %v5875, %v5963
        %5965 = vmatmul.bf16.gmra.mxu0 %v4569
        %v5966 = vpop.f32.mrf.mxu0
        %v5967 = vadd.f32 %v5878, %v5966
        %v5968 = vpop.f32.mrf.mxu0
        %v5969 = vadd.f32 %v5880, %v5968
        %5970 = vmatmul.bf16.gmra.mxu0 %v4578
        %v5971 = vpop.f32.mrf.mxu0
        %v5972 = vadd.f32 %v5883, %v5971
        %v5973 = vpop.f32.mrf.mxu0
        %v5974 = vadd.f32 %v5885, %v5973
        %5975 = vmatmul.bf16.gmra.mxu0 %v4587
        %v5976 = vpop.f32.mrf.mxu0
        %v5977 = vadd.f32 %v5888, %v5976
        %v5978 = vpop.f32.mrf.mxu0
        %v5979 = vadd.f32 %v5890, %v5978
        %5980 = vmatmul.bf16.gmra.mxu0 %v4596
        %v5981 = vpop.f32.mrf.mxu0
        %v5982 = vadd.f32 %v5893, %v5981
        %v5983 = vpop.f32.mrf.mxu0
        %v5984 = vadd.f32 %v5895, %v5983
        %5985 = vmatmul.bf16.gmra.mxu0 %v4605
        %v5986 = vpop.f32.mrf.mxu0
        %v5987 = vadd.f32 %v5898, %v5986
        %v5988 = vpop.f32.mrf.mxu0
        %v5989 = vadd.f32 %v5900, %v5988
        %5990 = vmatmul.bf16.gmra.mxu0 %v4614
        %v5991 = vpop.f32.mrf.mxu0
        %v5992 = vadd.f32 %v5903, %v5991
        %v5993 = vpop.f32.mrf.mxu0
        %v5994 = vadd.f32 %v5905, %v5993
        %5995 = vmatmul.bf16.gmra.mxu0 %v4623
        %v5996 = vpop.f32.mrf.mxu0
        %v5997 = vadd.f32 %v5908, %v5996
        %v5998 = vpop.f32.mrf.mxu0
        %v5999 = vadd.f32 %v5910, %v5998
        %6000 = vdwg.mxu0
        %v6001 = vmax.f32 %v5922, 0.0
        %v6002 = vmax.f32 %v5924, 0.0
        %v6003 = vmax.f32 %v5927, 0.0
        %v6004 = vmax.f32 %v5929, 0.0
        %v6005 = vmax.f32 %v5932, 0.0
        %v6006 = vmax.f32 %v5934, 0.0
        %v6007 = vmax.f32 %v5937, 0.0
        %v6008 = vmax.f32 %v5939, 0.0
        %v6009 = vmax.f32 %v5942, 0.0
        %v6010 = vmax.f32 %v5944, 0.0
        %v6011 = vmax.f32 %v5947, 0.0
        %v6012 = vmax.f32 %v5949, 0.0
        %v6013 = vmax.f32 %v5952, 0.0
        %v6014 = vmax.f32 %v5954, 0.0
        %v6015 = vmax.f32 %v5957, 0.0
        %v6016 = vmax.f32 %v5959, 0.0
        %v6017 = vmax.f32 %v5962, 0.0
        %v6018 = vmax.f32 %v5964, 0.0
        %v6019 = vmax.f32 %v5967, 0.0
        %v6020 = vmax.f32 %v5969, 0.0
        %v6021 = vmax.f32 %v5972, 0.0
        %v6022 = vmax.f32 %v5974, 0.0
        %v6023 = vmax.f32 %v5977, 0.0
        %v6024 = vmax.f32 %v5979, 0.0
        %v6025 = vmax.f32 %v5982, 0.0
        %v6026 = vmax.f32 %v5984, 0.0
        %v6027 = vmax.f32 %v5987, 0.0
        %v6028 = vmax.f32 %v5989, 0.0
        %v6029 = vmax.f32 %v5992, 0.0
        %v6030 = vmax.f32 %v5994, 0.0
        %v6031 = vmax.f32 %v5997, 0.0
        %v6032 = vmax.f32 %v5999, 0.0
        %v6033 = vpack.c.bf16 %v6002, %v6001
        %v6034 = vpack.c.bf16 %v6004, %v6003
        %v6035 = vpack.c.bf16 %v6006, %v6005
        %v6036 = vpack.c.bf16 %v6008, %v6007
        %v6037 = vpack.c.bf16 %v6010, %v6009
        %v6038 = vpack.c.bf16 %v6012, %v6011
        %v6039 = vpack.c.bf16 %v6014, %v6013
        %v6040 = vpack.c.bf16 %v6016, %v6015
        %v6041 = vpack.c.bf16 %v6018, %v6017
        %v6042 = vpack.c.bf16 %v6020, %v6019
        %v6043 = vpack.c.bf16 %v6022, %v6021
        %v6044 = vpack.c.bf16 %v6024, %v6023
        %v6045 = vpack.c.bf16 %v6026, %v6025
        %v6046 = vpack.c.bf16 %v6028, %v6027
        %v6047 = vpack.c.bf16 %v6030, %v6029
        %v6048 = vpack.c.bf16 %v6032, %v6031
        %v6049 = vld [vmem:[%s5] sm:$0xf]
        %v6050 = vld [vmem:[%s5 + $0x4] sm:$0xf]
        %v6051 = vld [vmem:[%s5 + $0x8] sm:$0xf]
        %v6052 = vld [vmem:[%s5 + $0xc] sm:$0xf]
        %v6053 = vld [vmem:[%s5 + $0x10] sm:$0xf]
        %v6054 = vld [vmem:[%s5 + $0x14] sm:$0xf]
        %v6055 = vld [vmem:[%s5 + $0x18] sm:$0xf]
        %v6056 = vld [vmem:[%s5 + $0x1c] sm:$0xf]
        %v6057 = vld [vmem:[%s5 + $0x20] sm:$0xf]
        %v6058 = vld [vmem:[%s5 + $0x24] sm:$0xf]
        %v6059 = vld [vmem:[%s5 + $0x28] sm:$0xf]
        %v6060 = vld [vmem:[%s5 + $0x2c] sm:$0xf]
        %v6061 = vld [vmem:[%s5 + $0x30] sm:$0xf]
        %v6062 = vld [vmem:[%s5 + $0x34] sm:$0xf]
        %v6063 = vld [vmem:[%s5 + $0x38] sm:$0xf]
        %v6064 = vld [vmem:[%s5 + $0x3c] sm:$0xf]
        %v6065 = vld [vmem:[%s6] sm:$0x1]
        %v6067 = vperm.slane %v6065, 0
        %v6085 = vunpack.c.l.b16 %v6049
        %v6086 = vunpack.c.l.b16 %v6050
        %v6087 = vunpack.c.l.b16 %v6051
        %v6088 = vunpack.c.l.b16 %v6052
        %v6089 = vunpack.c.l.b16 %v6053
        %v6090 = vunpack.c.l.b16 %v6054
        %v6091 = vunpack.c.l.b16 %v6055
        %v6092 = vunpack.c.l.b16 %v6056
        %v6093 = vunpack.c.l.b16 %v6057
        %v6094 = vunpack.c.l.b16 %v6058
        %v6095 = vunpack.c.l.b16 %v6059
        %v6096 = vunpack.c.l.b16 %v6060
        %v6097 = vunpack.c.l.b16 %v6061
        %v6098 = vunpack.c.l.b16 %v6062
        %v6099 = vunpack.c.l.b16 %v6063
        %v6100 = vunpack.c.l.b16 %v6064
        %v6101 = vpack.c.b16 %v6086, %v6085
        %v6102 = vpack.c.b16 %v6088, %v6087
        %v6103 = vpack.c.b16 %v6090, %v6089
        %v6104 = vpack.c.b16 %v6092, %v6091
        %v6105 = vpack.c.b16 %v6094, %v6093
        %v6106 = vpack.c.b16 %v6096, %v6095
        %v6107 = vpack.c.b16 %v6098, %v6097
        %v6108 = vpack.c.b16 %v6100, %v6099
        %6117 = vmatpush.bf16.msra.mxu0 %v6108
        %6118 = vmatpush.bf16.msra.mxu0 %v6107
        %6119 = vmatpush.bf16.msra.mxu0 %v6106
        %6120 = vmatpush.bf16.msra.mxu0 %v6105
        %6121 = vmatpush.bf16.msra.mxu0 %v6104
        %6122 = vmatpush.bf16.msra.mxu0 %v6103
        %6123 = vmatpush.bf16.msra.mxu0 %v6102
        %6124 = vmatpush.bf16.msra.mxu0 %v6101
        %6125 = vmatmul.bf16.gmra.mxu0 %v6033
        %v6126 = vpop.f32.mrf.mxu0
        %v6127 = vadd.f32 %v6067, %v6126
        %v6128 = vpop.f32.mrf.mxu0
        %v6129 = vadd.f32 %v6067, %v6128
        %6130 = vmatmul.bf16.gmra.mxu0 %v6034
        %v6131 = vpop.f32.mrf.mxu0
        %v6132 = vadd.f32 %v6067, %v6131
        %v6133 = vpop.f32.mrf.mxu0
        %v6134 = vadd.f32 %v6067, %v6133
        %6135 = vmatmul.bf16.gmra.mxu0 %v6035
        %v6136 = vpop.f32.mrf.mxu0
        %v6137 = vadd.f32 %v6067, %v6136
        %v6138 = vpop.f32.mrf.mxu0
        %v6139 = vadd.f32 %v6067, %v6138
        %6140 = vmatmul.bf16.gmra.mxu0 %v6036
        %v6141 = vpop.f32.mrf.mxu0
        %v6142 = vadd.f32 %v6067, %v6141
        %v6143 = vpop.f32.mrf.mxu0
        %v6144 = vadd.f32 %v6067, %v6143
        %6145 = vmatmul.bf16.gmra.mxu0 %v6037
        %v6146 = vpop.f32.mrf.mxu0
        %v6147 = vadd.f32 %v6067, %v6146
        %v6148 = vpop.f32.mrf.mxu0
        %v6149 = vadd.f32 %v6067, %v6148
        %6150 = vmatmul.bf16.gmra.mxu0 %v6038
        %v6151 = vpop.f32.mrf.mxu0
        %v6152 = vadd.f32 %v6067, %v6151
        %v6153 = vpop.f32.mrf.mxu0
        %v6154 = vadd.f32 %v6067, %v6153
        %6155 = vmatmul.bf16.gmra.mxu0 %v6039
        %v6156 = vpop.f32.mrf.mxu0
        %v6157 = vadd.f32 %v6067, %v6156
        %v6158 = vpop.f32.mrf.mxu0
        %v6159 = vadd.f32 %v6067, %v6158
        %6160 = vmatmul.bf16.gmra.mxu0 %v6040
        %v6161 = vpop.f32.mrf.mxu0
        %v6162 = vadd.f32 %v6067, %v6161
        %v6163 = vpop.f32.mrf.mxu0
        %v6164 = vadd.f32 %v6067, %v6163
        %6165 = vmatmul.bf16.gmra.mxu0 %v6041
        %v6166 = vpop.f32.mrf.mxu0
        %v6167 = vadd.f32 %v6067, %v6166
        %v6168 = vpop.f32.mrf.mxu0
        %v6169 = vadd.f32 %v6067, %v6168
        %6170 = vmatmul.bf16.gmra.mxu0 %v6042
        %v6171 = vpop.f32.mrf.mxu0
        %v6172 = vadd.f32 %v6067, %v6171
        %v6173 = vpop.f32.mrf.mxu0
        %v6174 = vadd.f32 %v6067, %v6173
        %6175 = vmatmul.bf16.gmra.mxu0 %v6043
        %v6176 = vpop.f32.mrf.mxu0
        %v6177 = vadd.f32 %v6067, %v6176
        %v6178 = vpop.f32.mrf.mxu0
        %v6179 = vadd.f32 %v6067, %v6178
        %6180 = vmatmul.bf16.gmra.mxu0 %v6044
        %v6181 = vpop.f32.mrf.mxu0
        %v6182 = vadd.f32 %v6067, %v6181
        %v6183 = vpop.f32.mrf.mxu0
        %v6184 = vadd.f32 %v6067, %v6183
        %6185 = vmatmul.bf16.gmra.mxu0 %v6045
        %v6186 = vpop.f32.mrf.mxu0
        %v6187 = vadd.f32 %v6067, %v6186
        %v6188 = vpop.f32.mrf.mxu0
        %v6189 = vadd.f32 %v6067, %v6188
        %6190 = vmatmul.bf16.gmra.mxu0 %v6046
        %v6191 = vpop.f32.mrf.mxu0
        %v6192 = vadd.f32 %v6067, %v6191
        %v6193 = vpop.f32.mrf.mxu0
        %v6194 = vadd.f32 %v6067, %v6193
        %6195 = vmatmul.bf16.gmra.mxu0 %v6047
        %v6196 = vpop.f32.mrf.mxu0
        %v6197 = vadd.f32 %v6067, %v6196
        %v6198 = vpop.f32.mrf.mxu0
        %v6199 = vadd.f32 %v6067, %v6198
        %6200 = vmatmul.bf16.gmra.mxu0 %v6048
        %v6201 = vpop.f32.mrf.mxu0
        %v6202 = vadd.f32 %v6067, %v6201
        %v6203 = vpop.f32.mrf.mxu0
        %v6204 = vadd.f32 %v6067, %v6203
        %6205 = vdwg.mxu0
        %v6206 = vld [vmem:[%s7] sm:$0x3]
        %v6207 = vld [vmem:[%s8] sm:$0x1]
        %v6209 = vperm.slane %v6207, 0
        %v6212 = vsel %vm517, %v6206, 0
        %6214 = vmatpush.bf16.msra.mxu0 0
        %6215 = vmatpush.bf16.msra.mxu0 0
        %6216 = vmatpush.bf16.msra.mxu0 0
        %6217 = vmatpush.bf16.msra.mxu0 0
        %6218 = vmatpush.bf16.msra.mxu0 0
        %6219 = vmatpush.bf16.msra.mxu0 0
        %6220 = vmatpush.bf16.msra.mxu0 0
        %6221 = vmatpush.bf16.msra.mxu0 %v6212
        %6222 = vmatmul.bf16.gmra.mxu0 %v470
        %v6223 = vpop.f32.mrf.mxu0
        %v6224 = vadd.f32 %v6209, %v6223
        %v6225 = vpop.f32.mrf.mxu0
        %v6226 = vadd.f32 %v6209, %v6225
        %6227 = vmatmul.bf16.gmra.mxu0 %v473
        %v6228 = vpop.f32.mrf.mxu0
        %v6229 = vadd.f32 %v6209, %v6228
        %v6230 = vpop.f32.mrf.mxu0
        %v6231 = vadd.f32 %v6209, %v6230
        %6232 = vmatmul.bf16.gmra.mxu0 %v476
        %v6233 = vpop.f32.mrf.mxu0
        %v6234 = vadd.f32 %v6209, %v6233
        %v6235 = vpop.f32.mrf.mxu0
        %v6236 = vadd.f32 %v6209, %v6235
        %6237 = vmatmul.bf16.gmra.mxu0 %v479
        %v6238 = vpop.f32.mrf.mxu0
        %v6239 = vadd.f32 %v6209, %v6238
        %v6240 = vpop.f32.mrf.mxu0
        %v6241 = vadd.f32 %v6209, %v6240
        %6242 = vmatmul.bf16.gmra.mxu0 %v482
        %v6243 = vpop.f32.mrf.mxu0
        %v6244 = vadd.f32 %v6209, %v6243
        %v6245 = vpop.f32.mrf.mxu0
        %v6246 = vadd.f32 %v6209, %v6245
        %6247 = vmatmul.bf16.gmra.mxu0 %v485
        %v6248 = vpop.f32.mrf.mxu0
        %v6249 = vadd.f32 %v6209, %v6248
        %v6250 = vpop.f32.mrf.mxu0
        %v6251 = vadd.f32 %v6209, %v6250
        %6252 = vmatmul.bf16.gmra.mxu0 %v488
        %v6253 = vpop.f32.mrf.mxu0
        %v6254 = vadd.f32 %v6209, %v6253
        %v6255 = vpop.f32.mrf.mxu0
        %v6256 = vadd.f32 %v6209, %v6255
        %6257 = vmatmul.bf16.gmra.mxu0 %v491
        %v6258 = vpop.f32.mrf.mxu0
        %v6259 = vadd.f32 %v6209, %v6258
        %v6260 = vpop.f32.mrf.mxu0
        %v6261 = vadd.f32 %v6209, %v6260
        %6262 = vmatmul.bf16.gmra.mxu0 %v494
        %v6263 = vpop.f32.mrf.mxu0
        %v6264 = vadd.f32 %v6209, %v6263
        %v6265 = vpop.f32.mrf.mxu0
        %v6266 = vadd.f32 %v6209, %v6265
        %6267 = vmatmul.bf16.gmra.mxu0 %v497
        %v6268 = vpop.f32.mrf.mxu0
        %v6269 = vadd.f32 %v6209, %v6268
        %v6270 = vpop.f32.mrf.mxu0
        %v6271 = vadd.f32 %v6209, %v6270
        %6272 = vmatmul.bf16.gmra.mxu0 %v500
        %v6273 = vpop.f32.mrf.mxu0
        %v6274 = vadd.f32 %v6209, %v6273
        %v6275 = vpop.f32.mrf.mxu0
        %v6276 = vadd.f32 %v6209, %v6275
        %6277 = vmatmul.bf16.gmra.mxu0 %v503
        %v6278 = vpop.f32.mrf.mxu0
        %v6279 = vadd.f32 %v6209, %v6278
        %v6280 = vpop.f32.mrf.mxu0
        %v6281 = vadd.f32 %v6209, %v6280
        %6282 = vmatmul.bf16.gmra.mxu0 %v506
        %v6283 = vpop.f32.mrf.mxu0
        %v6284 = vadd.f32 %v6209, %v6283
        %v6285 = vpop.f32.mrf.mxu0
        %v6286 = vadd.f32 %v6209, %v6285
        %6287 = vmatmul.bf16.gmra.mxu0 %v509
        %v6288 = vpop.f32.mrf.mxu0
        %v6289 = vadd.f32 %v6209, %v6288
        %v6290 = vpop.f32.mrf.mxu0
        %v6291 = vadd.f32 %v6209, %v6290
        %6292 = vmatmul.bf16.gmra.mxu0 %v512
        %v6293 = vpop.f32.mrf.mxu0
        %v6294 = vadd.f32 %v6209, %v6293
        %v6295 = vpop.f32.mrf.mxu0
        %v6296 = vadd.f32 %v6209, %v6295
        %6297 = vmatmul.bf16.gmra.mxu0 %v515
        %v6298 = vpop.f32.mrf.mxu0
        %v6299 = vadd.f32 %v6209, %v6298
        %v6300 = vpop.f32.mrf.mxu0
        %v6301 = vadd.f32 %v6209, %v6300
        %6302 = vdwg.mxu0
        %v6303 = vadd.f32 %v6127, %v6224
        %v6304 = vadd.f32 %v6129, %v6226
        %v6305 = vadd.f32 %v6132, %v6229
        %v6306 = vadd.f32 %v6134, %v6231
        %v6307 = vadd.f32 %v6137, %v6234
        %v6308 = vadd.f32 %v6139, %v6236
        %v6309 = vadd.f32 %v6142, %v6239
        %v6310 = vadd.f32 %v6144, %v6241
        %v6311 = vadd.f32 %v6147, %v6244
        %v6312 = vadd.f32 %v6149, %v6246
        %v6313 = vadd.f32 %v6152, %v6249
        %v6314 = vadd.f32 %v6154, %v6251
        %v6315 = vadd.f32 %v6157, %v6254
        %v6316 = vadd.f32 %v6159, %v6256
        %v6317 = vadd.f32 %v6162, %v6259
        %v6318 = vadd.f32 %v6164, %v6261
        %v6319 = vadd.f32 %v6167, %v6264
        %v6320 = vadd.f32 %v6169, %v6266
        %v6321 = vadd.f32 %v6172, %v6269
        %v6322 = vadd.f32 %v6174, %v6271
        %v6323 = vadd.f32 %v6177, %v6274
        %v6324 = vadd.f32 %v6179, %v6276
        %v6325 = vadd.f32 %v6182, %v6279
        %v6326 = vadd.f32 %v6184, %v6281
        %v6327 = vadd.f32 %v6187, %v6284
        %v6328 = vadd.f32 %v6189, %v6286
        %v6329 = vadd.f32 %v6192, %v6289
        %v6330 = vadd.f32 %v6194, %v6291
        %v6331 = vadd.f32 %v6197, %v6294
        %v6332 = vadd.f32 %v6199, %v6296
        %v6333 = vadd.f32 %v6202, %v6299
        %v6334 = vadd.f32 %v6204, %v6301
        %v6335 = vmax.f32 %v6303, 0.0
        %v6336 = vmax.f32 %v6304, 0.0
        %v6337 = vmax.f32 %v6305, 0.0
        %v6338 = vmax.f32 %v6306, 0.0
        %v6339 = vmax.f32 %v6307, 0.0
        %v6340 = vmax.f32 %v6308, 0.0
        %v6341 = vmax.f32 %v6309, 0.0
        %v6342 = vmax.f32 %v6310, 0.0
        %v6343 = vmax.f32 %v6311, 0.0
        %v6344 = vmax.f32 %v6312, 0.0
        %v6345 = vmax.f32 %v6313, 0.0
        %v6346 = vmax.f32 %v6314, 0.0
        %v6347 = vmax.f32 %v6315, 0.0
        %v6348 = vmax.f32 %v6316, 0.0
        %v6349 = vmax.f32 %v6317, 0.0
        %v6350 = vmax.f32 %v6318, 0.0
        %v6351 = vmax.f32 %v6319, 0.0
        %v6352 = vmax.f32 %v6320, 0.0
        %v6353 = vmax.f32 %v6321, 0.0
        %v6354 = vmax.f32 %v6322, 0.0
        %v6355 = vmax.f32 %v6323, 0.0
        %v6356 = vmax.f32 %v6324, 0.0
        %v6357 = vmax.f32 %v6325, 0.0
        %v6358 = vmax.f32 %v6326, 0.0
        %v6359 = vmax.f32 %v6327, 0.0
        %v6360 = vmax.f32 %v6328, 0.0
        %v6361 = vmax.f32 %v6329, 0.0
        %v6362 = vmax.f32 %v6330, 0.0
        %v6363 = vmax.f32 %v6331, 0.0
        %v6364 = vmax.f32 %v6332, 0.0
        %v6365 = vmax.f32 %v6333, 0.0
        %v6366 = vmax.f32 %v6334, 0.0
        %v6367 = vpack.c.bf16 %v6335, %v6335
        %v6368 = vpack.c.bf16 %v6336, %v6336
        %v6369 = vpack.c.bf16 %v6337, %v6337
        %v6370 = vpack.c.bf16 %v6338, %v6338
        %v6371 = vpack.c.bf16 %v6339, %v6339
        %v6372 = vpack.c.bf16 %v6340, %v6340
        %v6373 = vpack.c.bf16 %v6341, %v6341
        %v6374 = vpack.c.bf16 %v6342, %v6342
        %v6375 = vpack.c.bf16 %v6343, %v6343
        %v6376 = vpack.c.bf16 %v6344, %v6344
        %v6377 = vpack.c.bf16 %v6345, %v6345
        %v6378 = vpack.c.bf16 %v6346, %v6346
        %v6379 = vpack.c.bf16 %v6347, %v6347
        %v6380 = vpack.c.bf16 %v6348, %v6348
        %v6381 = vpack.c.bf16 %v6349, %v6349
        %v6382 = vpack.c.bf16 %v6350, %v6350
        %v6383 = vpack.c.bf16 %v6351, %v6351
        %v6384 = vpack.c.bf16 %v6352, %v6352
        %v6385 = vpack.c.bf16 %v6353, %v6353
        %v6386 = vpack.c.bf16 %v6354, %v6354
        %v6387 = vpack.c.bf16 %v6355, %v6355
        %v6388 = vpack.c.bf16 %v6356, %v6356
        %v6389 = vpack.c.bf16 %v6357, %v6357
        %v6390 = vpack.c.bf16 %v6358, %v6358
        %v6391 = vpack.c.bf16 %v6359, %v6359
        %v6392 = vpack.c.bf16 %v6360, %v6360
        %v6393 = vpack.c.bf16 %v6361, %v6361
        %v6394 = vpack.c.bf16 %v6362, %v6362
        %v6395 = vpack.c.bf16 %v6363, %v6363
        %v6396 = vpack.c.bf16 %v6364, %v6364
        %v6397 = vpack.c.bf16 %v6365, %v6365
        %v6398 = vpack.c.bf16 %v6366, %v6366
        %vm6399 = vcmask 60416
        %6400 = vst.msk [vmem:[%s349] sm:$0xf] %vm6399, %v6367
        %6401 = vst.msk [vmem:[%s349 + $0x4] sm:$0xf] %vm6399, %v6368
        %6402 = vst.msk [vmem:[%s349 + $0x8] sm:$0xf] %vm6399, %v6369
        %6403 = vst.msk [vmem:[%s349 + $0xc] sm:$0xf] %vm6399, %v6370
        %6404 = vst.msk [vmem:[%s349 + $0x10] sm:$0xf] %vm6399, %v6371
        %6405 = vst.msk [vmem:[%s349 + $0x14] sm:$0xf] %vm6399, %v6372
        %6406 = vst.msk [vmem:[%s349 + $0x18] sm:$0xf] %vm6399, %v6373
        %6407 = vst.msk [vmem:[%s349 + $0x1c] sm:$0xf] %vm6399, %v6374
        %6408 = vst.msk [vmem:[%s349 + $0x20] sm:$0xf] %vm6399, %v6375
        %6409 = vst.msk [vmem:[%s349 + $0x24] sm:$0xf] %vm6399, %v6376
        %6410 = vst.msk [vmem:[%s349 + $0x28] sm:$0xf] %vm6399, %v6377
        %6411 = vst.msk [vmem:[%s349 + $0x2c] sm:$0xf] %vm6399, %v6378
        %6412 = vst.msk [vmem:[%s349 + $0x30] sm:$0xf] %vm6399, %v6379
        %6413 = vst.msk [vmem:[%s349 + $0x34] sm:$0xf] %vm6399, %v6380
        %6414 = vst.msk [vmem:[%s349 + $0x38] sm:$0xf] %vm6399, %v6381
        %6415 = vst.msk [vmem:[%s349 + $0x3c] sm:$0xf] %vm6399, %v6382
        %6416 = vst.msk [vmem:[%s349 + $0x40] sm:$0xf] %vm6399, %v6383
        %6417 = vst.msk [vmem:[%s349 + $0x44] sm:$0xf] %vm6399, %v6384
        %6418 = vst.msk [vmem:[%s349 + $0x48] sm:$0xf] %vm6399, %v6385
        %6419 = vst.msk [vmem:[%s349 + $0x4c] sm:$0xf] %vm6399, %v6386
        %6420 = vst.msk [vmem:[%s349 + $0x50] sm:$0xf] %vm6399, %v6387
        %6421 = vst.msk [vmem:[%s349 + $0x54] sm:$0xf] %vm6399, %v6388
        %6422 = vst.msk [vmem:[%s349 + $0x58] sm:$0xf] %vm6399, %v6389
        %6423 = vst.msk [vmem:[%s349 + $0x5c] sm:$0xf] %vm6399, %v6390
        %6424 = vst.msk [vmem:[%s349 + $0x60] sm:$0xf] %vm6399, %v6391
        %6425 = vst.msk [vmem:[%s349 + $0x64] sm:$0xf] %vm6399, %v6392
        %6426 = vst.msk [vmem:[%s349 + $0x68] sm:$0xf] %vm6399, %v6393
        %6427 = vst.msk [vmem:[%s349 + $0x6c] sm:$0xf] %vm6399, %v6394
        %6428 = vst.msk [vmem:[%s349 + $0x70] sm:$0xf] %vm6399, %v6395
        %6429 = vst.msk [vmem:[%s349 + $0x74] sm:$0xf] %vm6399, %v6396
        %6430 = vst.msk [vmem:[%s349 + $0x78] sm:$0xf] %vm6399, %v6397
        %6431 = vst.msk [vmem:[%s349 + $0x7c] sm:$0xf] %vm6399, %v6398
        %p6432 = scmp.lt.s32.totalorder %s21, 1
        %s6433 = scalar_select %p6432, %s21, 1
        %s6434 = smul.addr %s6433, 32
        %s6435 = smul.addr %s6434, 4
        %s6436 = scalar_lea.vmem %s9, %s6435
        // Predicated region
        $region61: #{tpu_custom_call.1} parent=55 // pred_check
          %p6437 = pneg %p233
        $region62: #{tpu_custom_call.1} parent=55 // pred_check_branch
          %6439 = sbr.rel (%p6437) target = $region64
        $region63: #{tpu_custom_call.1} parent=55 // pred_region
          _
        $region64: #{tpu_custom_call.1} parent=55 // pred_fallthru
          _
      $region56: #{tpu_custom_call.1} parent=5 // pred_fallthru
        _
      %p6440 = scmp.le.s32.totalorder 2, %s16
      // Predicated region
      $region65: #{tpu_custom_call.1} parent=5 // pred_check
        %p6441 = pneg %p6440
      $region66: #{tpu_custom_call.1} parent=5 // pred_check_branch
        %6443 = sbr.rel (%p6441) target = $region68
      $region67: #{tpu_custom_call.1} parent=5 // pred_region
        %s6444 = ssub.s32 %s16, 2
        // Predicated region
        $region69: #{tpu_custom_call.1} parent=67 // pred_check
          %p6445 = pneg %p239
        $region70: #{tpu_custom_call.1} parent=67 // pred_check_branch
          %6447 = sbr.rel (%p6445) target = $region72
        $region71: #{tpu_custom_call.1} parent=67 // pred_region
          %p6448 = scmp.lt.s32.totalorder %s22, 1
          %s6449 = scalar_select %p6448, %s22, 1
          %s6450 = smul.addr %s6449, 32
          %s6451 = smul.addr %s6450, 4
          %s6452 = scalar_lea.vmem %s9, %s6451
        $region72: #{tpu_custom_call.1} parent=67 // pred_fallthru
          _
      $region68: #{tpu_custom_call.1} parent=5 // pred_fallthru
        _
    $region6: #{tpu_custom_call.1} parent=1 // loop_footer
      %s20 = sadd.s32 1, %s16
    $region7: #{tpu_custom_call.1} parent=1 // loop_footer_branch
      %15 = sbr.rel target = $region3
    $region8: #{tpu_custom_call.1} parent=1 // loop_exit
      _
    %6453 = vsyncpa [#allocation5], 1
    %s6454 = scalar_lea.sflag [#allocation5], 1
    %6455 = vsyncpa %s6454, 1

</llo_original>
